<compile_context>
chip_gen: v5e
topology: v5e:2x2
jax: 0.10.0
libtpu: 0.0.40
codegen_flags: <defaults>
</compile_context>

<pallas_src>
import functools

import jax
import jax.numpy as jnp
from jax.experimental import pallas as pl
from jax.experimental.pallas import tpu as pltpu

PRIMITIVES = ['MB6_3x3_se0.25', 'MB6_5x5_se0.25', 'MB3_3x3_se0.25', 'MB3_5x5_se0.25']
PRIM_CFG = {  # name -> (expand_ratio, kernel_size)
    'MB6_3x3_se0.25': (6, 3),
    'MB6_5x5_se0.25': (6, 5),
    'MB3_3x3_se0.25': (3, 3),
    'MB3_5x5_se0.25': (3, 5),
}
BN_EPS = 1e-5
LANE = 128


# ------------------------------------------------------------- tuning knobs --

def _device_kind():
    try:
        return jax.devices()[0].device_kind.lower()
    except Exception:
        return ""


_KIND = _device_kind()
if "v7" in _KIND:
    _VMEM_LIMIT = 48 << 20     # 64 MiB physical per TC on v7x -> leave headroom
elif "v6" in _KIND:
    _VMEM_LIMIT = 96 << 20     # 128 MiB physical -> keep full pipeline depth
elif "v5" in _KIND:
    _VMEM_LIMIT = 80 << 20
else:
    _VMEM_LIMIT = 64 << 20     # conservative default for unknown generations


def _cparams(dim_sem):
    return pltpu.CompilerParams(dimension_semantics=dim_sem,
                                vmem_limit_bytes=_VMEM_LIMIT)


def _round_up(v, m):
    return ((v + m - 1) // m) * m


def _pad_dim(a, axis, new_size):
    pad = new_size - a.shape[axis]
    if pad <= 0:
        return a
    cfg = [(0, 0)] * a.ndim
    cfg[axis] = (0, pad)
    return jnp.pad(a, cfg)


def _pick_tm(M, K, Nc):
    """Adaptive matmul row tile: MB-scale blocks when K/N are small (grid-step
    overhead amortisation), bounded so in+out blocks stay a few MiB."""
    if M <= 256:
        return M
    per_row = 2 * K + 6 * Nc                 # bf16 input row + output + f32 epilogue temps
    tm = (4 << 20) // max(per_row, 1)
    tm = max(256, min(2048, tm))
    tm = min(tm, M)
    return (tm // 8) * 8


def _pick_ch_tile(mid, per_chan_bytes):
    """Channel tile for the depthwise kernels: cap at 128 on v7x (64 MiB VMEM); allow
    256 on 128 MiB chips only when the per-block footprint estimate passes."""
    budget = _VMEM_LIMIT // 2
    cands = (128,) if "v7" in _KIND else (256, 128)
    for tc in cands:
        if mid % tc == 0 and per_chan_bytes * tc <= budget:
            return tc
    return 128 if mid % 128 == 0 else mid


# ------------------------------------------------------------------ kernels --

def _mm_bias_act_kernel(x_ref, w_ref, b_ref, o_ref, *, act):
    """(tm,K)@(K,N) bf16 MXU matmul + bias (BN scale pre-folded into w) + opt. SiLU."""
    y = jnp.dot(x_ref[...], w_ref[...], preferred_element_type=jnp.float32)
    y = y + b_ref[...]
    if act == "silu":
        y = y * jax.nn.sigmoid(y)
    o_ref[...] = y.astype(o_ref.dtype)


def _proj_gate_res_kernel(x_ref, g_ref, w_ref, b_ref, r_ref, o_ref):
    """Projection 1x1 conv with the SE gate fused in as a bf16 row scale:
       out = ((x * g) @ w) + bias + residual   (== proj(SE(x)) + res)."""
    xg = x_ref[0] * g_ref[0]                                  # bf16 * bf16 (1,Cm) bcast
    y = jnp.dot(xg, w_ref[...], preferred_element_type=jnp.float32)
    y = y + b_ref[...]
    y = y + r_ref[0].astype(jnp.float32)
    o_ref[...] = y[None].astype(o_ref.dtype)


def _fused_expand_dw_s1_kernel(x_ref, we_ref, b1_ref, wd_ref, b2_ref,
                               o_ref, sum_ref, xpad_ref, *, k, H, W):
    """Stride-1 fused MBConv front end for one (batch, mid-channel tile):
       1x1 expand matmul (+bias, SiLU) written into an f32 VMEM scratch with a zero
       halo, then kxk depthwise conv (+bias, SiLU) and the SE squeeze sums.
       The expanded activation never leaves VMEM."""
    pad = k // 2
    Hp, Wp = H + 2 * pad, W + 2 * pad
    C = we_ref.shape[1]
    Cin = x_ref.shape[-1]

    # --- 1x1 expand conv (+ folded BN bias) + SiLU, straight into VMEM scratch ---
    x2d = x_ref[0].reshape(H * W, Cin)                         # bf16
    h = jnp.dot(x2d, we_ref[...], preferred_element_type=jnp.float32)
    h = h + b1_ref[...]
    h = h * jax.nn.sigmoid(h)                                  # SiLU

    # Zero only the halo rows/cols (interior fully overwritten every step).
    zr = jnp.zeros((pad, Wp, C), jnp.float32)
    xpad_ref[0:pad, :, :] = zr
    xpad_ref[pad + H:Hp, :, :] = zr
    zc = jnp.zeros((H, pad, C), jnp.float32)
    xpad_ref[pad:pad + H, 0:pad, :] = zc
    xpad_ref[pad:pad + H, pad + W:Wp, :] = zc
    xpad_ref[pad:pad + H, pad:pad + W, :] = h.reshape(H, W, C)

    # --- kxk depthwise conv (+ folded BN bias) + SiLU, f32 taps, first-tap init ---
    wd = wd_ref[...]                                           # (k, k, C) f32
    acc = xpad_ref[0:H, 0:W, :] * wd[0, 0][None, None, :]
    for kh in range(k):                                        # k static (3 or 5)
        for kw in range(k):
            if kh == 0 and kw == 0:
                continue
            acc = acc + xpad_ref[kh:kh + H, kw:kw + W, :] * wd[kh, kw][None, None, :]
    y = acc + b2_ref[...][0][None, None, :]
    y = y * jax.nn.sigmoid(y)                                  # SiLU
    o_ref[...] = y[None].astype(o_ref.dtype)
    # SE "squeeze": per-channel spatial sum (gate finished in plain JAX outside).
    sum_ref[...] = jnp.sum(y, axis=(0, 1))[None, None, :].astype(sum_ref.dtype)


def _dw_s2_planes_kernel(p_ref, wd_ref, b2_ref, o_ref, sum_ref, *, k, Ho, Wo):
    """Stride-2 depthwise conv from 4 wrapper-built parity planes (space-to-depth),
    so every tap is a unit-stride slice.  + folded-BN bias + SiLU + SE squeeze."""
    wd = wd_ref[...]                                           # (k, k, C) f32
    planes = [p_ref[0, i].astype(jnp.float32) for i in range(4)]
    acc = None
    for kh in range(k):
        for kw in range(k):
            ph, oh = kh % 2, kh // 2
            pw, ow = kw % 2, kw // 2
            xs = planes[2 * ph + pw][oh:oh + Ho, ow:ow + Wo, :]
            t = xs * wd[kh, kw][None, None, :]
            acc = t if acc is None else acc + t
    y = acc + b2_ref[...][0][None, None, :]
    y = y * jax.nn.sigmoid(y)
    o_ref[...] = y[None].astype(o_ref.dtype)
    sum_ref[...] = jnp.sum(y, axis=(0, 1))[None, None, :].astype(sum_ref.dtype)


# ------------------------------------------------------------ call wrappers --

def matmul_bias_act(x, w, bias, act="none", out_dtype=None):
    """y = act((x @ w) + bias).  x:(M,K) bf16, w:(K,N) bf16 (BN scale folded)."""
    M, K = x.shape
    Nc = w.shape[1]
    out_dtype = out_dtype or x.dtype
    tm = _pick_tm(M, K, Nc)
    grid = (pl.cdiv(M, tm),)
    kernel = functools.partial(_mm_bias_act_kernel, act=act)
    return pl.pallas_call(
        kernel,
        out_shape=jax.ShapeDtypeStruct((M, Nc), out_dtype),
        grid=grid,
        in_specs=[
            pl.BlockSpec((tm, K), lambda i: (i, 0)),
            pl.BlockSpec((K, Nc), lambda i: (0, 0)),
            pl.BlockSpec((1, Nc), lambda i: (0, 0)),
        ],
        out_specs=pl.BlockSpec((tm, Nc), lambda i: (i, 0)),
        compiler_params=_cparams(("parallel",)),
    )(x, w, bias.reshape(1, -1).astype(jnp.float32))


def proj_gate_res(h, gate, w, bias, res, out_dtype):
    """out = ((h * gate) @ w) + bias + res ; h:(N,HW,Cm) bf16, gate:(N,1,Cm) bf16,
       w:(Cm,Co) bf16 (BN scale folded), res:(N,HW,Co).  Co is lane-padded -> dense."""
    N, HW, Cm = h.shape
    Co = w.shape[1]
    tm = _pick_tm(HW, Cm, Co)
    grid = (N, pl.cdiv(HW, tm))
    return pl.pallas_call(
        _proj_gate_res_kernel,
        out_shape=jax.ShapeDtypeStruct((N, HW, Co), out_dtype),
        grid=grid,
        in_specs=[
            pl.BlockSpec((1, tm, Cm), lambda n, i: (n, i, 0)),
            pl.BlockSpec((1, 1, Cm), lambda n, i: (n, 0, 0)),
            pl.BlockSpec((Cm, Co), lambda n, i: (0, 0)),
            pl.BlockSpec((1, Co), lambda n, i: (0, 0)),
            pl.BlockSpec((1, tm, Co), lambda n, i: (n, i, 0)),
        ],
        out_specs=pl.BlockSpec((1, tm, Co), lambda n, i: (n, i, 0)),
        compiler_params=_cparams(("parallel", "parallel")),
    )(h, gate, w, bias.reshape(1, -1).astype(jnp.float32), res)


def fused_expand_dw_s1(x, w_exp, b1, w_dw, b2):
    """Fused 1x1 expand + BN + SiLU + kxk (stride 1) depthwise + BN + SiLU + SE squeeze.
       x:(N,H,W,Cin_p) bf16, w_exp:(Cin_p,mid_p) bf16, w_dw:(k,k,mid_p) f32."""
    N, H, W, Cin = x.shape
    mid = w_exp.shape[1]
    k = w_dw.shape[0]
    pad = k // 2
    Hp, Wp = H + 2 * pad, W + 2 * pad
    # per-channel VMEM footprint: f32 scratch + matmul temp + acc + bf16 out (x2 buf)
    per_c = 4 * Hp * Wp + 8 * H * W + 4 * H * W
    tc = _pick_ch_tile(mid, per_c)
    grid = (N, mid // tc)
    # TODO(synk): row-band spatial tiling (recompute halo) for very large H*W so the
    # fused block also stays within VMEM on v7x at ImageNet-stem resolutions.
    kernel = functools.partial(_fused_expand_dw_s1_kernel, k=k, H=H, W=W)
    y, sums = pl.pallas_call(
        kernel,
        out_shape=(jax.ShapeDtypeStruct((N, H, W, mid), jnp.bfloat16),
                   jax.ShapeDtypeStruct((N, 1, mid), jnp.float32)),
        grid=grid,
        in_specs=[
            pl.BlockSpec((1, H, W, Cin), lambda n, c: (n, 0, 0, 0)),
            pl.BlockSpec((Cin, tc), lambda n, c: (0, c)),
            pl.BlockSpec((1, tc), lambda n, c: (0, c)),
            pl.BlockSpec((k, k, tc), lambda n, c: (0, 0, c)),
            pl.BlockSpec((1, tc), lambda n, c: (0, c)),
        ],
        out_specs=(pl.BlockSpec((1, H, W, tc), lambda n, c: (n, 0, 0, c)),
                   pl.BlockSpec((1, 1, tc), lambda n, c: (n, 0, c))),
        scratch_shapes=[pltpu.VMEM((Hp, Wp, tc), jnp.float32)],
        compiler_params=_cparams(("parallel", "parallel")),
    )(x, w_exp, b1.reshape(1, -1).astype(jnp.float32),
      w_dw.astype(jnp.float32), b2.reshape(1, -1).astype(jnp.float32))
    return y, sums


def _parity_split(h, k):
    """Wrapper-side zero-pad + space-to-depth for stride-2 depthwise: returns
       (N, 4, Hp2, Wp2, C) parity planes (plane index = 2*row_parity + col_parity)."""
    N, H, W, C = h.shape
    pad = k // 2
    Hp, Wp = H + 2 * pad, W + 2 * pad
    Hp2, Wp2 = -(-Hp // 2), -(-Wp // 2)
    hp = jnp.pad(h, ((0, 0), (pad, pad + 2 * Hp2 - Hp), (pad, pad + 2 * Wp2 - Wp), (0, 0)))
    planes = hp.reshape(N, Hp2, 2, Wp2, 2, C).transpose(0, 2, 4, 1, 3, 5)
    planes = planes.reshape(N, 4, Hp2, Wp2, C)
    Ho = (H + 2 * pad - k) // 2 + 1
    Wo = (W + 2 * pad - k) // 2 + 1
    return planes, Ho, Wo


def dwconv_s2_planes(planes, w_dw, b2, Ho, Wo):
    """Stride-2 depthwise conv + BN bias + SiLU + SE squeeze from parity planes."""
    N, _, Hp2, Wp2, mid = planes.shape
    k = w_dw.shape[0]
    per_c = 32 * Hp2 * Wp2 + 8 * Ho * Wo
    tc = _pick_ch_tile(mid, per_c)
    grid = (N, mid // tc)
    kernel = functools.partial(_dw_s2_planes_kernel, k=k, Ho=Ho, Wo=Wo)
    y, sums = pl.pallas_call(
        kernel,
        out_shape=(jax.ShapeDtypeStruct((N, Ho, Wo, mid), jnp.bfloat16),
                   jax.ShapeDtypeStruct((N, 1, mid), jnp.float32)),
        grid=grid,
        in_specs=[
            pl.BlockSpec((1, 4, Hp2, Wp2, tc), lambda n, c: (n, 0, 0, 0, c)),
            pl.BlockSpec((k, k, tc), lambda n, c: (0, 0, c)),
            pl.BlockSpec((1, tc), lambda n, c: (0, c)),
        ],
        out_specs=(pl.BlockSpec((1, Ho, Wo, tc), lambda n, c: (n, 0, 0, c)),
                   pl.BlockSpec((1, 1, tc), lambda n, c: (n, 0, c))),
        compiler_params=_cparams(("parallel", "parallel")),
    )(planes, w_dw.astype(jnp.float32), b2.reshape(1, -1).astype(jnp.float32))
    return y, sums


def avgpool2x2_ceil(x):
    """nn.AvgPool2d(2, 2, ceil_mode=True, count_include_pad=False) on NHWC (JAX glue)."""
    N, H, W, C = x.shape
    Ho, Wo = -(-H // 2), -(-W // 2)
    ph, pw = Ho * 2 - H, Wo * 2 - W
    xs = jnp.pad(x, ((0, 0), (0, ph), (0, pw), (0, 0)))
    cnt = jnp.pad(jnp.ones((1, H, W, 1), x.dtype), ((0, 0), (0, ph), (0, pw), (0, 0)))
    s = xs.reshape(N, Ho, 2, Wo, 2, C).sum(axis=(2, 4))
    c = cnt.reshape(1, Ho, 2, Wo, 2, 1).sum(axis=(2, 4))
    return s / c


# --------------------------------------------------------------- the module --

def _fold_bn(gamma, beta, mean, var):
    scale = gamma / jnp.sqrt(var + BN_EPS)
    return scale, beta - mean * scale


def _init_bn(key, c):
    k1, k2, k3, k4 = jax.random.split(key, 4)
    gamma = jax.random.uniform(k1, (c,), jnp.float32, 0.5, 1.5)
    beta = 0.1 * jax.random.normal(k2, (c,), jnp.float32)
    mean = 0.1 * jax.random.normal(k3, (c,), jnp.float32)
    var = jax.random.uniform(k4, (c,), jnp.float32, 0.5, 1.5)
    return _fold_bn(gamma, beta, mean, var)


class MixOpsPallas:
    """Pallas implementation of MixOps (to_dispatch=False path): all 4 MBConv ops."""

    def __init__(self, inc, outc, stride, key):
        assert stride in (1, 2)
        self.inc, self.outc, self.stride = inc, outc, stride
        self.inc_p = _round_up(inc, LANE)
        self.outc_p = _round_up(outc, LANE)
        keys = jax.random.split(key, len(PRIMITIVES) + 1)
        self.ops = []
        for prim, k in zip(PRIMITIVES, keys[:-1]):
            e, ks = PRIM_CFG[prim]
            self.ops.append(self._init_mbconv(inc, self.inc_p, outc, self.outc_p, e, ks, k))
        # Shared downsample residual branch (same module instance for every op).
        self.has_downsample = (inc != outc or stride == 2)
        if inc != outc:
            dk = jax.random.split(keys[-1], 2)
            ds_w = jax.random.normal(dk[0], (inc, outc), jnp.float32) / jnp.sqrt(inc)
            ds_s, ds_b = _init_bn(dk[1], outc)
            ds_w = ds_w * ds_s[None, :]                        # fold BN scale into weight
            self.ds_w = _pad_dim(_pad_dim(ds_w, 0, self.inc_p), 1, self.outc_p).astype(jnp.bfloat16)
            self.ds_bias = _pad_dim(ds_b, 0, self.outc_p)

    @staticmethod
    def _init_mbconv(inc, inc_p, outc, outc_p, expand, ksize, key):
        mid = inc * expand
        cse = max(1, int(inc * 0.25))
        mid_p = _round_up(mid, LANE)
        ks = jax.random.split(key, 10)
        w_exp = jax.random.normal(ks[0], (inc, mid), jnp.float32) / jnp.sqrt(inc)
        s1, b1 = _init_bn(ks[1], mid)
        w_dw = jax.random.normal(ks[2], (ksize, ksize, mid), jnp.float32) / (ksize * ksize)
        s2, b2 = _init_bn(ks[3], mid)
        se_w1 = jax.random.normal(ks[4], (mid, cse), jnp.float32) / jnp.sqrt(mid)
        se_b1 = 0.01 * jax.random.normal(ks[5], (cse,), jnp.float32)
        se_w2 = jax.random.normal(ks[6], (cse, mid), jnp.float32) / jnp.sqrt(cse)
        se_b2 = 0.01 * jax.random.normal(ks[7], (mid,), jnp.float32)
        w_proj = jax.random.normal(ks[8], (mid, outc), jnp.float32) / jnp.sqrt(mid)
        s3, b3 = _init_bn(ks[9], outc)
        # Fold BN scales into the conv weights (kernels then only add a bias).
        w_exp = w_exp * s1[None, :]
        w_dw = w_dw * s2[None, None, :]
        w_proj = w_proj * s3[None, :]
        # Lane-pad inc / mid / outc axes.  Padding is numerically transparent: padded
        # weight rows/cols and padded biases are zero, so padded channels stay exactly
        # zero through SiLU, depthwise, SE gating and projection.
        p = {}
        p['w_exp'] = _pad_dim(_pad_dim(w_exp, 1, mid_p), 0, inc_p).astype(jnp.bfloat16)
        p['b1'] = _pad_dim(b1, 0, mid_p)
        p['w_dw'] = _pad_dim(w_dw, 2, mid_p).astype(jnp.float32)
        p['b2'] = _pad_dim(b2, 0, mid_p)
        p['se_w1'] = _pad_dim(se_w1, 0, mid_p)
        p['se_b1'] = se_b1
        p['se_w2'] = _pad_dim(se_w2, 1, mid_p)
        p['se_b2'] = _pad_dim(se_b2, 0, mid_p)
        p['w_proj'] = _pad_dim(_pad_dim(w_proj, 0, mid_p), 1, outc_p).astype(jnp.bfloat16)
        p['b3'] = _pad_dim(b3, 0, outc_p)
        return p

    def __call__(self, x_nchw, forward_index=0):
        p = self.ops[forward_index]
        out_dtype = x_nchw.dtype
        x = jnp.transpose(x_nchw, (0, 2, 3, 1))                  # NCHW -> NHWC
        x = _pad_dim(x, 3, self.inc_p)                           # lane-pad input channels
        N, H, W, _ = x.shape
        xb = x.astype(jnp.bfloat16)

        # ---- residual branch (downsample or identity), lane-padded to outc_p ----
        if self.has_downsample:
            r = x
            if self.stride == 2:
                r = avgpool2x2_ceil(r)
            if self.inc != self.outc:
                rN, rH, rW, _ = r.shape
                r = matmul_bias_act(r.reshape(-1, self.inc_p).astype(jnp.bfloat16),
                                    self.ds_w, self.ds_bias, act="none",
                                    out_dtype=out_dtype).reshape(rN, rH, rW, self.outc_p)
            res = r
        else:
            res = x

        mid_p = p['w_exp'].shape[1]
        k = p['w_dw'].shape[0]
        if self.stride == 1:
            # Fused expand + depthwise + SE squeeze: the 6x-expanded activation never
            # round-trips HBM (biggest roofline win from the perf review).
            h, sums = fused_expand_dw_s1(xb, p['w_exp'], p['b1'], p['w_dw'], p['b2'])
        else:
            # TODO(synk): stride-2 keeps the un-fused expand->HBM path; the parity
            # (space-to-depth) split is done wrapper-side so the depthwise kernel needs
            # no strided sublane reads.  Fully fusing stride-2 would need in-kernel halo
            # masking of the parity planes.
            hexp = matmul_bias_act(xb.reshape(-1, self.inc_p), p['w_exp'], p['b1'],
                                   act="silu", out_dtype=jnp.bfloat16)
            hexp = hexp.reshape(N, H, W, mid_p)
            planes, Ho2, Wo2 = _parity_split(hexp, k)
            h, sums = dwconv_s2_planes(planes, p['w_dw'], p['b2'], Ho2, Wo2)
        No, Ho, Wo, _ = h.shape

        # ---- SE excitation: two tiny FCs in plain JAX (far below one MXU tile) ----
        pooled = sums[:, 0, :] * (1.0 / (Ho * Wo))               # (N, mid_p) f32
        e = pooled @ p['se_w1'] + p['se_b1']
        e = e * jax.nn.sigmoid(e)                                # SiLU
        gate = jax.nn.sigmoid(e @ p['se_w2'] + p['se_b2'])       # (N, mid_p)
        gate = gate.astype(jnp.bfloat16).reshape(No, 1, mid_p)   # applied in bf16 in-kernel

        # ---- 1x1 projection + BN bias + SE gating + residual (single fused kernel) ----
        out = proj_gate_res(h.reshape(No, Ho * Wo, mid_p), gate, p['w_proj'], p['b3'],
                            res.reshape(No, Ho * Wo, self.outc_p), out_dtype)
        out = out.reshape(No, Ho, Wo, self.outc_p)[..., :self.outc]   # drop lane padding
        return jnp.transpose(out, (0, 3, 1, 2))                  # NHWC -> NCHW
        # TODO(synk): to_dispatch=True / '_dual' primitives are not in PRIMITIVES here,
        # so that branch of __init__ is intentionally not modeled.


# --------------------------------------------------------------------- main --

if __name__ == "__main__":
    key = jax.random.PRNGKey(0)
    k_p1, k_p2, k_x = jax.random.split(key, 3)

    N, H, W = 2, 16, 16

    # Case 1: inc == outc, stride 1 -> identity residual, fused stride-1 path (k=3 & k=5).
    m1 = MixOpsPallas(8, 8, 1, k_p1)
    x = jax.random.normal(k_x, (N, 8, H, W), jnp.float32)        # NCHW like PyTorch
    out0 = jax.block_until_ready(m1(x, forward_index=0))         # MB6_3x3_se0.25
    out3 = jax.block_until_ready(m1(x, forward_index=3))         # MB3_5x5_se0.25
    assert out0.shape == (N, 8, H, W)
    assert out3.shape == (N, 8, H, W)

    # Case 2: inc != outc, stride 2 -> AvgPool + 1x1/BN downsample, stride-2 depthwise path.
    m2 = MixOpsPallas(8, 16, 2, k_p2)
    out1 = jax.block_until_ready(m2(x, forward_index=1))         # MB6_5x5_se0.25, stride 2
    assert out1.shape == (N, 16, H // 2, W // 2)

    for out in (out0, out3, out1):
        assert bool(jnp.all(jnp.isfinite(out)))
    print("KERNEL_OK")
</pallas_src>

<mosaic_0001>
module attributes {stable_mosaic.version = 11 : i64} {
  func.func @_fused_expand_dw_s1_kernel(%arg0: i32, %arg1: i32, %arg2: memref<1x16x16x128xbf16, #tpu.memory_space<vmem>>, %arg3: memref<128x128xbf16, #tpu.memory_space<vmem>>, %arg4: memref<1x128xf32, #tpu.memory_space<vmem>>, %arg5: memref<3x3x128xf32, #tpu.memory_space<vmem>>, %arg6: memref<1x128xf32, #tpu.memory_space<vmem>>, %arg7: memref<1x16x16x128xbf16, #tpu.memory_space<vmem>>, %arg8: memref<1x1x128xf32, #tpu.memory_space<vmem>>, %arg9: memref<18x18x128xf32, #tpu.memory_space<vmem>>) attributes {dimension_semantics = [#tpu.dimension_semantics<parallel>, #tpu.dimension_semantics<parallel>], iteration_bounds = array<i64: 2, 1>, scalar_prefetch = 0 : i64, scratch_operands = 1 : i64, tpu.core_type = #tpu.core_type<tc>, window_params = [{transform_indices = @transform_0, window_bounds = array<i64: 1, 16, 16, 128>}, {transform_indices = @transform_1, window_bounds = array<i64: 128, 128>}, {transform_indices = @transform_2, window_bounds = array<i64: 1, 128>}, {transform_indices = @transform_3, window_bounds = array<i64: 3, 3, 128>}, {transform_indices = @transform_4, window_bounds = array<i64: 1, 128>}, {transform_indices = @transform_5, window_bounds = array<i64: 1, 16, 16, 128>}, {transform_indices = @transform_6, window_bounds = array<i64: 1, 1, 128>}]} {
    %c0 = arith.constant 0 : index
    %c0_0 = arith.constant 0 : index
    %c0_1 = arith.constant 0 : index
    %c0_2 = arith.constant 0 : index
    %0 = vector.load %arg2[%c0, %c0_0, %c0_1, %c0_2] : memref<1x16x16x128xbf16, #tpu.memory_space<vmem>>, vector<1x16x16x128xbf16>
    %1 = vector.shape_cast %0 : vector<1x16x16x128xbf16> to vector<16x16x128xbf16>
    %2 = vector.shape_cast %1 : vector<16x16x128xbf16> to vector<256x128xbf16>
    %c0_3 = arith.constant 0 : index
    %c0_4 = arith.constant 0 : index
    %3 = vector.load %arg3[%c0_3, %c0_4] : memref<128x128xbf16, #tpu.memory_space<vmem>>, vector<128x128xbf16>
    %cst = arith.constant dense<0.000000e+00> : vector<256x128xf32>
    %4 = tpu.matmul %2, %3, %cst {dimension_numbers = #tpu.dot_dimension_numbers<[1], [0], [0], [1], [0, 0, 1, 1], [], []>} : vector<256x128xbf16>, vector<128x128xbf16>, vector<256x128xf32> -> vector<256x128xf32>
    %c0_5 = arith.constant 0 : index
    %c0_6 = arith.constant 0 : index
    %5 = vector.load %arg4[%c0_5, %c0_6] : memref<1x128xf32, #tpu.memory_space<vmem>>, vector<1x128xf32>
    %6 = vector.broadcast %5 : vector<1x128xf32> to vector<256x128xf32>
    %7 = arith.addf %4, %6 : vector<256x128xf32>
    %8 = arith.negf %7 : vector<256x128xf32>
    %9 = math.exp %8 : vector<256x128xf32>
    %cst_7 = arith.constant 1.000000e+00 : f32
    %10 = vector.broadcast %cst_7 : f32 to vector<256x128xf32>
    %11 = arith.addf %10, %9 : vector<256x128xf32>
    %12 = arith.divf %10, %11 : vector<256x128xf32>
    %13 = arith.mulf %7, %12 : vector<256x128xf32>
    %cst_8 = arith.constant 0.000000e+00 : f32
    %14 = vector.broadcast %cst_8 : f32 to vector<1x18x128xf32>
    %c0_9 = arith.constant 0 : index
    %c0_10 = arith.constant 0 : index
    %c0_11 = arith.constant 0 : index
    %15 = vector.load %arg9[%c0_9, %c0_10, %c0_11] : memref<18x18x128xf32, #tpu.memory_space<vmem>>, vector<1x18x128xf32>
    tpu.vector_store %arg9[%c0_9, %c0_10, %c0_11], %14 {strides = array<i32>} : memref<18x18x128xf32, #tpu.memory_space<vmem>>, vector<1x18x128xf32>,
    %c17 = arith.constant 17 : index
    %c0_12 = arith.constant 0 : index
    %c0_13 = arith.constant 0 : index
    %16 = vector.load %arg9[%c17, %c0_12, %c0_13] : memref<18x18x128xf32, #tpu.memory_space<vmem>>, vector<1x18x128xf32>
    tpu.vector_store %arg9[%c17, %c0_12, %c0_13], %14 {strides = array<i32>} : memref<18x18x128xf32, #tpu.memory_space<vmem>>, vector<1x18x128xf32>,
    %cst_14 = arith.constant 0.000000e+00 : f32
    %17 = vector.broadcast %cst_14 : f32 to vector<16x1x128xf32>
    %c1 = arith.constant 1 : index
    %c0_15 = arith.constant 0 : index
    %c0_16 = arith.constant 0 : index
    %18 = vector.load %arg9[%c1, %c0_15, %c0_16] : memref<18x18x128xf32, #tpu.memory_space<vmem>>, vector<16x1x128xf32>
    tpu.vector_store %arg9[%c1, %c0_15, %c0_16], %17 {strides = array<i32>} : memref<18x18x128xf32, #tpu.memory_space<vmem>>, vector<16x1x128xf32>,
    %c1_17 = arith.constant 1 : index
    %c17_18 = arith.constant 17 : index
    %c0_19 = arith.constant 0 : index
    %19 = vector.load %arg9[%c1_17, %c17_18, %c0_19] : memref<18x18x128xf32, #tpu.memory_space<vmem>>, vector<16x1x128xf32>
    tpu.vector_store %arg9[%c1_17, %c17_18, %c0_19], %17 {strides = array<i32>} : memref<18x18x128xf32, #tpu.memory_space<vmem>>, vector<16x1x128xf32>,
    %20 = vector.shape_cast %13 : vector<256x128xf32> to vector<16x16x128xf32>
    %c1_20 = arith.constant 1 : index
    %c1_21 = arith.constant 1 : index
    %c0_22 = arith.constant 0 : index
    %21 = vector.load %arg9[%c1_20, %c1_21, %c0_22] : memref<18x18x128xf32, #tpu.memory_space<vmem>>, vector<16x16x128xf32>
    tpu.vector_store %arg9[%c1_20, %c1_21, %c0_22], %20 {strides = array<i32>} : memref<18x18x128xf32, #tpu.memory_space<vmem>>, vector<16x16x128xf32>,
    %c0_23 = arith.constant 0 : index
    %c0_24 = arith.constant 0 : index
    %c0_25 = arith.constant 0 : index
    %22 = vector.load %arg5[%c0_23, %c0_24, %c0_25] : memref<3x3x128xf32, #tpu.memory_space<vmem>>, vector<3x3x128xf32>
    %c0_26 = arith.constant 0 : index
    %c0_27 = arith.constant 0 : index
    %c0_28 = arith.constant 0 : index
    %23 = vector.load %arg9[%c0_26, %c0_27, %c0_28] : memref<18x18x128xf32, #tpu.memory_space<vmem>>, vector<16x16x128xf32>
    %24 = vector.extract_strided_slice %22 {offsets = [0, 0, 0], sizes = [1, 1, 128], strides = [1, 1, 1]} : vector<3x3x128xf32> to vector<1x1x128xf32>
    %25 = vector.shape_cast %24 : vector<1x1x128xf32> to vector<128xf32>
    %26 = vector.shape_cast %25 : vector<128xf32> to vector<1x1x128xf32>
    %27 = vector.broadcast %26 : vector<1x1x128xf32> to vector<16x16x128xf32>
    %28 = arith.mulf %23, %27 : vector<16x16x128xf32>
    %c0_29 = arith.constant 0 : index
    %c1_30 = arith.constant 1 : index
    %c0_31 = arith.constant 0 : index
    %29 = vector.load %arg9[%c0_29, %c1_30, %c0_31] : memref<18x18x128xf32, #tpu.memory_space<vmem>>, vector<16x16x128xf32>
    %30 = vector.extract_strided_slice %22 {offsets = [0, 1, 0], sizes = [1, 1, 128], strides = [1, 1, 1]} : vector<3x3x128xf32> to vector<1x1x128xf32>
    %31 = vector.shape_cast %30 : vector<1x1x128xf32> to vector<128xf32>
    %32 = vector.shape_cast %31 : vector<128xf32> to vector<1x1x128xf32>
    %33 = vector.broadcast %32 : vector<1x1x128xf32> to vector<16x16x128xf32>
    %34 = arith.mulf %29, %33 : vector<16x16x128xf32>
    %35 = arith.addf %28, %34 : vector<16x16x128xf32>
    %c0_32 = arith.constant 0 : index
    %c2 = arith.constant 2 : index
    %c0_33 = arith.constant 0 : index
    %36 = vector.load %arg9[%c0_32, %c2, %c0_33] : memref<18x18x128xf32, #tpu.memory_space<vmem>>, vector<16x16x128xf32>
    %37 = vector.extract_strided_slice %22 {offsets = [0, 2, 0], sizes = [1, 1, 128], strides = [1, 1, 1]} : vector<3x3x128xf32> to vector<1x1x128xf32>
    %38 = vector.shape_cast %37 : vector<1x1x128xf32> to vector<128xf32>
    %39 = vector.shape_cast %38 : vector<128xf32> to vector<1x1x128xf32>
    %40 = vector.broadcast %39 : vector<1x1x128xf32> to vector<16x16x128xf32>
    %41 = arith.mulf %36, %40 : vector<16x16x128xf32>
    %42 = arith.addf %35, %41 : vector<16x16x128xf32>
    %c1_34 = arith.constant 1 : index
    %c0_35 = arith.constant 0 : index
    %c0_36 = arith.constant 0 : index
    %43 = vector.load %arg9[%c1_34, %c0_35, %c0_36] : memref<18x18x128xf32, #tpu.memory_space<vmem>>, vector<16x16x128xf32>
    %44 = vector.extract_strided_slice %22 {offsets = [1, 0, 0], sizes = [1, 1, 128], strides = [1, 1, 1]} : vector<3x3x128xf32> to vector<1x1x128xf32>
    %45 = vector.shape_cast %44 : vector<1x1x128xf32> to vector<128xf32>
    %46 = vector.shape_cast %45 : vector<128xf32> to vector<1x1x128xf32>
    %47 = vector.broadcast %46 : vector<1x1x128xf32> to vector<16x16x128xf32>
    %48 = arith.mulf %43, %47 : vector<16x16x128xf32>
    %49 = arith.addf %42, %48 : vector<16x16x128xf32>
    %c1_37 = arith.constant 1 : index
    %c1_38 = arith.constant 1 : index
    %c0_39 = arith.constant 0 : index
    %50 = vector.load %arg9[%c1_37, %c1_38, %c0_39] : memref<18x18x128xf32, #tpu.memory_space<vmem>>, vector<16x16x128xf32>
    %51 = vector.extract_strided_slice %22 {offsets = [1, 1, 0], sizes = [1, 1, 128], strides = [1, 1, 1]} : vector<3x3x128xf32> to vector<1x1x128xf32>
    %52 = vector.shape_cast %51 : vector<1x1x128xf32> to vector<128xf32>
    %53 = vector.shape_cast %52 : vector<128xf32> to vector<1x1x128xf32>
    %54 = vector.broadcast %53 : vector<1x1x128xf32> to vector<16x16x128xf32>
    %55 = arith.mulf %50, %54 : vector<16x16x128xf32>
    %56 = arith.addf %49, %55 : vector<16x16x128xf32>
    %c1_40 = arith.constant 1 : index
    %c2_41 = arith.constant 2 : index
    %c0_42 = arith.constant 0 : index
    %57 = vector.load %arg9[%c1_40, %c2_41, %c0_42] : memref<18x18x128xf32, #tpu.memory_space<vmem>>, vector<16x16x128xf32>
    %58 = vector.extract_strided_slice %22 {offsets = [1, 2, 0], sizes = [1, 1, 128], strides = [1, 1, 1]} : vector<3x3x128xf32> to vector<1x1x128xf32>
    %59 = vector.shape_cast %58 : vector<1x1x128xf32> to vector<128xf32>
    %60 = vector.shape_cast %59 : vector<128xf32> to vector<1x1x128xf32>
    %61 = vector.broadcast %60 : vector<1x1x128xf32> to vector<16x16x128xf32>
    %62 = arith.mulf %57, %61 : vector<16x16x128xf32>
    %63 = arith.addf %56, %62 : vector<16x16x128xf32>
    %c2_43 = arith.constant 2 : index
    %c0_44 = arith.constant 0 : index
    %c0_45 = arith.constant 0 : index
    %64 = vector.load %arg9[%c2_43, %c0_44, %c0_45] : memref<18x18x128xf32, #tpu.memory_space<vmem>>, vector<16x16x128xf32>
    %65 = vector.extract_strided_slice %22 {offsets = [2, 0, 0], sizes = [1, 1, 128], strides = [1, 1, 1]} : vector<3x3x128xf32> to vector<1x1x128xf32>
    %66 = vector.shape_cast %65 : vector<1x1x128xf32> to vector<128xf32>
    %67 = vector.shape_cast %66 : vector<128xf32> to vector<1x1x128xf32>
    %68 = vector.broadcast %67 : vector<1x1x128xf32> to vector<16x16x128xf32>
    %69 = arith.mulf %64, %68 : vector<16x16x128xf32>
    %70 = arith.addf %63, %69 : vector<16x16x128xf32>
    %c2_46 = arith.constant 2 : index
    %c1_47 = arith.constant 1 : index
    %c0_48 = arith.constant 0 : index
    %71 = vector.load %arg9[%c2_46, %c1_47, %c0_48] : memref<18x18x128xf32, #tpu.memory_space<vmem>>, vector<16x16x128xf32>
    %72 = vector.extract_strided_slice %22 {offsets = [2, 1, 0], sizes = [1, 1, 128], strides = [1, 1, 1]} : vector<3x3x128xf32> to vector<1x1x128xf32>
    %73 = vector.shape_cast %72 : vector<1x1x128xf32> to vector<128xf32>
    %74 = vector.shape_cast %73 : vector<128xf32> to vector<1x1x128xf32>
    %75 = vector.broadcast %74 : vector<1x1x128xf32> to vector<16x16x128xf32>
    %76 = arith.mulf %71, %75 : vector<16x16x128xf32>
    %77 = arith.addf %70, %76 : vector<16x16x128xf32>
    %c2_49 = arith.constant 2 : index
    %c2_50 = arith.constant 2 : index
    %c0_51 = arith.constant 0 : index
    %78 = vector.load %arg9[%c2_49, %c2_50, %c0_51] : memref<18x18x128xf32, #tpu.memory_space<vmem>>, vector<16x16x128xf32>
    %79 = vector.extract_strided_slice %22 {offsets = [2, 2, 0], sizes = [1, 1, 128], strides = [1, 1, 1]} : vector<3x3x128xf32> to vector<1x1x128xf32>
    %80 = vector.shape_cast %79 : vector<1x1x128xf32> to vector<128xf32>
    %81 = vector.shape_cast %80 : vector<128xf32> to vector<1x1x128xf32>
    %82 = vector.broadcast %81 : vector<1x1x128xf32> to vector<16x16x128xf32>
    %83 = arith.mulf %78, %82 : vector<16x16x128xf32>
    %84 = arith.addf %77, %83 : vector<16x16x128xf32>
    %c0_52 = arith.constant 0 : index
    %c0_53 = arith.constant 0 : index
    %85 = vector.load %arg6[%c0_52, %c0_53] : memref<1x128xf32, #tpu.memory_space<vmem>>, vector<1x128xf32>
    %86 = vector.shape_cast %85 : vector<1x128xf32> to vector<128xf32>
    %87 = vector.shape_cast %86 : vector<128xf32> to vector<1x1x128xf32>
    %88 = vector.broadcast %87 : vector<1x1x128xf32> to vector<16x16x128xf32>
    %89 = arith.addf %84, %88 : vector<16x16x128xf32>
    %90 = arith.negf %89 : vector<16x16x128xf32>
    %91 = math.exp %90 : vector<16x16x128xf32>
    %cst_54 = arith.constant 1.000000e+00 : f32
    %92 = vector.broadcast %cst_54 : f32 to vector<16x16x128xf32>
    %93 = arith.addf %92, %91 : vector<16x16x128xf32>
    %94 = arith.divf %92, %93 : vector<16x16x128xf32>
    %95 = arith.mulf %89, %94 : vector<16x16x128xf32>
    %96 = vector.shape_cast %95 : vector<16x16x128xf32> to vector<1x16x16x128xf32>
    %97 = arith.truncf %96 : vector<1x16x16x128xf32> to vector<1x16x16x128xbf16>
    %c0_55 = arith.constant 0 : index
    %c0_56 = arith.constant 0 : index
    %c0_57 = arith.constant 0 : index
    %c0_58 = arith.constant 0 : index
    %98 = vector.load %arg7[%c0_55, %c0_56, %c0_57, %c0_58] : memref<1x16x16x128xbf16, #tpu.memory_space<vmem>>, vector<1x16x16x128xbf16>
    tpu.vector_store %arg7[%c0_55, %c0_56, %c0_57, %c0_58], %97 {strides = array<i32>} : memref<1x16x16x128xbf16, #tpu.memory_space<vmem>>, vector<1x16x16x128xbf16>,
    %cst_59 = arith.constant dense<0.000000e+00> : vector<128xf32>
    %99 = vector.multi_reduction <add>, %95, %cst_59 [0, 1] : vector<16x16x128xf32> to vector<128xf32>
    %100 = vector.shape_cast %99 : vector<128xf32> to vector<1x1x128xf32>
    %c0_60 = arith.constant 0 : index
    %c0_61 = arith.constant 0 : index
    %c0_62 = arith.constant 0 : index
    %101 = vector.load %arg8[%c0_60, %c0_61, %c0_62] : memref<1x1x128xf32, #tpu.memory_space<vmem>>, vector<1x1x128xf32>
    tpu.vector_store %arg8[%c0_60, %c0_61, %c0_62], %100 {strides = array<i32>} : memref<1x1x128xf32, #tpu.memory_space<vmem>>, vector<1x1x128xf32>,
    return
  }
  func.func @transform_0(%arg0: i32, %arg1: i32) -> (i32, i32, i32, i32) {
    %c0_i32 = arith.constant 0 : i32
    %c0_i32_0 = arith.constant 0 : i32
    %c0_i32_1 = arith.constant 0 : i32
    %c0_i32_2 = arith.constant 0 : i32
    return %arg0, %c0_i32, %c0_i32_0, %c0_i32_1 : i32, i32, i32, i32
  }
  func.func @transform_1(%arg0: i32, %arg1: i32) -> (i32, i32) {
    %c0_i32 = arith.constant 0 : i32
    %c0_i32_0 = arith.constant 0 : i32
    return %c0_i32, %arg1 : i32, i32
  }
  func.func @transform_2(%arg0: i32, %arg1: i32) -> (i32, i32) {
    %c0_i32 = arith.constant 0 : i32
    %c0_i32_0 = arith.constant 0 : i32
    return %c0_i32, %arg1 : i32, i32
  }
  func.func @transform_3(%arg0: i32, %arg1: i32) -> (i32, i32, i32) {
    %c0_i32 = arith.constant 0 : i32
    %c0_i32_0 = arith.constant 0 : i32
    %c0_i32_1 = arith.constant 0 : i32
    return %c0_i32, %c0_i32_0, %arg1 : i32, i32, i32
  }
  func.func @transform_4(%arg0: i32, %arg1: i32) -> (i32, i32) {
    %c0_i32 = arith.constant 0 : i32
    %c0_i32_0 = arith.constant 0 : i32
    return %c0_i32, %arg1 : i32, i32
  }
  func.func @transform_5(%arg0: i32, %arg1: i32) -> (i32, i32, i32, i32) {
    %c0_i32 = arith.constant 0 : i32
    %c0_i32_0 = arith.constant 0 : i32
    %c0_i32_1 = arith.constant 0 : i32
    return %arg0, %c0_i32, %c0_i32_0, %arg1 : i32, i32, i32, i32
  }
  func.func @transform_6(%arg0: i32, %arg1: i32) -> (i32, i32, i32) {
    %c0_i32 = arith.constant 0 : i32
    %c0_i32_0 = arith.constant 0 : i32
    return %arg0, %c0_i32, %arg1 : i32, i32, i32
  }
}

</mosaic_0001>

<llo_original>
// kernel: tpu_custom_call.1
$region0: #{tpu_custom_call.1}
  #allocation0 [shape = 'u32[]', space=smem, size = 0x4, offset = 0x4, fixed_abs, tag = 'smem constant byte address 0x4 - core index']
  #allocation1 [shape = 'u32[72,128]{1,0:T(1,128)}', space=vmem, size = 0x9000, scoped, tag = 'internal scratch']
  #allocation2 [shape = 'f32[18,18,128]{2,1,0:T(8,128)}', space=vmem, size = 0x36000, scoped, tag = 'scratch operand']
  %s0 = inlined_call_operand.hbm [shape: bf16[2,16,16,128], index: 0, kind: input, shape index: {}]
  %s1 = inlined_call_operand.hbm [shape: bf16[128,128], index: 1, kind: input, shape index: {}]
  %s2 = inlined_call_operand.vmem [shape: f32[1,128], index: 2, kind: input, shape index: {}]
  %s3 = inlined_call_operand.hbm [shape: f32[3,3,128], index: 3, kind: input, shape index: {}]
  %s4 = inlined_call_operand.vmem [shape: f32[1,128], index: 4, kind: input, shape index: {}]
  %s5 = inlined_call_operand.hbm [shape: bf16[2,16,16,128], index: 5, kind: output, shape index: {0}]
  %s6 = inlined_call_operand.hbm [shape: f32[2,1,128], index: 6, kind: output, shape index: {1}]
  %7 = xla_tuple %s5, %s6
  %s8 = sld [smem:[#allocation0]]
  $region73: #{tpu_custom_call.1} parent=0
    _
  %s10 = ssub.s32 1, %s8
  %s11 = scalar_select 0, %s10, %s8
  $region1: #{tpu_custom_call.1} parent=0
    #allocation3 [shape = 'u8[131072]{0}', space=vmem, size = 0x20000, scoped, tag = 'input window, operand 0']
    #allocation4 [shape = 's32[2]{0}', space=sflag, size = 0x8, scoped, tag = 'scoped memory for tpu_custom_call.1']
    #allocation5 [shape = 's32[2]{0}', space=sflag, size = 0x8, scoped, tag = 'scoped memory for tpu_custom_call.1']
    #allocation6 [shape = 'u8[32768]{0}', space=vmem, size = 0x8000, scoped, tag = 'input window, operand 1, single buffered']
    #allocation7 [shape = 's32[1]{0}', space=sflag, size = 0x4, scoped, tag = 'scoped memory for tpu_custom_call.1']
    #allocation8 [shape = 'u8[6144]{0}', space=vmem, size = 0x1800, scoped, tag = 'input window, operand 3, single buffered']
    #allocation9 [shape = 'u8[131072]{0}', space=vmem, size = 0x20000, scoped, tag = 'output window, operand 0']
    #allocation10 [shape = 'u8[1024]{0}', space=vmem, size = 0x400, scoped, tag = 'output window, operand 1']
    #allocation11 [shape = 's32[2]{0}', space=sflag, size = 0x8, scoped, tag = 'scoped memory for tpu_custom_call.1']
    %12 = vsyncpa [#allocation4], 0
    %s13 = scalar_lea.sflag [#allocation4], 1
    %14 = vsyncpa %s13, 0
    %15 = vsyncpa [#allocation7], 0
    %16 = vsyncpa [#allocation5], 0
    %s17 = scalar_lea.sflag [#allocation5], 1
    %18 = vsyncpa %s17, 0
    %19 = vsyncpa [#allocation11], 0
    %s20 = scalar_lea.sflag [#allocation11], 1
    %21 = vsyncpa %s20, 0
    loop: start=0, step=1, limit=4
    $region2: #{tpu_custom_call.1} parent=1 // loop_pre_header
      _
    $region3: #{tpu_custom_call.1} parent=1 // loop_header
      %s23 = sphi 0, %s27
      %p24 = scmp.ge.s32.totalorder %s23, 4
      %s30 = sphi 0, %s42
      %s31 = sphi 0, %s38
      %s32 = sphi 0, %s30
      %s33 = sphi 0, %s31
      %s34 = sphi 0, %s32
      %s35 = sphi 0, %s33
      %s45 = sphi 0, %s47
      %s48 = sphi 0, %s45
      %s49 = sphi 0, %s48
      %s65 = sphi 0, %s49
      %s71 = sphi 0, %s73
      %s74 = sphi 0, %s71
      %s75 = sphi 0, %s74
      %s91 = sphi 0, %s75
      %s97 = sphi 0, %s99
      %s100 = sphi 0, %s97
      %s101 = sphi 0, %s100
      %s117 = sphi 0, %s101
      %s123 = sphi 0, %s125
      %s126 = sphi 0, %s123
      %s127 = sphi 0, %s126
      %s143 = sphi 0, %s127
      %s149 = sphi 0, %s151
      %s152 = sphi 0, %s149
      %s153 = sphi 0, %s152
      %s169 = sphi 0, %s153
      %s177 = sphi 0, %s179
      %s180 = sphi 0, %s177
      %s181 = sphi 0, %s180
      %s197 = sphi 0, %s181
      %s205 = sphi 0, %s207
      %s208 = sphi 0, %s205
      %s209 = sphi 0, %s208
      %s225 = sphi 0, %s209
    $region4: #{tpu_custom_call.1} parent=1 // loop_header_branch
      %26 = sbr.rel (%p24) target = $region8
    $region5: #{tpu_custom_call.1} parent=1 // loop_body
      %s28 = ssub.s32 %s23, 1
      %s29 = ssub.s32 %s23, 2
      %s36 = sadd.s32 1, %s31
      %p37 = scmp.ge.s32.totalorder %s36, 1
      %s38 = scalar_select %p37, 0, %s36
      %s39 = sadd.s32 1, %s30
      %s40 = scalar_select %p37, %s39, %s30
      %p41 = scmp.ge.s32.totalorder %s40, 2
      %s42 = scalar_select %p41, 0, %s40
      %s43 = ssub.s32 %s30, %s42
      %p44 = scmp.eq.s32.totalorder %s43, 0
      %s46 = sadd.s32 %s45, 1
      %s47 = scalar_select %p44, %s45, %s46
      %p50 = pneg %p44
      %p51 = scmp.eq.s32.totalorder %s23, 1
      %p52 = por %p50, %p51
      %p53 = scmp.ne.s32.totalorder %s45, %s48
      %p54 = scmp.eq.s32.totalorder %s23, 0
      %p55 = por %p53, %p54
      %p56 = scmp.ne.s32.totalorder %s45, %s48
      %p57 = scmp.eq.s32.totalorder %s28, 1
      %p58 = por %p56, %p57
      %p59 = scmp.ne.s32.totalorder %s48, %s49
      %p60 = scmp.eq.s32.totalorder %s28, 0
      %p61 = por %p59, %p60
      %p62 = scmp.ne.s32.totalorder %s48, %s49
      %p63 = scmp.eq.s32.totalorder %s29, 1
      %p64 = por %p62, %p63
      %p66 = scmp.ne.s32.totalorder %s49, %s65
      %p67 = scmp.eq.s32.totalorder %s29, 0
      %p68 = por %p66, %p67
      %s69 = ssub.s32 %s31, %s38
      %p70 = scmp.eq.s32.totalorder %s69, 0
      %s72 = sadd.s32 %s71, 1
      %s73 = scalar_select %p70, %s71, %s72
      %p76 = pneg %p70
      %p77 = scmp.eq.s32.totalorder %s23, 1
      %p78 = por %p76, %p77
      %p79 = scmp.ne.s32.totalorder %s71, %s74
      %p80 = scmp.eq.s32.totalorder %s23, 0
      %p81 = por %p79, %p80
      %p82 = scmp.ne.s32.totalorder %s71, %s74
      %p83 = scmp.eq.s32.totalorder %s28, 1
      %p84 = por %p82, %p83
      %p85 = scmp.ne.s32.totalorder %s74, %s75
      %p86 = scmp.eq.s32.totalorder %s28, 0
      %p87 = por %p85, %p86
      %p88 = scmp.ne.s32.totalorder %s74, %s75
      %p89 = scmp.eq.s32.totalorder %s29, 1
      %p90 = por %p88, %p89
      %p92 = scmp.ne.s32.totalorder %s75, %s91
      %p93 = scmp.eq.s32.totalorder %s29, 0
      %p94 = por %p92, %p93
      %s95 = ssub.s32 %s31, %s38
      %p96 = scmp.eq.s32.totalorder %s95, 0
      %s98 = sadd.s32 %s97, 1
      %s99 = scalar_select %p96, %s97, %s98
      %p102 = pneg %p96
      %p103 = scmp.eq.s32.totalorder %s23, 1
      %p104 = por %p102, %p103
      %p105 = scmp.ne.s32.totalorder %s97, %s100
      %p106 = scmp.eq.s32.totalorder %s23, 0
      %p107 = por %p105, %p106
      %p108 = scmp.ne.s32.totalorder %s97, %s100
      %p109 = scmp.eq.s32.totalorder %s28, 1
      %p110 = por %p108, %p109
      %p111 = scmp.ne.s32.totalorder %s100, %s101
      %p112 = scmp.eq.s32.totalorder %s28, 0
      %p113 = por %p111, %p112
      %p114 = scmp.ne.s32.totalorder %s100, %s101
      %p115 = scmp.eq.s32.totalorder %s29, 1
      %p116 = por %p114, %p115
      %p118 = scmp.ne.s32.totalorder %s101, %s117
      %p119 = scmp.eq.s32.totalorder %s29, 0
      %p120 = por %p118, %p119
      %s121 = ssub.s32 %s31, %s38
      %p122 = scmp.eq.s32.totalorder %s121, 0
      %s124 = sadd.s32 %s123, 1
      %s125 = scalar_select %p122, %s123, %s124
      %p128 = pneg %p122
      %p129 = scmp.eq.s32.totalorder %s23, 1
      %p130 = por %p128, %p129
      %p131 = scmp.ne.s32.totalorder %s123, %s126
      %p132 = scmp.eq.s32.totalorder %s23, 0
      %p133 = por %p131, %p132
      %p134 = scmp.ne.s32.totalorder %s123, %s126
      %p135 = scmp.eq.s32.totalorder %s28, 1
      %p136 = por %p134, %p135
      %p137 = scmp.ne.s32.totalorder %s126, %s127
      %p138 = scmp.eq.s32.totalorder %s28, 0
      %p139 = por %p137, %p138
      %p140 = scmp.ne.s32.totalorder %s126, %s127
      %p141 = scmp.eq.s32.totalorder %s29, 1
      %p142 = por %p140, %p141
      %p144 = scmp.ne.s32.totalorder %s127, %s143
      %p145 = scmp.eq.s32.totalorder %s29, 0
      %p146 = por %p144, %p145
      %s147 = ssub.s32 %s31, %s38
      %p148 = scmp.eq.s32.totalorder %s147, 0
      %s150 = sadd.s32 %s149, 1
      %s151 = scalar_select %p148, %s149, %s150
      %p154 = pneg %p148
      %p155 = scmp.eq.s32.totalorder %s23, 1
      %p156 = por %p154, %p155
      %p157 = scmp.ne.s32.totalorder %s149, %s152
      %p158 = scmp.eq.s32.totalorder %s23, 0
      %p159 = por %p157, %p158
      %p160 = scmp.ne.s32.totalorder %s149, %s152
      %p161 = scmp.eq.s32.totalorder %s28, 1
      %p162 = por %p160, %p161
      %p163 = scmp.ne.s32.totalorder %s152, %s153
      %p164 = scmp.eq.s32.totalorder %s28, 0
      %p165 = por %p163, %p164
      %p166 = scmp.ne.s32.totalorder %s152, %s153
      %p167 = scmp.eq.s32.totalorder %s29, 1
      %p168 = por %p166, %p167
      %p170 = scmp.ne.s32.totalorder %s153, %s169
      %p171 = scmp.eq.s32.totalorder %s29, 0
      %p172 = por %p170, %p171
      %s173 = ssub.s32 %s30, %s42
      %s174 = ssub.s32 %s31, %s38
      %s175 = sor.u32 %s173, %s174
      %p176 = scmp.eq.s32.totalorder %s175, 0
      %s178 = sadd.s32 %s177, 1
      %s179 = scalar_select %p176, %s177, %s178
      %p182 = pneg %p176
      %p183 = scmp.eq.s32.totalorder %s23, 1
      %p184 = por %p182, %p183
      %p185 = scmp.ne.s32.totalorder %s177, %s180
      %p186 = scmp.eq.s32.totalorder %s23, 0
      %p187 = por %p185, %p186
      %p188 = scmp.ne.s32.totalorder %s177, %s180
      %p189 = scmp.eq.s32.totalorder %s28, 1
      %p190 = por %p188, %p189
      %p191 = scmp.ne.s32.totalorder %s180, %s181
      %p192 = scmp.eq.s32.totalorder %s28, 0
      %p193 = por %p191, %p192
      %p194 = scmp.ne.s32.totalorder %s180, %s181
      %p195 = scmp.eq.s32.totalorder %s29, 1
      %p196 = por %p194, %p195
      %p198 = scmp.ne.s32.totalorder %s181, %s197
      %p199 = scmp.eq.s32.totalorder %s29, 0
      %p200 = por %p198, %p199
      %s201 = ssub.s32 %s30, %s42
      %s202 = ssub.s32 %s31, %s38
      %s203 = sor.u32 %s201, %s202
      %p204 = scmp.eq.s32.totalorder %s203, 0
      %s206 = sadd.s32 %s205, 1
      %s207 = scalar_select %p204, %s205, %s206
      %p210 = pneg %p204
      %p211 = scmp.eq.s32.totalorder %s23, 1
      %p212 = por %p210, %p211
      %p213 = scmp.ne.s32.totalorder %s205, %s208
      %p214 = scmp.eq.s32.totalorder %s23, 0
      %p215 = por %p213, %p214
      %p216 = scmp.ne.s32.totalorder %s205, %s208
      %p217 = scmp.eq.s32.totalorder %s28, 1
      %p218 = por %p216, %p217
      %p219 = scmp.ne.s32.totalorder %s208, %s209
      %p220 = scmp.eq.s32.totalorder %s28, 0
      %p221 = por %p219, %p220
      %p222 = scmp.ne.s32.totalorder %s208, %s209
      %p223 = scmp.eq.s32.totalorder %s29, 1
      %p224 = por %p222, %p223
      %p226 = scmp.ne.s32.totalorder %s209, %s225
      %p227 = scmp.eq.s32.totalorder %s29, 0
      %p228 = por %p226, %p227
      %p229 = scmp.le.s32.totalorder 1, %s23
      %p230 = scmp.lt.s32.totalorder %s23, 3
      %p231 = pnand %p229, %p230
      %p232 = pneg %p231
      // Predicated region
      $region9: #{tpu_custom_call.1} parent=5 // pred_check
        _
      $region10: #{tpu_custom_call.1} parent=5 // pred_check_branch
        %234 = sbr.rel (%p231) target = $region12
      $region11: #{tpu_custom_call.1} parent=5 // pred_region
        %s235 = ssub.s32 %s23, 1
        // Predicated region
        $region13: #{tpu_custom_call.1} parent=11 // pred_check
          %p236 = pneg %p87
        $region14: #{tpu_custom_call.1} parent=11 // pred_check_branch
          %238 = sbr.rel (%p236) target = $region16
        $region15: #{tpu_custom_call.1} parent=11 // pred_region
          %240 = vsyncadd [#allocation7], 0
          %s241 = smul.addr %s33, 4
          %s242 = scalar_lea.hbm %s1, %s241
          %s243 = sshll.u32 %s242, 4
          %s244 = int_to_ptr.hbm [resolvable:$true] %s243
          %s245 = sshll.u32 [#allocation6], 4
          %s246 = int_to_ptr.vmem [resolvable:$true] %s245
          %251 = dma.hbm_to_vmem [thread:$0]  %s244, 1024, %s246, [#allocation7], 64, 64, 4
        $region16: #{tpu_custom_call.1} parent=11 // pred_fallthru
          _
        // Predicated region
        $region17: #{tpu_custom_call.1} parent=11 // pred_check
          %p252 = pneg %p113
        $region18: #{tpu_custom_call.1} parent=11 // pred_check_branch
          %254 = sbr.rel (%p252) target = $region20
        $region19: #{tpu_custom_call.1} parent=11 // pred_region
          %p255 = scmp.lt.s32.totalorder %s33, 0
          %s256 = scalar_select %p255, %s33, 0
          %s257 = scalar_lea.vmem %s2, %s256
        $region20: #{tpu_custom_call.1} parent=11 // pred_fallthru
          _
        // Predicated region
        $region21: #{tpu_custom_call.1} parent=11 // pred_check
          %p258 = pneg %p139
        $region22: #{tpu_custom_call.1} parent=11 // pred_check_branch
          %260 = sbr.rel (%p258) target = $region24
        $region23: #{tpu_custom_call.1} parent=11 // pred_region
          %262 = vsyncadd [#allocation7], 0
          %s263 = smul.addr %s33, 4
          %s264 = scalar_lea.hbm %s3, %s263
          %s265 = sshll.u32 %s264, 4
          %s266 = int_to_ptr.hbm [resolvable:$true] %s265
          %s267 = sshll.u32 [#allocation8], 4
          %s268 = int_to_ptr.vmem [resolvable:$true] %s267
          %273 = dma.hbm_to_vmem [thread:$0]  %s266, 192, %s268, [#allocation7], 64, 64, 4
        $region24: #{tpu_custom_call.1} parent=11 // pred_fallthru
          _
        // Predicated region
        $region25: #{tpu_custom_call.1} parent=11 // pred_check
          %p274 = pneg %p165
        $region26: #{tpu_custom_call.1} parent=11 // pred_check_branch
          %276 = sbr.rel (%p274) target = $region28
        $region27: #{tpu_custom_call.1} parent=11 // pred_region
          %p277 = scmp.lt.s32.totalorder %s33, 0
          %s278 = scalar_select %p277, %s33, 0
          %s279 = scalar_lea.vmem %s4, %s278
        $region28: #{tpu_custom_call.1} parent=11 // pred_fallthru
          _
      $region12: #{tpu_custom_call.1} parent=5 // pred_fallthru
        _
      %p280 = scmp.lt.s32.totalorder %s23, 2
      // Predicated region
      $region29: #{tpu_custom_call.1} parent=5 // pred_check
        %p281 = pneg %p280
      $region30: #{tpu_custom_call.1} parent=5 // pred_check_branch
        %283 = sbr.rel (%p281) target = $region32
      $region31: #{tpu_custom_call.1} parent=5 // pred_region
        // Predicated region
        $region33: #{tpu_custom_call.1} parent=31 // pred_check
          %p284 = pneg %p55
        $region34: #{tpu_custom_call.1} parent=31 // pred_check_branch
          %286 = sbr.rel (%p284) target = $region36
        $region35: #{tpu_custom_call.1} parent=31 // pred_region
          %s287 = sand.u32 %s45, 1
          %s288 = scalar_lea.sflag [#allocation4], %s287
          %s289 = sand.u32 %s45, 1
          %s290 = smul.addr %s289, 128
          %s291 = scalar_lea.vmem [#allocation3], %s290
          %293 = vsyncadd %s288, 0
          %s294 = smul.addr %s30, 32
          %s295 = smul.addr %s294, 4
          %s296 = scalar_lea.hbm %s0, %s295
          %s297 = sshll.u32 %s296, 4
          %s298 = int_to_ptr.hbm [resolvable:$true] %s297
          %s299 = sshll.u32 %s291, 4
          %s300 = int_to_ptr.vmem [resolvable:$true] %s299
          %305 = dma.hbm_to_vmem [thread:$0]  %s298, 2048, %s300, %s288, 64, 64, 4
        $region36: #{tpu_custom_call.1} parent=31 // pred_fallthru
          _
      $region32: #{tpu_custom_call.1} parent=5 // pred_fallthru
        _
      %p306 = scmp.le.s32.totalorder 1, %s23
      %p307 = scmp.lt.s32.totalorder %s23, 3
      %p308 = pnand %p306, %p307
      %p309 = pneg %p308
      // Predicated region
      $region37: #{tpu_custom_call.1} parent=5 // pred_check
        _
      $region38: #{tpu_custom_call.1} parent=5 // pred_check_branch
        %311 = sbr.rel (%p308) target = $region40
      $region39: #{tpu_custom_call.1} parent=5 // pred_region
        %s312 = ssub.s32 %s23, 1
        %s313 = sand.u32 %s48, 1
        %s314 = scalar_lea.sflag [#allocation4], %s313
        %s315 = sand.u32 %s48, 1
        %s316 = smul.addr %s315, 128
        %s317 = scalar_lea.vmem [#allocation3], %s316
        // Predicated region
        $region41: #{tpu_custom_call.1} parent=39 // pred_check
          %p318 = pneg %p61
        $region42: #{tpu_custom_call.1} parent=39 // pred_check_branch
          %320 = sbr.rel (%p318) target = $region44
        $region43: #{tpu_custom_call.1} parent=39 // pred_region
          %322 = dma.done %s314, 2048
        $region44: #{tpu_custom_call.1} parent=39 // pred_fallthru
          _
        // Predicated region
        $region45: #{tpu_custom_call.1} parent=39 // pred_check
          %p323 = pneg %p87
        $region46: #{tpu_custom_call.1} parent=39 // pred_check_branch
          %325 = sbr.rel (%p323) target = $region48
        $region47: #{tpu_custom_call.1} parent=39 // pred_region
          %327 = dma.done [#allocation7], 1024
        $region48: #{tpu_custom_call.1} parent=39 // pred_fallthru
          _
        // Predicated region
        $region49: #{tpu_custom_call.1} parent=39 // pred_check
          %p328 = pneg %p139
        $region50: #{tpu_custom_call.1} parent=39 // pred_check_branch
          %330 = sbr.rel (%p328) target = $region52
        $region51: #{tpu_custom_call.1} parent=39 // pred_region
          %332 = dma.done [#allocation7], 192
        $region52: #{tpu_custom_call.1} parent=39 // pred_fallthru
          _
        %s333 = sand.u32 %s48, 1
        %s334 = scalar_lea.sflag [#allocation4], %s333
        %s335 = sand.u32 %s48, 1
        %s336 = smul.addr %s335, 128
        %s337 = scalar_lea.vmem [#allocation3], %s336
        %p338 = pneg %p61
        %p339 = pneg %p58
        %p340 = pneg %p87
        %p341 = pneg %p84
        %p342 = scmp.lt.s32.totalorder %s33, 0
        %s343 = scalar_select %p342, %s33, 0
        %s344 = scalar_lea.vmem %s2, %s343
        %p345 = pneg %p113
        %p346 = pneg %p110
        %p347 = pneg %p139
        %p348 = pneg %p136
        %p349 = scmp.lt.s32.totalorder %s33, 0
        %s350 = scalar_select %p349, %s33, 0
        %s351 = scalar_lea.vmem %s4, %s350
        %p352 = pneg %p165
        %p353 = pneg %p162
        %p354 = pneg %p193
        %p355 = pneg %p190
        %s356 = sand.u32 %s180, 1
        %s357 = scalar_lea.sflag [#allocation5], %s356
        %s358 = sand.u32 %s180, 1
        %s359 = smul.addr %s358, 128
        %s360 = scalar_lea.vmem [#allocation9], %s359
        %p361 = pneg %p221
        %p362 = pneg %p218
        %s363 = sand.u32 %s208, 1
        %s364 = scalar_lea.sflag [#allocation11], %s363
        %s365 = sand.u32 %s208, 1
        %s366 = scalar_lea.vmem [#allocation10], %s365
        %p367 = scmp.lt.s32.totalorder %s33, 0
        %s368 = scalar_select %p367, %s33, 0
        %s369 = scalar_lea.vmem %s2, %s368
        %p370 = scmp.lt.s32.totalorder %s33, 0
        %s371 = scalar_select %p370, %s33, 0
        %s372 = scalar_lea.vmem %s4, %s371
        %v373 = vld [vmem:[%s317] sm:$0xf]
        %v374 = vld [vmem:[%s317 + $0x4] sm:$0xf]
        %v375 = vld [vmem:[%s317 + $0x8] sm:$0xf]
        %v376 = vld [vmem:[%s317 + $0xc] sm:$0xf]
        %v377 = vld [vmem:[%s317 + $0x10] sm:$0xf]
        %v378 = vld [vmem:[%s317 + $0x14] sm:$0xf]
        %v379 = vld [vmem:[%s317 + $0x18] sm:$0xf]
        %v380 = vld [vmem:[%s317 + $0x1c] sm:$0xf]
        %v381 = vld [vmem:[%s317 + $0x20] sm:$0xf]
        %v382 = vld [vmem:[%s317 + $0x24] sm:$0xf]
        %v383 = vld [vmem:[%s317 + $0x28] sm:$0xf]
        %v384 = vld [vmem:[%s317 + $0x2c] sm:$0xf]
        %v385 = vld [vmem:[%s317 + $0x30] sm:$0xf]
        %v386 = vld [vmem:[%s317 + $0x34] sm:$0xf]
        %v387 = vld [vmem:[%s317 + $0x38] sm:$0xf]
        %v388 = vld [vmem:[%s317 + $0x3c] sm:$0xf]
        %v389 = vld [vmem:[%s317 + $0x40] sm:$0xf]
        %v390 = vld [vmem:[%s317 + $0x44] sm:$0xf]
        %v391 = vld [vmem:[%s317 + $0x48] sm:$0xf]
        %v392 = vld [vmem:[%s317 + $0x4c] sm:$0xf]
        %v393 = vld [vmem:[%s317 + $0x50] sm:$0xf]
        %v394 = vld [vmem:[%s317 + $0x54] sm:$0xf]
        %v395 = vld [vmem:[%s317 + $0x58] sm:$0xf]
        %v396 = vld [vmem:[%s317 + $0x5c] sm:$0xf]
        %v397 = vld [vmem:[%s317 + $0x60] sm:$0xf]
        %v398 = vld [vmem:[%s317 + $0x64] sm:$0xf]
        %v399 = vld [vmem:[%s317 + $0x68] sm:$0xf]
        %v400 = vld [vmem:[%s317 + $0x6c] sm:$0xf]
        %v401 = vld [vmem:[%s317 + $0x70] sm:$0xf]
        %v402 = vld [vmem:[%s317 + $0x74] sm:$0xf]
        %v403 = vld [vmem:[%s317 + $0x78] sm:$0xf]
        %v404 = vld [vmem:[%s317 + $0x7c] sm:$0xf]
        %v405 = vld [vmem:[#allocation6] sm:$0xf]
        %v406 = vld [vmem:[#allocation6 + $0x4] sm:$0xf]
        %v407 = vld [vmem:[#allocation6 + $0x8] sm:$0xf]
        %v408 = vld [vmem:[#allocation6 + $0xc] sm:$0xf]
        %v409 = vld [vmem:[#allocation6 + $0x10] sm:$0xf]
        %v410 = vld [vmem:[#allocation6 + $0x14] sm:$0xf]
        %v411 = vld [vmem:[#allocation6 + $0x18] sm:$0xf]
        %v412 = vld [vmem:[#allocation6 + $0x1c] sm:$0xf]
        %v413 = vld [vmem:[#allocation6 + $0x20] sm:$0xf]
        %v414 = vld [vmem:[#allocation6 + $0x24] sm:$0xf]
        %v415 = vld [vmem:[#allocation6 + $0x28] sm:$0xf]
        %v416 = vld [vmem:[#allocation6 + $0x2c] sm:$0xf]
        %v417 = vld [vmem:[#allocation6 + $0x30] sm:$0xf]
        %v418 = vld [vmem:[#allocation6 + $0x34] sm:$0xf]
        %v419 = vld [vmem:[#allocation6 + $0x38] sm:$0xf]
        %v420 = vld [vmem:[#allocation6 + $0x3c] sm:$0xf]
        %v421 = vld [vmem:[%s369] sm:$0x1]
        %v423 = vperm.slane %v421, 0
        %v457 = vunpack.c.l.b16 %v373
        %v458 = vunpack.c.l.b16 %v374
        %v459 = vunpack.c.l.b16 %v375
        %v460 = vunpack.c.l.b16 %v376
        %v461 = vunpack.c.l.b16 %v377
        %v462 = vunpack.c.l.b16 %v378
        %v463 = vunpack.c.l.b16 %v379
        %v464 = vunpack.c.l.b16 %v380
        %v465 = vunpack.c.l.b16 %v381
        %v466 = vunpack.c.l.b16 %v382
        %v467 = vunpack.c.l.b16 %v383
        %v468 = vunpack.c.l.b16 %v384
        %v469 = vunpack.c.l.b16 %v385
        %v470 = vunpack.c.l.b16 %v386
        %v471 = vunpack.c.l.b16 %v387
        %v472 = vunpack.c.l.b16 %v388
        %v473 = vunpack.c.l.b16 %v389
        %v474 = vunpack.c.l.b16 %v390
        %v475 = vunpack.c.l.b16 %v391
        %v476 = vunpack.c.l.b16 %v392
        %v477 = vunpack.c.l.b16 %v393
        %v478 = vunpack.c.l.b16 %v394
        %v479 = vunpack.c.l.b16 %v395
        %v480 = vunpack.c.l.b16 %v396
        %v481 = vunpack.c.l.b16 %v397
        %v482 = vunpack.c.l.b16 %v398
        %v483 = vunpack.c.l.b16 %v399
        %v484 = vunpack.c.l.b16 %v400
        %v485 = vunpack.c.l.b16 %v401
        %v486 = vunpack.c.l.b16 %v402
        %v487 = vunpack.c.l.b16 %v403
        %v488 = vunpack.c.l.b16 %v404
        %v489 = vpack.c.b16 %v458, %v457
        %v490 = vpack.c.b16 %v460, %v459
        %v491 = vpack.c.b16 %v462, %v461
        %v492 = vpack.c.b16 %v464, %v463
        %v493 = vpack.c.b16 %v466, %v465
        %v494 = vpack.c.b16 %v468, %v467
        %v495 = vpack.c.b16 %v470, %v469
        %v496 = vpack.c.b16 %v472, %v471
        %v497 = vpack.c.b16 %v474, %v473
        %v498 = vpack.c.b16 %v476, %v475
        %v499 = vpack.c.b16 %v478, %v477
        %v500 = vpack.c.b16 %v480, %v479
        %v501 = vpack.c.b16 %v482, %v481
        %v502 = vpack.c.b16 %v484, %v483
        %v503 = vpack.c.b16 %v486, %v485
        %v504 = vpack.c.b16 %v488, %v487
        %v537 = vunpack.c.l.b16 %v405
        %v538 = vunpack.c.l.b16 %v406
        %v539 = vunpack.c.l.b16 %v407
        %v540 = vunpack.c.l.b16 %v408
        %v541 = vunpack.c.l.b16 %v409
        %v542 = vunpack.c.l.b16 %v410
        %v543 = vunpack.c.l.b16 %v411
        %v544 = vunpack.c.l.b16 %v412
        %v545 = vunpack.c.l.b16 %v413
        %v546 = vunpack.c.l.b16 %v414
        %v547 = vunpack.c.l.b16 %v415
        %v548 = vunpack.c.l.b16 %v416
        %v549 = vunpack.c.l.b16 %v417
        %v550 = vunpack.c.l.b16 %v418
        %v551 = vunpack.c.l.b16 %v419
        %v552 = vunpack.c.l.b16 %v420
        %v553 = vpack.c.b16 %v538, %v537
        %v554 = vpack.c.b16 %v540, %v539
        %v555 = vpack.c.b16 %v542, %v541
        %v556 = vpack.c.b16 %v544, %v543
        %v557 = vpack.c.b16 %v546, %v545
        %v558 = vpack.c.b16 %v548, %v547
        %v559 = vpack.c.b16 %v550, %v549
        %v560 = vpack.c.b16 %v552, %v551
        %569 = vmatpush.bf16.msra.mxu0 %v560
        %570 = vmatpush.bf16.msra.mxu0 %v559
        %571 = vmatpush.bf16.msra.mxu0 %v558
        %572 = vmatpush.bf16.msra.mxu0 %v557
        %573 = vmatpush.bf16.msra.mxu0 %v556
        %574 = vmatpush.bf16.msra.mxu0 %v555
        %575 = vmatpush.bf16.msra.mxu0 %v554
        %576 = vmatpush.bf16.msra.mxu0 %v553
        %577 = vmatmul.bf16.gmra.mxu0 %v489
        %v578 = vpop.f32.mrf.mxu0
        %v579 = vadd.f32 %v423, %v578
        %v580 = vpop.f32.mrf.mxu0
        %v581 = vadd.f32 %v423, %v580
        %582 = vmatmul.bf16.gmra.mxu0 %v490
        %v583 = vpop.f32.mrf.mxu0
        %v584 = vadd.f32 %v423, %v583
        %v585 = vpop.f32.mrf.mxu0
        %v586 = vadd.f32 %v423, %v585
        %587 = vmatmul.bf16.gmra.mxu0 %v491
        %v588 = vpop.f32.mrf.mxu0
        %v589 = vadd.f32 %v423, %v588
        %v590 = vpop.f32.mrf.mxu0
        %v591 = vadd.f32 %v423, %v590
        %592 = vmatmul.bf16.gmra.mxu0 %v492
        %v593 = vpop.f32.mrf.mxu0
        %v594 = vadd.f32 %v423, %v593
        %v595 = vpop.f32.mrf.mxu0
        %v596 = vadd.f32 %v423, %v595
        %597 = vmatmul.bf16.gmra.mxu0 %v493
        %v598 = vpop.f32.mrf.mxu0
        %v599 = vadd.f32 %v423, %v598
        %v600 = vpop.f32.mrf.mxu0
        %v601 = vadd.f32 %v423, %v600
        %602 = vmatmul.bf16.gmra.mxu0 %v494
        %v603 = vpop.f32.mrf.mxu0
        %v604 = vadd.f32 %v423, %v603
        %v605 = vpop.f32.mrf.mxu0
        %v606 = vadd.f32 %v423, %v605
        %607 = vmatmul.bf16.gmra.mxu0 %v495
        %v608 = vpop.f32.mrf.mxu0
        %v609 = vadd.f32 %v423, %v608
        %v610 = vpop.f32.mrf.mxu0
        %v611 = vadd.f32 %v423, %v610
        %612 = vmatmul.bf16.gmra.mxu0 %v496
        %v613 = vpop.f32.mrf.mxu0
        %v614 = vadd.f32 %v423, %v613
        %v615 = vpop.f32.mrf.mxu0
        %v616 = vadd.f32 %v423, %v615
        %617 = vmatmul.bf16.gmra.mxu0 %v497
        %v618 = vpop.f32.mrf.mxu0
        %v619 = vadd.f32 %v423, %v618
        %v620 = vpop.f32.mrf.mxu0
        %v621 = vadd.f32 %v423, %v620
        %622 = vmatmul.bf16.gmra.mxu0 %v498
        %v623 = vpop.f32.mrf.mxu0
        %v624 = vadd.f32 %v423, %v623
        %v625 = vpop.f32.mrf.mxu0
        %v626 = vadd.f32 %v423, %v625
        %627 = vmatmul.bf16.gmra.mxu0 %v499
        %v628 = vpop.f32.mrf.mxu0
        %v629 = vadd.f32 %v423, %v628
        %v630 = vpop.f32.mrf.mxu0
        %v631 = vadd.f32 %v423, %v630
        %632 = vmatmul.bf16.gmra.mxu0 %v500
        %v633 = vpop.f32.mrf.mxu0
        %v634 = vadd.f32 %v423, %v633
        %v635 = vpop.f32.mrf.mxu0
        %v636 = vadd.f32 %v423, %v635
        %637 = vmatmul.bf16.gmra.mxu0 %v501
        %v638 = vpop.f32.mrf.mxu0
        %v639 = vadd.f32 %v423, %v638
        %v640 = vpop.f32.mrf.mxu0
        %v641 = vadd.f32 %v423, %v640
        %642 = vmatmul.bf16.gmra.mxu0 %v502
        %v643 = vpop.f32.mrf.mxu0
        %v644 = vadd.f32 %v423, %v643
        %v645 = vpop.f32.mrf.mxu0
        %v646 = vadd.f32 %v423, %v645
        %647 = vmatmul.bf16.gmra.mxu0 %v503
        %v648 = vpop.f32.mrf.mxu0
        %v649 = vadd.f32 %v423, %v648
        %v650 = vpop.f32.mrf.mxu0
        %v651 = vadd.f32 %v423, %v650
        %652 = vmatmul.bf16.gmra.mxu0 %v504
        %v653 = vpop.f32.mrf.mxu0
        %v654 = vadd.f32 %v423, %v653
        %v655 = vpop.f32.mrf.mxu0
        %v656 = vadd.f32 %v423, %v655
        %657 = vdwg.mxu0
        %v658 = vxor.u32 %v579, 2147483648
        %v659 = vxor.u32 %v581, 2147483648
        %v660 = vxor.u32 %v584, 2147483648
        %v661 = vxor.u32 %v586, 2147483648
        %v662 = vxor.u32 %v589, 2147483648
        %v663 = vxor.u32 %v591, 2147483648
        %v664 = vxor.u32 %v594, 2147483648
        %v665 = vxor.u32 %v596, 2147483648
        %v666 = vxor.u32 %v599, 2147483648
        %v667 = vxor.u32 %v601, 2147483648
        %v668 = vxor.u32 %v604, 2147483648
        %v669 = vxor.u32 %v606, 2147483648
        %v670 = vxor.u32 %v609, 2147483648
        %v671 = vxor.u32 %v611, 2147483648
        %v672 = vxor.u32 %v614, 2147483648
        %v673 = vxor.u32 %v616, 2147483648
        %v674 = vxor.u32 %v619, 2147483648
        %v675 = vxor.u32 %v621, 2147483648
        %v676 = vxor.u32 %v624, 2147483648
        %v677 = vxor.u32 %v626, 2147483648
        %v678 = vxor.u32 %v629, 2147483648
        %v679 = vxor.u32 %v631, 2147483648
        %v680 = vxor.u32 %v634, 2147483648
        %v681 = vxor.u32 %v636, 2147483648
        %v682 = vxor.u32 %v639, 2147483648
        %v683 = vxor.u32 %v641, 2147483648
        %v684 = vxor.u32 %v644, 2147483648
        %v685 = vxor.u32 %v646, 2147483648
        %v686 = vxor.u32 %v649, 2147483648
        %v687 = vxor.u32 %v651, 2147483648
        %v688 = vxor.u32 %v654, 2147483648
        %v689 = vxor.u32 %v656, 2147483648
        %v690 = vmul.f32 %v658, 1.442695
        %v691 = vpow.pop %v690
        %v692 = vmul.f32 %v659, 1.442695
        %v693 = vpow.pop %v692
        %v694 = vmul.f32 %v660, 1.442695
        %v695 = vpow.pop %v694
        %v696 = vmul.f32 %v661, 1.442695
        %v697 = vpow.pop %v696
        %v698 = vmul.f32 %v662, 1.442695
        %v699 = vpow.pop %v698
        %v700 = vmul.f32 %v663, 1.442695
        %v701 = vpow.pop %v700
        %v702 = vmul.f32 %v664, 1.442695
        %v703 = vpow.pop %v702
        %v704 = vmul.f32 %v665, 1.442695
        %v705 = vpow.pop %v704
        %v706 = vmul.f32 %v666, 1.442695
        %v707 = vpow.pop %v706
        %v708 = vmul.f32 %v667, 1.442695
        %v709 = vpow.pop %v708
        %v710 = vmul.f32 %v668, 1.442695
        %v711 = vpow.pop %v710
        %v712 = vmul.f32 %v669, 1.442695
        %v713 = vpow.pop %v712
        %v714 = vmul.f32 %v670, 1.442695
        %v715 = vpow.pop %v714
        %v716 = vmul.f32 %v671, 1.442695
        %v717 = vpow.pop %v716
        %v718 = vmul.f32 %v672, 1.442695
        %v719 = vpow.pop %v718
        %v720 = vmul.f32 %v673, 1.442695
        %v721 = vpow.pop %v720
        %v722 = vmul.f32 %v674, 1.442695
        %v723 = vpow.pop %v722
        %v724 = vmul.f32 %v675, 1.442695
        %v725 = vpow.pop %v724
        %v726 = vmul.f32 %v676, 1.442695
        %v727 = vpow.pop %v726
        %v728 = vmul.f32 %v677, 1.442695
        %v729 = vpow.pop %v728
        %v730 = vmul.f32 %v678, 1.442695
        %v731 = vpow.pop %v730
        %v732 = vmul.f32 %v679, 1.442695
        %v733 = vpow.pop %v732
        %v734 = vmul.f32 %v680, 1.442695
        %v735 = vpow.pop %v734
        %v736 = vmul.f32 %v681, 1.442695
        %v737 = vpow.pop %v736
        %v738 = vmul.f32 %v682, 1.442695
        %v739 = vpow.pop %v738
        %v740 = vmul.f32 %v683, 1.442695
        %v741 = vpow.pop %v740
        %v742 = vmul.f32 %v684, 1.442695
        %v743 = vpow.pop %v742
        %v744 = vmul.f32 %v685, 1.442695
        %v745 = vpow.pop %v744
        %v746 = vmul.f32 %v686, 1.442695
        %v747 = vpow.pop %v746
        %v748 = vmul.f32 %v687, 1.442695
        %v749 = vpow.pop %v748
        %v750 = vmul.f32 %v688, 1.442695
        %v751 = vpow.pop %v750
        %v752 = vmul.f32 %v689, 1.442695
        %v753 = vpow.pop %v752
        %v754 = vadd.f32 %v691, 1.0
        %v755 = vadd.f32 %v693, 1.0
        %v756 = vadd.f32 %v695, 1.0
        %v757 = vadd.f32 %v697, 1.0
        %v758 = vadd.f32 %v699, 1.0
        %v759 = vadd.f32 %v701, 1.0
        %v760 = vadd.f32 %v703, 1.0
        %v761 = vadd.f32 %v705, 1.0
        %v762 = vadd.f32 %v707, 1.0
        %v763 = vadd.f32 %v709, 1.0
        %v764 = vadd.f32 %v711, 1.0
        %v765 = vadd.f32 %v713, 1.0
        %v766 = vadd.f32 %v715, 1.0
        %v767 = vadd.f32 %v717, 1.0
        %v768 = vadd.f32 %v719, 1.0
        %v769 = vadd.f32 %v721, 1.0
        %v770 = vadd.f32 %v723, 1.0
        %v771 = vadd.f32 %v725, 1.0
        %v772 = vadd.f32 %v727, 1.0
        %v773 = vadd.f32 %v729, 1.0
        %v774 = vadd.f32 %v731, 1.0
        %v775 = vadd.f32 %v733, 1.0
        %v776 = vadd.f32 %v735, 1.0
        %v777 = vadd.f32 %v737, 1.0
        %v778 = vadd.f32 %v739, 1.0
        %v779 = vadd.f32 %v741, 1.0
        %v780 = vadd.f32 %v743, 1.0
        %v781 = vadd.f32 %v745, 1.0
        %v782 = vadd.f32 %v747, 1.0
        %v783 = vadd.f32 %v749, 1.0
        %v784 = vadd.f32 %v751, 1.0
        %v785 = vadd.f32 %v753, 1.0
        %v786 = vrcp.pop %v754
        %v787 = vmul.f32 %v754, %v786
        %v788 = vsub.f32 1.0, %v787
        %v789 = vmul.f32 %v786, %v788
        %v790 = vadd.f32 %v786, %v789
        %vm791 = vweird.f32 %v754
        %vm792 = vweird.f32 %v786
        %vm793 = vmor %vm791, %vm792
        %v794 = vsel %vm793, %v786, %v790
        %v795 = vand.u32 2147483647, %v754
        %vm796 = vcmp.eq.f32.partialorder %v795, 8.507059e+37
        %v797 = vand.u32 %v754, 2147483648
        %v798 = vor.u32 1.1754944e-38, %v797
        %v799 = vsel %vm796, %v798, %v794
        %v800 = vmul.f32 1.0, %v799
        %v801 = vrcp.pop %v755
        %v802 = vmul.f32 %v755, %v801
        %v803 = vsub.f32 1.0, %v802
        %v804 = vmul.f32 %v801, %v803
        %v805 = vadd.f32 %v801, %v804
        %vm806 = vweird.f32 %v755
        %vm807 = vweird.f32 %v801
        %vm808 = vmor %vm806, %vm807
        %v809 = vsel %vm808, %v801, %v805
        %v810 = vand.u32 2147483647, %v755
        %vm811 = vcmp.eq.f32.partialorder %v810, 8.507059e+37
        %v812 = vand.u32 %v755, 2147483648
        %v813 = vor.u32 1.1754944e-38, %v812
        %v814 = vsel %vm811, %v813, %v809
        %v815 = vmul.f32 1.0, %v814
        %v816 = vrcp.pop %v756
        %v817 = vmul.f32 %v756, %v816
        %v818 = vsub.f32 1.0, %v817
        %v819 = vmul.f32 %v816, %v818
        %v820 = vadd.f32 %v816, %v819
        %vm821 = vweird.f32 %v756
        %vm822 = vweird.f32 %v816
        %vm823 = vmor %vm821, %vm822
        %v824 = vsel %vm823, %v816, %v820
        %v825 = vand.u32 2147483647, %v756
        %vm826 = vcmp.eq.f32.partialorder %v825, 8.507059e+37
        %v827 = vand.u32 %v756, 2147483648
        %v828 = vor.u32 1.1754944e-38, %v827
        %v829 = vsel %vm826, %v828, %v824
        %v830 = vmul.f32 1.0, %v829
        %v831 = vrcp.pop %v757
        %v832 = vmul.f32 %v757, %v831
        %v833 = vsub.f32 1.0, %v832
        %v834 = vmul.f32 %v831, %v833
        %v835 = vadd.f32 %v831, %v834
        %vm836 = vweird.f32 %v757
        %vm837 = vweird.f32 %v831
        %vm838 = vmor %vm836, %vm837
        %v839 = vsel %vm838, %v831, %v835
        %v840 = vand.u32 2147483647, %v757
        %vm841 = vcmp.eq.f32.partialorder %v840, 8.507059e+37
        %v842 = vand.u32 %v757, 2147483648
        %v843 = vor.u32 1.1754944e-38, %v842
        %v844 = vsel %vm841, %v843, %v839
        %v845 = vmul.f32 1.0, %v844
        %v846 = vrcp.pop %v758
        %v847 = vmul.f32 %v758, %v846
        %v848 = vsub.f32 1.0, %v847
        %v849 = vmul.f32 %v846, %v848
        %v850 = vadd.f32 %v846, %v849
        %vm851 = vweird.f32 %v758
        %vm852 = vweird.f32 %v846
        %vm853 = vmor %vm851, %vm852
        %v854 = vsel %vm853, %v846, %v850
        %v855 = vand.u32 2147483647, %v758
        %vm856 = vcmp.eq.f32.partialorder %v855, 8.507059e+37
        %v857 = vand.u32 %v758, 2147483648
        %v858 = vor.u32 1.1754944e-38, %v857
        %v859 = vsel %vm856, %v858, %v854
        %v860 = vmul.f32 1.0, %v859
        %v861 = vrcp.pop %v759
        %v862 = vmul.f32 %v759, %v861
        %v863 = vsub.f32 1.0, %v862
        %v864 = vmul.f32 %v861, %v863
        %v865 = vadd.f32 %v861, %v864
        %vm866 = vweird.f32 %v759
        %vm867 = vweird.f32 %v861
        %vm868 = vmor %vm866, %vm867
        %v869 = vsel %vm868, %v861, %v865
        %v870 = vand.u32 2147483647, %v759
        %vm871 = vcmp.eq.f32.partialorder %v870, 8.507059e+37
        %v872 = vand.u32 %v759, 2147483648
        %v873 = vor.u32 1.1754944e-38, %v872
        %v874 = vsel %vm871, %v873, %v869
        %v875 = vmul.f32 1.0, %v874
        %v876 = vrcp.pop %v760
        %v877 = vmul.f32 %v760, %v876
        %v878 = vsub.f32 1.0, %v877
        %v879 = vmul.f32 %v876, %v878
        %v880 = vadd.f32 %v876, %v879
        %vm881 = vweird.f32 %v760
        %vm882 = vweird.f32 %v876
        %vm883 = vmor %vm881, %vm882
        %v884 = vsel %vm883, %v876, %v880
        %v885 = vand.u32 2147483647, %v760
        %vm886 = vcmp.eq.f32.partialorder %v885, 8.507059e+37
        %v887 = vand.u32 %v760, 2147483648
        %v888 = vor.u32 1.1754944e-38, %v887
        %v889 = vsel %vm886, %v888, %v884
        %v890 = vmul.f32 1.0, %v889
        %v891 = vrcp.pop %v761
        %v892 = vmul.f32 %v761, %v891
        %v893 = vsub.f32 1.0, %v892
        %v894 = vmul.f32 %v891, %v893
        %v895 = vadd.f32 %v891, %v894
        %vm896 = vweird.f32 %v761
        %vm897 = vweird.f32 %v891
        %vm898 = vmor %vm896, %vm897
        %v899 = vsel %vm898, %v891, %v895
        %v900 = vand.u32 2147483647, %v761
        %vm901 = vcmp.eq.f32.partialorder %v900, 8.507059e+37
        %v902 = vand.u32 %v761, 2147483648
        %v903 = vor.u32 1.1754944e-38, %v902
        %v904 = vsel %vm901, %v903, %v899
        %v905 = vmul.f32 1.0, %v904
        %v906 = vrcp.pop %v762
        %v907 = vmul.f32 %v762, %v906
        %v908 = vsub.f32 1.0, %v907
        %v909 = vmul.f32 %v906, %v908
        %v910 = vadd.f32 %v906, %v909
        %vm911 = vweird.f32 %v762
        %vm912 = vweird.f32 %v906
        %vm913 = vmor %vm911, %vm912
        %v914 = vsel %vm913, %v906, %v910
        %v915 = vand.u32 2147483647, %v762
        %vm916 = vcmp.eq.f32.partialorder %v915, 8.507059e+37
        %v917 = vand.u32 %v762, 2147483648
        %v918 = vor.u32 1.1754944e-38, %v917
        %v919 = vsel %vm916, %v918, %v914
        %v920 = vmul.f32 1.0, %v919
        %v921 = vrcp.pop %v763
        %v922 = vmul.f32 %v763, %v921
        %v923 = vsub.f32 1.0, %v922
        %v924 = vmul.f32 %v921, %v923
        %v925 = vadd.f32 %v921, %v924
        %vm926 = vweird.f32 %v763
        %vm927 = vweird.f32 %v921
        %vm928 = vmor %vm926, %vm927
        %v929 = vsel %vm928, %v921, %v925
        %v930 = vand.u32 2147483647, %v763
        %vm931 = vcmp.eq.f32.partialorder %v930, 8.507059e+37
        %v932 = vand.u32 %v763, 2147483648
        %v933 = vor.u32 1.1754944e-38, %v932
        %v934 = vsel %vm931, %v933, %v929
        %v935 = vmul.f32 1.0, %v934
        %v936 = vrcp.pop %v764
        %v937 = vmul.f32 %v764, %v936
        %v938 = vsub.f32 1.0, %v937
        %v939 = vmul.f32 %v936, %v938
        %v940 = vadd.f32 %v936, %v939
        %vm941 = vweird.f32 %v764
        %vm942 = vweird.f32 %v936
        %vm943 = vmor %vm941, %vm942
        %v944 = vsel %vm943, %v936, %v940
        %v945 = vand.u32 2147483647, %v764
        %vm946 = vcmp.eq.f32.partialorder %v945, 8.507059e+37
        %v947 = vand.u32 %v764, 2147483648
        %v948 = vor.u32 1.1754944e-38, %v947
        %v949 = vsel %vm946, %v948, %v944
        %v950 = vmul.f32 1.0, %v949
        %v951 = vrcp.pop %v765
        %v952 = vmul.f32 %v765, %v951
        %v953 = vsub.f32 1.0, %v952
        %v954 = vmul.f32 %v951, %v953
        %v955 = vadd.f32 %v951, %v954
        %vm956 = vweird.f32 %v765
        %vm957 = vweird.f32 %v951
        %vm958 = vmor %vm956, %vm957
        %v959 = vsel %vm958, %v951, %v955
        %v960 = vand.u32 2147483647, %v765
        %vm961 = vcmp.eq.f32.partialorder %v960, 8.507059e+37
        %v962 = vand.u32 %v765, 2147483648
        %v963 = vor.u32 1.1754944e-38, %v962
        %v964 = vsel %vm961, %v963, %v959
        %v965 = vmul.f32 1.0, %v964
        %v966 = vrcp.pop %v766
        %v967 = vmul.f32 %v766, %v966
        %v968 = vsub.f32 1.0, %v967
        %v969 = vmul.f32 %v966, %v968
        %v970 = vadd.f32 %v966, %v969
        %vm971 = vweird.f32 %v766
        %vm972 = vweird.f32 %v966
        %vm973 = vmor %vm971, %vm972
        %v974 = vsel %vm973, %v966, %v970
        %v975 = vand.u32 2147483647, %v766
        %vm976 = vcmp.eq.f32.partialorder %v975, 8.507059e+37
        %v977 = vand.u32 %v766, 2147483648
        %v978 = vor.u32 1.1754944e-38, %v977
        %v979 = vsel %vm976, %v978, %v974
        %v980 = vmul.f32 1.0, %v979
        %v981 = vrcp.pop %v767
        %v982 = vmul.f32 %v767, %v981
        %v983 = vsub.f32 1.0, %v982
        %v984 = vmul.f32 %v981, %v983
        %v985 = vadd.f32 %v981, %v984
        %vm986 = vweird.f32 %v767
        %vm987 = vweird.f32 %v981
        %vm988 = vmor %vm986, %vm987
        %v989 = vsel %vm988, %v981, %v985
        %v990 = vand.u32 2147483647, %v767
        %vm991 = vcmp.eq.f32.partialorder %v990, 8.507059e+37
        %v992 = vand.u32 %v767, 2147483648
        %v993 = vor.u32 1.1754944e-38, %v992
        %v994 = vsel %vm991, %v993, %v989
        %v995 = vmul.f32 1.0, %v994
        %v996 = vrcp.pop %v768
        %v997 = vmul.f32 %v768, %v996
        %v998 = vsub.f32 1.0, %v997
        %v999 = vmul.f32 %v996, %v998
        %v1000 = vadd.f32 %v996, %v999
        %vm1001 = vweird.f32 %v768
        %vm1002 = vweird.f32 %v996
        %vm1003 = vmor %vm1001, %vm1002
        %v1004 = vsel %vm1003, %v996, %v1000
        %v1005 = vand.u32 2147483647, %v768
        %vm1006 = vcmp.eq.f32.partialorder %v1005, 8.507059e+37
        %v1007 = vand.u32 %v768, 2147483648
        %v1008 = vor.u32 1.1754944e-38, %v1007
        %v1009 = vsel %vm1006, %v1008, %v1004
        %v1010 = vmul.f32 1.0, %v1009
        %v1011 = vrcp.pop %v769
        %v1012 = vmul.f32 %v769, %v1011
        %v1013 = vsub.f32 1.0, %v1012
        %v1014 = vmul.f32 %v1011, %v1013
        %v1015 = vadd.f32 %v1011, %v1014
        %vm1016 = vweird.f32 %v769
        %vm1017 = vweird.f32 %v1011
        %vm1018 = vmor %vm1016, %vm1017
        %v1019 = vsel %vm1018, %v1011, %v1015
        %v1020 = vand.u32 2147483647, %v769
        %vm1021 = vcmp.eq.f32.partialorder %v1020, 8.507059e+37
        %v1022 = vand.u32 %v769, 2147483648
        %v1023 = vor.u32 1.1754944e-38, %v1022
        %v1024 = vsel %vm1021, %v1023, %v1019
        %v1025 = vmul.f32 1.0, %v1024
        %v1026 = vrcp.pop %v770
        %v1027 = vmul.f32 %v770, %v1026
        %v1028 = vsub.f32 1.0, %v1027
        %v1029 = vmul.f32 %v1026, %v1028
        %v1030 = vadd.f32 %v1026, %v1029
        %vm1031 = vweird.f32 %v770
        %vm1032 = vweird.f32 %v1026
        %vm1033 = vmor %vm1031, %vm1032
        %v1034 = vsel %vm1033, %v1026, %v1030
        %v1035 = vand.u32 2147483647, %v770
        %vm1036 = vcmp.eq.f32.partialorder %v1035, 8.507059e+37
        %v1037 = vand.u32 %v770, 2147483648
        %v1038 = vor.u32 1.1754944e-38, %v1037
        %v1039 = vsel %vm1036, %v1038, %v1034
        %v1040 = vmul.f32 1.0, %v1039
        %v1041 = vrcp.pop %v771
        %v1042 = vmul.f32 %v771, %v1041
        %v1043 = vsub.f32 1.0, %v1042
        %v1044 = vmul.f32 %v1041, %v1043
        %v1045 = vadd.f32 %v1041, %v1044
        %vm1046 = vweird.f32 %v771
        %vm1047 = vweird.f32 %v1041
        %vm1048 = vmor %vm1046, %vm1047
        %v1049 = vsel %vm1048, %v1041, %v1045
        %v1050 = vand.u32 2147483647, %v771
        %vm1051 = vcmp.eq.f32.partialorder %v1050, 8.507059e+37
        %v1052 = vand.u32 %v771, 2147483648
        %v1053 = vor.u32 1.1754944e-38, %v1052
        %v1054 = vsel %vm1051, %v1053, %v1049
        %v1055 = vmul.f32 1.0, %v1054
        %v1056 = vrcp.pop %v772
        %v1057 = vmul.f32 %v772, %v1056
        %v1058 = vsub.f32 1.0, %v1057
        %v1059 = vmul.f32 %v1056, %v1058
        %v1060 = vadd.f32 %v1056, %v1059
        %vm1061 = vweird.f32 %v772
        %vm1062 = vweird.f32 %v1056
        %vm1063 = vmor %vm1061, %vm1062
        %v1064 = vsel %vm1063, %v1056, %v1060
        %v1065 = vand.u32 2147483647, %v772
        %vm1066 = vcmp.eq.f32.partialorder %v1065, 8.507059e+37
        %v1067 = vand.u32 %v772, 2147483648
        %v1068 = vor.u32 1.1754944e-38, %v1067
        %v1069 = vsel %vm1066, %v1068, %v1064
        %v1070 = vmul.f32 1.0, %v1069
        %v1071 = vrcp.pop %v773
        %v1072 = vmul.f32 %v773, %v1071
        %v1073 = vsub.f32 1.0, %v1072
        %v1074 = vmul.f32 %v1071, %v1073
        %v1075 = vadd.f32 %v1071, %v1074
        %vm1076 = vweird.f32 %v773
        %vm1077 = vweird.f32 %v1071
        %vm1078 = vmor %vm1076, %vm1077
        %v1079 = vsel %vm1078, %v1071, %v1075
        %v1080 = vand.u32 2147483647, %v773
        %vm1081 = vcmp.eq.f32.partialorder %v1080, 8.507059e+37
        %v1082 = vand.u32 %v773, 2147483648
        %v1083 = vor.u32 1.1754944e-38, %v1082
        %v1084 = vsel %vm1081, %v1083, %v1079
        %v1085 = vmul.f32 1.0, %v1084
        %v1086 = vrcp.pop %v774
        %v1087 = vmul.f32 %v774, %v1086
        %v1088 = vsub.f32 1.0, %v1087
        %v1089 = vmul.f32 %v1086, %v1088
        %v1090 = vadd.f32 %v1086, %v1089
        %vm1091 = vweird.f32 %v774
        %vm1092 = vweird.f32 %v1086
        %vm1093 = vmor %vm1091, %vm1092
        %v1094 = vsel %vm1093, %v1086, %v1090
        %v1095 = vand.u32 2147483647, %v774
        %vm1096 = vcmp.eq.f32.partialorder %v1095, 8.507059e+37
        %v1097 = vand.u32 %v774, 2147483648
        %v1098 = vor.u32 1.1754944e-38, %v1097
        %v1099 = vsel %vm1096, %v1098, %v1094
        %v1100 = vmul.f32 1.0, %v1099
        %v1101 = vrcp.pop %v775
        %v1102 = vmul.f32 %v775, %v1101
        %v1103 = vsub.f32 1.0, %v1102
        %v1104 = vmul.f32 %v1101, %v1103
        %v1105 = vadd.f32 %v1101, %v1104
        %vm1106 = vweird.f32 %v775
        %vm1107 = vweird.f32 %v1101
        %vm1108 = vmor %vm1106, %vm1107
        %v1109 = vsel %vm1108, %v1101, %v1105
        %v1110 = vand.u32 2147483647, %v775
        %vm1111 = vcmp.eq.f32.partialorder %v1110, 8.507059e+37
        %v1112 = vand.u32 %v775, 2147483648
        %v1113 = vor.u32 1.1754944e-38, %v1112
        %v1114 = vsel %vm1111, %v1113, %v1109
        %v1115 = vmul.f32 1.0, %v1114
        %v1116 = vrcp.pop %v776
        %v1117 = vmul.f32 %v776, %v1116
        %v1118 = vsub.f32 1.0, %v1117
        %v1119 = vmul.f32 %v1116, %v1118
        %v1120 = vadd.f32 %v1116, %v1119
        %vm1121 = vweird.f32 %v776
        %vm1122 = vweird.f32 %v1116
        %vm1123 = vmor %vm1121, %vm1122
        %v1124 = vsel %vm1123, %v1116, %v1120
        %v1125 = vand.u32 2147483647, %v776
        %vm1126 = vcmp.eq.f32.partialorder %v1125, 8.507059e+37
        %v1127 = vand.u32 %v776, 2147483648
        %v1128 = vor.u32 1.1754944e-38, %v1127
        %v1129 = vsel %vm1126, %v1128, %v1124
        %v1130 = vmul.f32 1.0, %v1129
        %v1131 = vrcp.pop %v777
        %v1132 = vmul.f32 %v777, %v1131
        %v1133 = vsub.f32 1.0, %v1132
        %v1134 = vmul.f32 %v1131, %v1133
        %v1135 = vadd.f32 %v1131, %v1134
        %vm1136 = vweird.f32 %v777
        %vm1137 = vweird.f32 %v1131
        %vm1138 = vmor %vm1136, %vm1137
        %v1139 = vsel %vm1138, %v1131, %v1135
        %v1140 = vand.u32 2147483647, %v777
        %vm1141 = vcmp.eq.f32.partialorder %v1140, 8.507059e+37
        %v1142 = vand.u32 %v777, 2147483648
        %v1143 = vor.u32 1.1754944e-38, %v1142
        %v1144 = vsel %vm1141, %v1143, %v1139
        %v1145 = vmul.f32 1.0, %v1144
        %v1146 = vrcp.pop %v778
        %v1147 = vmul.f32 %v778, %v1146
        %v1148 = vsub.f32 1.0, %v1147
        %v1149 = vmul.f32 %v1146, %v1148
        %v1150 = vadd.f32 %v1146, %v1149
        %vm1151 = vweird.f32 %v778
        %vm1152 = vweird.f32 %v1146
        %vm1153 = vmor %vm1151, %vm1152
        %v1154 = vsel %vm1153, %v1146, %v1150
        %v1155 = vand.u32 2147483647, %v778
        %vm1156 = vcmp.eq.f32.partialorder %v1155, 8.507059e+37
        %v1157 = vand.u32 %v778, 2147483648
        %v1158 = vor.u32 1.1754944e-38, %v1157
        %v1159 = vsel %vm1156, %v1158, %v1154
        %v1160 = vmul.f32 1.0, %v1159
        %v1161 = vrcp.pop %v779
        %v1162 = vmul.f32 %v779, %v1161
        %v1163 = vsub.f32 1.0, %v1162
        %v1164 = vmul.f32 %v1161, %v1163
        %v1165 = vadd.f32 %v1161, %v1164
        %vm1166 = vweird.f32 %v779
        %vm1167 = vweird.f32 %v1161
        %vm1168 = vmor %vm1166, %vm1167
        %v1169 = vsel %vm1168, %v1161, %v1165
        %v1170 = vand.u32 2147483647, %v779
        %vm1171 = vcmp.eq.f32.partialorder %v1170, 8.507059e+37
        %v1172 = vand.u32 %v779, 2147483648
        %v1173 = vor.u32 1.1754944e-38, %v1172
        %v1174 = vsel %vm1171, %v1173, %v1169
        %v1175 = vmul.f32 1.0, %v1174
        %v1176 = vrcp.pop %v780
        %v1177 = vmul.f32 %v780, %v1176
        %v1178 = vsub.f32 1.0, %v1177
        %v1179 = vmul.f32 %v1176, %v1178
        %v1180 = vadd.f32 %v1176, %v1179
        %vm1181 = vweird.f32 %v780
        %vm1182 = vweird.f32 %v1176
        %vm1183 = vmor %vm1181, %vm1182
        %v1184 = vsel %vm1183, %v1176, %v1180
        %v1185 = vand.u32 2147483647, %v780
        %vm1186 = vcmp.eq.f32.partialorder %v1185, 8.507059e+37
        %v1187 = vand.u32 %v780, 2147483648
        %v1188 = vor.u32 1.1754944e-38, %v1187
        %v1189 = vsel %vm1186, %v1188, %v1184
        %v1190 = vmul.f32 1.0, %v1189
        %v1191 = vrcp.pop %v781
        %v1192 = vmul.f32 %v781, %v1191
        %v1193 = vsub.f32 1.0, %v1192
        %v1194 = vmul.f32 %v1191, %v1193
        %v1195 = vadd.f32 %v1191, %v1194
        %vm1196 = vweird.f32 %v781
        %vm1197 = vweird.f32 %v1191
        %vm1198 = vmor %vm1196, %vm1197
        %v1199 = vsel %vm1198, %v1191, %v1195
        %v1200 = vand.u32 2147483647, %v781
        %vm1201 = vcmp.eq.f32.partialorder %v1200, 8.507059e+37
        %v1202 = vand.u32 %v781, 2147483648
        %v1203 = vor.u32 1.1754944e-38, %v1202
        %v1204 = vsel %vm1201, %v1203, %v1199
        %v1205 = vmul.f32 1.0, %v1204
        %v1206 = vrcp.pop %v782
        %v1207 = vmul.f32 %v782, %v1206
        %v1208 = vsub.f32 1.0, %v1207
        %v1209 = vmul.f32 %v1206, %v1208
        %v1210 = vadd.f32 %v1206, %v1209
        %vm1211 = vweird.f32 %v782
        %vm1212 = vweird.f32 %v1206
        %vm1213 = vmor %vm1211, %vm1212
        %v1214 = vsel %vm1213, %v1206, %v1210
        %v1215 = vand.u32 2147483647, %v782
        %vm1216 = vcmp.eq.f32.partialorder %v1215, 8.507059e+37
        %v1217 = vand.u32 %v782, 2147483648
        %v1218 = vor.u32 1.1754944e-38, %v1217
        %v1219 = vsel %vm1216, %v1218, %v1214
        %v1220 = vmul.f32 1.0, %v1219
        %v1221 = vrcp.pop %v783
        %v1222 = vmul.f32 %v783, %v1221
        %v1223 = vsub.f32 1.0, %v1222
        %v1224 = vmul.f32 %v1221, %v1223
        %v1225 = vadd.f32 %v1221, %v1224
        %vm1226 = vweird.f32 %v783
        %vm1227 = vweird.f32 %v1221
        %vm1228 = vmor %vm1226, %vm1227
        %v1229 = vsel %vm1228, %v1221, %v1225
        %v1230 = vand.u32 2147483647, %v783
        %vm1231 = vcmp.eq.f32.partialorder %v1230, 8.507059e+37
        %v1232 = vand.u32 %v783, 2147483648
        %v1233 = vor.u32 1.1754944e-38, %v1232
        %v1234 = vsel %vm1231, %v1233, %v1229
        %v1235 = vmul.f32 1.0, %v1234
        %v1236 = vrcp.pop %v784
        %v1237 = vmul.f32 %v784, %v1236
        %v1238 = vsub.f32 1.0, %v1237
        %v1239 = vmul.f32 %v1236, %v1238
        %v1240 = vadd.f32 %v1236, %v1239
        %vm1241 = vweird.f32 %v784
        %vm1242 = vweird.f32 %v1236
        %vm1243 = vmor %vm1241, %vm1242
        %v1244 = vsel %vm1243, %v1236, %v1240
        %v1245 = vand.u32 2147483647, %v784
        %vm1246 = vcmp.eq.f32.partialorder %v1245, 8.507059e+37
        %v1247 = vand.u32 %v784, 2147483648
        %v1248 = vor.u32 1.1754944e-38, %v1247
        %v1249 = vsel %vm1246, %v1248, %v1244
        %v1250 = vmul.f32 1.0, %v1249
        %v1251 = vrcp.pop %v785
        %v1252 = vmul.f32 %v785, %v1251
        %v1253 = vsub.f32 1.0, %v1252
        %v1254 = vmul.f32 %v1251, %v1253
        %v1255 = vadd.f32 %v1251, %v1254
        %vm1256 = vweird.f32 %v785
        %vm1257 = vweird.f32 %v1251
        %vm1258 = vmor %vm1256, %vm1257
        %v1259 = vsel %vm1258, %v1251, %v1255
        %v1260 = vand.u32 2147483647, %v785
        %vm1261 = vcmp.eq.f32.partialorder %v1260, 8.507059e+37
        %v1262 = vand.u32 %v785, 2147483648
        %v1263 = vor.u32 1.1754944e-38, %v1262
        %v1264 = vsel %vm1261, %v1263, %v1259
        %v1265 = vmul.f32 1.0, %v1264
        %v1266 = vmul.f32 %v579, %v800
        %v1267 = vmul.f32 %v581, %v815
        %v1268 = vmul.f32 %v584, %v830
        %v1269 = vmul.f32 %v586, %v845
        %v1270 = vmul.f32 %v589, %v860
        %v1271 = vmul.f32 %v591, %v875
        %v1272 = vmul.f32 %v594, %v890
        %v1273 = vmul.f32 %v596, %v905
        %v1274 = vmul.f32 %v599, %v920
        %v1275 = vmul.f32 %v601, %v935
        %v1276 = vmul.f32 %v604, %v950
        %v1277 = vmul.f32 %v606, %v965
        %v1278 = vmul.f32 %v609, %v980
        %v1279 = vmul.f32 %v611, %v995
        %v1280 = vmul.f32 %v614, %v1010
        %v1281 = vmul.f32 %v616, %v1025
        %v1282 = vmul.f32 %v619, %v1040
        %v1283 = vmul.f32 %v621, %v1055
        %v1284 = vmul.f32 %v624, %v1070
        %v1285 = vmul.f32 %v626, %v1085
        %v1286 = vmul.f32 %v629, %v1100
        %v1287 = vmul.f32 %v631, %v1115
        %v1288 = vmul.f32 %v634, %v1130
        %v1289 = vmul.f32 %v636, %v1145
        %v1290 = vmul.f32 %v639, %v1160
        %v1291 = vmul.f32 %v641, %v1175
        %v1292 = vmul.f32 %v644, %v1190
        %v1293 = vmul.f32 %v646, %v1205
        %v1294 = vmul.f32 %v649, %v1220
        %v1295 = vmul.f32 %v651, %v1235
        %v1296 = vmul.f32 %v654, %v1250
        %v1297 = vmul.f32 %v656, %v1265
        %1298 = vst [vmem:[#allocation2] sm:$0xff] 0.0
        %1299 = vst [vmem:[#allocation2 + $0x8] sm:$0xff] 0.0
        %1300 = vst [vmem:[#allocation2 + $0x10] sm:$0x3] 0.0
        %s1301 = scalar_lea.vmem [#allocation2], 408
        %1302 = vst [vmem:[%s1301] sm:$0xff] 0.0
        %1303 = vst [vmem:[%s1301 + $0x8] sm:$0xff] 0.0
        %1304 = vst [vmem:[%s1301 + $0x10] sm:$0x3] 0.0
        %s1305 = scalar_lea.vmem [#allocation2], 24
        %1306 = vst [vmem:[%s1305] sm:$0x1] 0.0
        %1307 = vst [vmem:[%s1305 + $0x18] sm:$0x1] 0.0
        %1308 = vst [vmem:[%s1305 + $0x30] sm:$0x1] 0.0
        %1309 = vst [vmem:[%s1305 + $0x48] sm:$0x1] 0.0
        %1310 = vst [vmem:[%s1305 + $0x60] sm:$0x1] 0.0
        %1311 = vst [vmem:[%s1305 + $0x78] sm:$0x1] 0.0
        %1312 = vst [vmem:[%s1305 + $0x90] sm:$0x1] 0.0
        %1313 = vst [vmem:[%s1305 + $0xa8] sm:$0x1] 0.0
        %1314 = vst [vmem:[%s1305 + $0xc0] sm:$0x1] 0.0
        %1315 = vst [vmem:[%s1305 + $0xd8] sm:$0x1] 0.0
        %1316 = vst [vmem:[%s1305 + $0xf0] sm:$0x1] 0.0
        %1317 = vst [vmem:[%s1305 + $0x108] sm:$0x1] 0.0
        %1318 = vst [vmem:[%s1305 + $0x120] sm:$0x1] 0.0
        %1319 = vst [vmem:[%s1305 + $0x138] sm:$0x1] 0.0
        %1320 = vst [vmem:[%s1305 + $0x150] sm:$0x1] 0.0
        %1321 = vst [vmem:[%s1305 + $0x168] sm:$0x1] 0.0
        %1322 = vst [vmem:[%s1305 + $0x11] sm:$0x1] 0.0
        %1323 = vst [vmem:[%s1305 + $0x29] sm:$0x1] 0.0
        %1324 = vst [vmem:[%s1305 + $0x41] sm:$0x1] 0.0
        %1325 = vst [vmem:[%s1305 + $0x59] sm:$0x1] 0.0
        %1326 = vst [vmem:[%s1305 + $0x71] sm:$0x1] 0.0
        %1327 = vst [vmem:[%s1305 + $0x89] sm:$0x1] 0.0
        %1328 = vst [vmem:[%s1305 + $0xa1] sm:$0x1] 0.0
        %1329 = vst [vmem:[%s1305 + $0xb9] sm:$0x1] 0.0
        %1330 = vst [vmem:[%s1305 + $0xd1] sm:$0x1] 0.0
        %1331 = vst [vmem:[%s1305 + $0xe9] sm:$0x1] 0.0
        %1332 = vst [vmem:[%s1305 + $0x101] sm:$0x1] 0.0
        %1333 = vst [vmem:[%s1305 + $0x119] sm:$0x1] 0.0
        %1334 = vst [vmem:[%s1305 + $0x131] sm:$0x1] 0.0
        %1335 = vst [vmem:[%s1305 + $0x149] sm:$0x1] 0.0
        %1336 = vst [vmem:[%s1305 + $0x161] sm:$0x1] 0.0
        %1337 = vst [vmem:[%s1305 + $0x179] sm:$0x1] 0.0
        %1338 = vst [vmem:[%s1305 + $0x1] sm:$0xff] %v1266
        %1339 = vst [vmem:[%s1305 + $0x9] sm:$0xff] %v1267
        %1340 = vst [vmem:[%s1305 + $0x19] sm:$0xff] %v1268
        %1341 = vst [vmem:[%s1305 + $0x21] sm:$0xff] %v1269
        %1342 = vst [vmem:[%s1305 + $0x31] sm:$0xff] %v1270
        %1343 = vst [vmem:[%s1305 + $0x39] sm:$0xff] %v1271
        %1344 = vst [vmem:[%s1305 + $0x49] sm:$0xff] %v1272
        %1345 = vst [vmem:[%s1305 + $0x51] sm:$0xff] %v1273
        %1346 = vst [vmem:[%s1305 + $0x61] sm:$0xff] %v1274
        %1347 = vst [vmem:[%s1305 + $0x69] sm:$0xff] %v1275
        %1348 = vst [vmem:[%s1305 + $0x79] sm:$0xff] %v1276
        %1349 = vst [vmem:[%s1305 + $0x81] sm:$0xff] %v1277
        %1350 = vst [vmem:[%s1305 + $0x91] sm:$0xff] %v1278
        %1351 = vst [vmem:[%s1305 + $0x99] sm:$0xff] %v1279
        %1352 = vst [vmem:[%s1305 + $0xa9] sm:$0xff] %v1280
        %1353 = vst [vmem:[%s1305 + $0xb1] sm:$0xff] %v1281
        %1354 = vst [vmem:[%s1305 + $0xc1] sm:$0xff] %v1282
        %1355 = vst [vmem:[%s1305 + $0xc9] sm:$0xff] %v1283
        %1356 = vst [vmem:[%s1305 + $0xd9] sm:$0xff] %v1284
        %1357 = vst [vmem:[%s1305 + $0xe1] sm:$0xff] %v1285
        %1358 = vst [vmem:[%s1305 + $0xf1] sm:$0xff] %v1286
        %1359 = vst [vmem:[%s1305 + $0xf9] sm:$0xff] %v1287
        %1360 = vst [vmem:[%s1305 + $0x109] sm:$0xff] %v1288
        %1361 = vst [vmem:[%s1305 + $0x111] sm:$0xff] %v1289
        %1362 = vst [vmem:[%s1305 + $0x121] sm:$0xff] %v1290
        %1363 = vst [vmem:[%s1305 + $0x129] sm:$0xff] %v1291
        %1364 = vst [vmem:[%s1305 + $0x139] sm:$0xff] %v1292
        %1365 = vst [vmem:[%s1305 + $0x141] sm:$0xff] %v1293
        %1366 = vst [vmem:[%s1305 + $0x151] sm:$0xff] %v1294
        %1367 = vst [vmem:[%s1305 + $0x159] sm:$0xff] %v1295
        %1368 = vst [vmem:[%s1305 + $0x169] sm:$0xff] %v1296
        %1369 = vst [vmem:[%s1305 + $0x171] sm:$0xff] %v1297
        %v1370 = vld [vmem:[#allocation8] sm:$0x7]
        %v1371 = vld [vmem:[#allocation8 + $0x4] sm:$0x7]
        %v1372 = vld [vmem:[#allocation8 + $0x8] sm:$0x7]
        %v1373 = vld [vmem:[#allocation2] sm:$0xff]
        %v1374 = vld [vmem:[#allocation2 + $0x8] sm:$0xff]
        %v1375 = vld [vmem:[#allocation2 + $0x18] sm:$0xff]
        %v1376 = vld [vmem:[#allocation2 + $0x20] sm:$0xff]
        %v1377 = vld [vmem:[#allocation2 + $0x30] sm:$0xff]
        %v1378 = vld [vmem:[#allocation2 + $0x38] sm:$0xff]
        %v1379 = vld [vmem:[#allocation2 + $0x48] sm:$0xff]
        %v1380 = vld [vmem:[#allocation2 + $0x50] sm:$0xff]
        %v1381 = vld [vmem:[#allocation2 + $0x60] sm:$0xff]
        %v1382 = vld [vmem:[#allocation2 + $0x68] sm:$0xff]
        %v1383 = vld [vmem:[#allocation2 + $0x78] sm:$0xff]
        %v1384 = vld [vmem:[#allocation2 + $0x80] sm:$0xff]
        %v1385 = vld [vmem:[#allocation2 + $0x90] sm:$0xff]
        %v1386 = vld [vmem:[#allocation2 + $0x98] sm:$0xff]
        %v1387 = vld [vmem:[#allocation2 + $0xa8] sm:$0xff]
        %v1388 = vld [vmem:[#allocation2 + $0xb0] sm:$0xff]
        %v1389 = vld [vmem:[#allocation2 + $0xc0] sm:$0xff]
        %v1390 = vld [vmem:[#allocation2 + $0xc8] sm:$0xff]
        %v1391 = vld [vmem:[#allocation2 + $0xd8] sm:$0xff]
        %v1392 = vld [vmem:[#allocation2 + $0xe0] sm:$0xff]
        %v1393 = vld [vmem:[#allocation2 + $0xf0] sm:$0xff]
        %v1394 = vld [vmem:[#allocation2 + $0xf8] sm:$0xff]
        %v1395 = vld [vmem:[#allocation2 + $0x108] sm:$0xff]
        %v1396 = vld [vmem:[#allocation2 + $0x110] sm:$0xff]
        %v1397 = vld [vmem:[#allocation2 + $0x120] sm:$0xff]
        %v1398 = vld [vmem:[#allocation2 + $0x128] sm:$0xff]
        %v1399 = vld [vmem:[#allocation2 + $0x138] sm:$0xff]
        %v1400 = vld [vmem:[#allocation2 + $0x140] sm:$0xff]
        %v1401 = vld [vmem:[#allocation2 + $0x150] sm:$0xff]
        %v1402 = vld [vmem:[#allocation2 + $0x158] sm:$0xff]
        %v1403 = vld [vmem:[#allocation2 + $0x168] sm:$0xff]
        %v1404 = vld [vmem:[#allocation2 + $0x170] sm:$0xff]
        %v1405 = vperm.slane %v1370, 0
        %v1406 = vmul.f32 %v1373, %v1405
        %v1407 = vmul.f32 %v1374, %v1405
        %v1408 = vmul.f32 %v1375, %v1405
        %v1409 = vmul.f32 %v1376, %v1405
        %v1410 = vmul.f32 %v1377, %v1405
        %v1411 = vmul.f32 %v1378, %v1405
        %v1412 = vmul.f32 %v1379, %v1405
        %v1413 = vmul.f32 %v1380, %v1405
        %v1414 = vmul.f32 %v1381, %v1405
        %v1415 = vmul.f32 %v1382, %v1405
        %v1416 = vmul.f32 %v1383, %v1405
        %v1417 = vmul.f32 %v1384, %v1405
        %v1418 = vmul.f32 %v1385, %v1405
        %v1419 = vmul.f32 %v1386, %v1405
        %v1420 = vmul.f32 %v1387, %v1405
        %v1421 = vmul.f32 %v1388, %v1405
        %v1422 = vmul.f32 %v1389, %v1405
        %v1423 = vmul.f32 %v1390, %v1405
        %v1424 = vmul.f32 %v1391, %v1405
        %v1425 = vmul.f32 %v1392, %v1405
        %v1426 = vmul.f32 %v1393, %v1405
        %v1427 = vmul.f32 %v1394, %v1405
        %v1428 = vmul.f32 %v1395, %v1405
        %v1429 = vmul.f32 %v1396, %v1405
        %v1430 = vmul.f32 %v1397, %v1405
        %v1431 = vmul.f32 %v1398, %v1405
        %v1432 = vmul.f32 %v1399, %v1405
        %v1433 = vmul.f32 %v1400, %v1405
        %v1434 = vmul.f32 %v1401, %v1405
        %v1435 = vmul.f32 %v1402, %v1405
        %v1436 = vmul.f32 %v1403, %v1405
        %v1437 = vmul.f32 %v1404, %v1405
        %v1438 = vld [vmem:[#allocation2 + $0x1] sm:$0xff]
        %v1439 = vld [vmem:[#allocation2 + $0x9] sm:$0xff]
        %v1440 = vld [vmem:[#allocation2 + $0x19] sm:$0xff]
        %v1441 = vld [vmem:[#allocation2 + $0x21] sm:$0xff]
        %v1442 = vld [vmem:[#allocation2 + $0x31] sm:$0xff]
        %v1443 = vld [vmem:[#allocation2 + $0x39] sm:$0xff]
        %v1444 = vld [vmem:[#allocation2 + $0x49] sm:$0xff]
        %v1445 = vld [vmem:[#allocation2 + $0x51] sm:$0xff]
        %v1446 = vld [vmem:[#allocation2 + $0x61] sm:$0xff]
        %v1447 = vld [vmem:[#allocation2 + $0x69] sm:$0xff]
        %v1448 = vld [vmem:[#allocation2 + $0x79] sm:$0xff]
        %v1449 = vld [vmem:[#allocation2 + $0x81] sm:$0xff]
        %v1450 = vld [vmem:[#allocation2 + $0x91] sm:$0xff]
        %v1451 = vld [vmem:[#allocation2 + $0x99] sm:$0xff]
        %v1452 = vld [vmem:[#allocation2 + $0xa9] sm:$0xff]
        %v1453 = vld [vmem:[#allocation2 + $0xb1] sm:$0xff]
        %v1454 = vld [vmem:[#allocation2 + $0xc1] sm:$0xff]
        %v1455 = vld [vmem:[#allocation2 + $0xc9] sm:$0xff]
        %v1456 = vld [vmem:[#allocation2 + $0xd9] sm:$0xff]
        %v1457 = vld [vmem:[#allocation2 + $0xe1] sm:$0xff]
        %v1458 = vld [vmem:[#allocation2 + $0xf1] sm:$0xff]
        %v1459 = vld [vmem:[#allocation2 + $0xf9] sm:$0xff]
        %v1460 = vld [vmem:[#allocation2 + $0x109] sm:$0xff]
        %v1461 = vld [vmem:[#allocation2 + $0x111] sm:$0xff]
        %v1462 = vld [vmem:[#allocation2 + $0x121] sm:$0xff]
        %v1463 = vld [vmem:[#allocation2 + $0x129] sm:$0xff]
        %v1464 = vld [vmem:[#allocation2 + $0x139] sm:$0xff]
        %v1465 = vld [vmem:[#allocation2 + $0x141] sm:$0xff]
        %v1466 = vld [vmem:[#allocation2 + $0x151] sm:$0xff]
        %v1467 = vld [vmem:[#allocation2 + $0x159] sm:$0xff]
        %v1468 = vld [vmem:[#allocation2 + $0x169] sm:$0xff]
        %v1469 = vld [vmem:[#allocation2 + $0x171] sm:$0xff]
        %v1470 = vperm.slane %v1370, 1
        %v1471 = vmul.f32 %v1438, %v1470
        %v1472 = vmul.f32 %v1439, %v1470
        %v1473 = vmul.f32 %v1440, %v1470
        %v1474 = vmul.f32 %v1441, %v1470
        %v1475 = vmul.f32 %v1442, %v1470
        %v1476 = vmul.f32 %v1443, %v1470
        %v1477 = vmul.f32 %v1444, %v1470
        %v1478 = vmul.f32 %v1445, %v1470
        %v1479 = vmul.f32 %v1446, %v1470
        %v1480 = vmul.f32 %v1447, %v1470
        %v1481 = vmul.f32 %v1448, %v1470
        %v1482 = vmul.f32 %v1449, %v1470
        %v1483 = vmul.f32 %v1450, %v1470
        %v1484 = vmul.f32 %v1451, %v1470
        %v1485 = vmul.f32 %v1452, %v1470
        %v1486 = vmul.f32 %v1453, %v1470
        %v1487 = vmul.f32 %v1454, %v1470
        %v1488 = vmul.f32 %v1455, %v1470
        %v1489 = vmul.f32 %v1456, %v1470
        %v1490 = vmul.f32 %v1457, %v1470
        %v1491 = vmul.f32 %v1458, %v1470
        %v1492 = vmul.f32 %v1459, %v1470
        %v1493 = vmul.f32 %v1460, %v1470
        %v1494 = vmul.f32 %v1461, %v1470
        %v1495 = vmul.f32 %v1462, %v1470
        %v1496 = vmul.f32 %v1463, %v1470
        %v1497 = vmul.f32 %v1464, %v1470
        %v1498 = vmul.f32 %v1465, %v1470
        %v1499 = vmul.f32 %v1466, %v1470
        %v1500 = vmul.f32 %v1467, %v1470
        %v1501 = vmul.f32 %v1468, %v1470
        %v1502 = vmul.f32 %v1469, %v1470
        %v1503 = vadd.f32 %v1406, %v1471
        %v1504 = vadd.f32 %v1407, %v1472
        %v1505 = vadd.f32 %v1408, %v1473
        %v1506 = vadd.f32 %v1409, %v1474
        %v1507 = vadd.f32 %v1410, %v1475
        %v1508 = vadd.f32 %v1411, %v1476
        %v1509 = vadd.f32 %v1412, %v1477
        %v1510 = vadd.f32 %v1413, %v1478
        %v1511 = vadd.f32 %v1414, %v1479
        %v1512 = vadd.f32 %v1415, %v1480
        %v1513 = vadd.f32 %v1416, %v1481
        %v1514 = vadd.f32 %v1417, %v1482
        %v1515 = vadd.f32 %v1418, %v1483
        %v1516 = vadd.f32 %v1419, %v1484
        %v1517 = vadd.f32 %v1420, %v1485
        %v1518 = vadd.f32 %v1421, %v1486
        %v1519 = vadd.f32 %v1422, %v1487
        %v1520 = vadd.f32 %v1423, %v1488
        %v1521 = vadd.f32 %v1424, %v1489
        %v1522 = vadd.f32 %v1425, %v1490
        %v1523 = vadd.f32 %v1426, %v1491
        %v1524 = vadd.f32 %v1427, %v1492
        %v1525 = vadd.f32 %v1428, %v1493
        %v1526 = vadd.f32 %v1429, %v1494
        %v1527 = vadd.f32 %v1430, %v1495
        %v1528 = vadd.f32 %v1431, %v1496
        %v1529 = vadd.f32 %v1432, %v1497
        %v1530 = vadd.f32 %v1433, %v1498
        %v1531 = vadd.f32 %v1434, %v1499
        %v1532 = vadd.f32 %v1435, %v1500
        %v1533 = vadd.f32 %v1436, %v1501
        %v1534 = vadd.f32 %v1437, %v1502
        %v1535 = vld [vmem:[#allocation2 + $0x2] sm:$0xff]
        %v1536 = vld [vmem:[#allocation2 + $0xa] sm:$0xff]
        %v1537 = vld [vmem:[#allocation2 + $0x1a] sm:$0xff]
        %v1538 = vld [vmem:[#allocation2 + $0x22] sm:$0xff]
        %v1539 = vld [vmem:[#allocation2 + $0x32] sm:$0xff]
        %v1540 = vld [vmem:[#allocation2 + $0x3a] sm:$0xff]
        %v1541 = vld [vmem:[#allocation2 + $0x4a] sm:$0xff]
        %v1542 = vld [vmem:[#allocation2 + $0x52] sm:$0xff]
        %v1543 = vld [vmem:[#allocation2 + $0x62] sm:$0xff]
        %v1544 = vld [vmem:[#allocation2 + $0x6a] sm:$0xff]
        %v1545 = vld [vmem:[#allocation2 + $0x7a] sm:$0xff]
        %v1546 = vld [vmem:[#allocation2 + $0x82] sm:$0xff]
        %v1547 = vld [vmem:[#allocation2 + $0x92] sm:$0xff]
        %v1548 = vld [vmem:[#allocation2 + $0x9a] sm:$0xff]
        %v1549 = vld [vmem:[#allocation2 + $0xaa] sm:$0xff]
        %v1550 = vld [vmem:[#allocation2 + $0xb2] sm:$0xff]
        %v1551 = vld [vmem:[#allocation2 + $0xc2] sm:$0xff]
        %v1552 = vld [vmem:[#allocation2 + $0xca] sm:$0xff]
        %v1553 = vld [vmem:[#allocation2 + $0xda] sm:$0xff]
        %v1554 = vld [vmem:[#allocation2 + $0xe2] sm:$0xff]
        %v1555 = vld [vmem:[#allocation2 + $0xf2] sm:$0xff]
        %v1556 = vld [vmem:[#allocation2 + $0xfa] sm:$0xff]
        %v1557 = vld [vmem:[#allocation2 + $0x10a] sm:$0xff]
        %v1558 = vld [vmem:[#allocation2 + $0x112] sm:$0xff]
        %v1559 = vld [vmem:[#allocation2 + $0x122] sm:$0xff]
        %v1560 = vld [vmem:[#allocation2 + $0x12a] sm:$0xff]
        %v1561 = vld [vmem:[#allocation2 + $0x13a] sm:$0xff]
        %v1562 = vld [vmem:[#allocation2 + $0x142] sm:$0xff]
        %v1563 = vld [vmem:[#allocation2 + $0x152] sm:$0xff]
        %v1564 = vld [vmem:[#allocation2 + $0x15a] sm:$0xff]
        %v1565 = vld [vmem:[#allocation2 + $0x16a] sm:$0xff]
        %v1566 = vld [vmem:[#allocation2 + $0x172] sm:$0xff]
        %v1567 = vperm.slane %v1370, 2
        %v1568 = vmul.f32 %v1535, %v1567
        %v1569 = vmul.f32 %v1536, %v1567
        %v1570 = vmul.f32 %v1537, %v1567
        %v1571 = vmul.f32 %v1538, %v1567
        %v1572 = vmul.f32 %v1539, %v1567
        %v1573 = vmul.f32 %v1540, %v1567
        %v1574 = vmul.f32 %v1541, %v1567
        %v1575 = vmul.f32 %v1542, %v1567
        %v1576 = vmul.f32 %v1543, %v1567
        %v1577 = vmul.f32 %v1544, %v1567
        %v1578 = vmul.f32 %v1545, %v1567
        %v1579 = vmul.f32 %v1546, %v1567
        %v1580 = vmul.f32 %v1547, %v1567
        %v1581 = vmul.f32 %v1548, %v1567
        %v1582 = vmul.f32 %v1549, %v1567
        %v1583 = vmul.f32 %v1550, %v1567
        %v1584 = vmul.f32 %v1551, %v1567
        %v1585 = vmul.f32 %v1552, %v1567
        %v1586 = vmul.f32 %v1553, %v1567
        %v1587 = vmul.f32 %v1554, %v1567
        %v1588 = vmul.f32 %v1555, %v1567
        %v1589 = vmul.f32 %v1556, %v1567
        %v1590 = vmul.f32 %v1557, %v1567
        %v1591 = vmul.f32 %v1558, %v1567
        %v1592 = vmul.f32 %v1559, %v1567
        %v1593 = vmul.f32 %v1560, %v1567
        %v1594 = vmul.f32 %v1561, %v1567
        %v1595 = vmul.f32 %v1562, %v1567
        %v1596 = vmul.f32 %v1563, %v1567
        %v1597 = vmul.f32 %v1564, %v1567
        %v1598 = vmul.f32 %v1565, %v1567
        %v1599 = vmul.f32 %v1566, %v1567
        %v1600 = vadd.f32 %v1503, %v1568
        %v1601 = vadd.f32 %v1504, %v1569
        %v1602 = vadd.f32 %v1505, %v1570
        %v1603 = vadd.f32 %v1506, %v1571
        %v1604 = vadd.f32 %v1507, %v1572
        %v1605 = vadd.f32 %v1508, %v1573
        %v1606 = vadd.f32 %v1509, %v1574
        %v1607 = vadd.f32 %v1510, %v1575
        %v1608 = vadd.f32 %v1511, %v1576
        %v1609 = vadd.f32 %v1512, %v1577
        %v1610 = vadd.f32 %v1513, %v1578
        %v1611 = vadd.f32 %v1514, %v1579
        %v1612 = vadd.f32 %v1515, %v1580
        %v1613 = vadd.f32 %v1516, %v1581
        %v1614 = vadd.f32 %v1517, %v1582
        %v1615 = vadd.f32 %v1518, %v1583
        %v1616 = vadd.f32 %v1519, %v1584
        %v1617 = vadd.f32 %v1520, %v1585
        %v1618 = vadd.f32 %v1521, %v1586
        %v1619 = vadd.f32 %v1522, %v1587
        %v1620 = vadd.f32 %v1523, %v1588
        %v1621 = vadd.f32 %v1524, %v1589
        %v1622 = vadd.f32 %v1525, %v1590
        %v1623 = vadd.f32 %v1526, %v1591
        %v1624 = vadd.f32 %v1527, %v1592
        %v1625 = vadd.f32 %v1528, %v1593
        %v1626 = vadd.f32 %v1529, %v1594
        %v1627 = vadd.f32 %v1530, %v1595
        %v1628 = vadd.f32 %v1531, %v1596
        %v1629 = vadd.f32 %v1532, %v1597
        %v1630 = vadd.f32 %v1533, %v1598
        %v1631 = vadd.f32 %v1534, %v1599
        %v1632 = vld [vmem:[%s1305] sm:$0xff]
        %v1633 = vld [vmem:[%s1305 + $0x8] sm:$0xff]
        %v1634 = vld [vmem:[%s1305 + $0x18] sm:$0xff]
        %v1635 = vld [vmem:[%s1305 + $0x20] sm:$0xff]
        %v1636 = vld [vmem:[%s1305 + $0x30] sm:$0xff]
        %v1637 = vld [vmem:[%s1305 + $0x38] sm:$0xff]
        %v1638 = vld [vmem:[%s1305 + $0x48] sm:$0xff]
        %v1639 = vld [vmem:[%s1305 + $0x50] sm:$0xff]
        %v1640 = vld [vmem:[%s1305 + $0x60] sm:$0xff]
        %v1641 = vld [vmem:[%s1305 + $0x68] sm:$0xff]
        %v1642 = vld [vmem:[%s1305 + $0x78] sm:$0xff]
        %v1643 = vld [vmem:[%s1305 + $0x80] sm:$0xff]
        %v1644 = vld [vmem:[%s1305 + $0x90] sm:$0xff]
        %v1645 = vld [vmem:[%s1305 + $0x98] sm:$0xff]
        %v1646 = vld [vmem:[%s1305 + $0xa8] sm:$0xff]
        %v1647 = vld [vmem:[%s1305 + $0xb0] sm:$0xff]
        %v1648 = vld [vmem:[%s1305 + $0xc0] sm:$0xff]
        %v1649 = vld [vmem:[%s1305 + $0xc8] sm:$0xff]
        %v1650 = vld [vmem:[%s1305 + $0xd8] sm:$0xff]
        %v1651 = vld [vmem:[%s1305 + $0xe0] sm:$0xff]
        %v1652 = vld [vmem:[%s1305 + $0xf0] sm:$0xff]
        %v1653 = vld [vmem:[%s1305 + $0xf8] sm:$0xff]
        %v1654 = vld [vmem:[%s1305 + $0x108] sm:$0xff]
        %v1655 = vld [vmem:[%s1305 + $0x110] sm:$0xff]
        %v1656 = vld [vmem:[%s1305 + $0x120] sm:$0xff]
        %v1657 = vld [vmem:[%s1305 + $0x128] sm:$0xff]
        %v1658 = vld [vmem:[%s1305 + $0x138] sm:$0xff]
        %v1659 = vld [vmem:[%s1305 + $0x140] sm:$0xff]
        %v1660 = vld [vmem:[%s1305 + $0x150] sm:$0xff]
        %v1661 = vld [vmem:[%s1305 + $0x158] sm:$0xff]
        %v1662 = vld [vmem:[%s1305 + $0x168] sm:$0xff]
        %v1663 = vld [vmem:[%s1305 + $0x170] sm:$0xff]
        %v1664 = vperm.slane %v1371, 0
        %v1665 = vmul.f32 %v1632, %v1664
        %v1666 = vmul.f32 %v1633, %v1664
        %v1667 = vmul.f32 %v1634, %v1664
        %v1668 = vmul.f32 %v1635, %v1664
        %v1669 = vmul.f32 %v1636, %v1664
        %v1670 = vmul.f32 %v1637, %v1664
        %v1671 = vmul.f32 %v1638, %v1664
        %v1672 = vmul.f32 %v1639, %v1664
        %v1673 = vmul.f32 %v1640, %v1664
        %v1674 = vmul.f32 %v1641, %v1664
        %v1675 = vmul.f32 %v1642, %v1664
        %v1676 = vmul.f32 %v1643, %v1664
        %v1677 = vmul.f32 %v1644, %v1664
        %v1678 = vmul.f32 %v1645, %v1664
        %v1679 = vmul.f32 %v1646, %v1664
        %v1680 = vmul.f32 %v1647, %v1664
        %v1681 = vmul.f32 %v1648, %v1664
        %v1682 = vmul.f32 %v1649, %v1664
        %v1683 = vmul.f32 %v1650, %v1664
        %v1684 = vmul.f32 %v1651, %v1664
        %v1685 = vmul.f32 %v1652, %v1664
        %v1686 = vmul.f32 %v1653, %v1664
        %v1687 = vmul.f32 %v1654, %v1664
        %v1688 = vmul.f32 %v1655, %v1664
        %v1689 = vmul.f32 %v1656, %v1664
        %v1690 = vmul.f32 %v1657, %v1664
        %v1691 = vmul.f32 %v1658, %v1664
        %v1692 = vmul.f32 %v1659, %v1664
        %v1693 = vmul.f32 %v1660, %v1664
        %v1694 = vmul.f32 %v1661, %v1664
        %v1695 = vmul.f32 %v1662, %v1664
        %v1696 = vmul.f32 %v1663, %v1664
        %v1697 = vadd.f32 %v1600, %v1665
        %v1698 = vadd.f32 %v1601, %v1666
        %v1699 = vadd.f32 %v1602, %v1667
        %v1700 = vadd.f32 %v1603, %v1668
        %v1701 = vadd.f32 %v1604, %v1669
        %v1702 = vadd.f32 %v1605, %v1670
        %v1703 = vadd.f32 %v1606, %v1671
        %v1704 = vadd.f32 %v1607, %v1672
        %v1705 = vadd.f32 %v1608, %v1673
        %v1706 = vadd.f32 %v1609, %v1674
        %v1707 = vadd.f32 %v1610, %v1675
        %v1708 = vadd.f32 %v1611, %v1676
        %v1709 = vadd.f32 %v1612, %v1677
        %v1710 = vadd.f32 %v1613, %v1678
        %v1711 = vadd.f32 %v1614, %v1679
        %v1712 = vadd.f32 %v1615, %v1680
        %v1713 = vadd.f32 %v1616, %v1681
        %v1714 = vadd.f32 %v1617, %v1682
        %v1715 = vadd.f32 %v1618, %v1683
        %v1716 = vadd.f32 %v1619, %v1684
        %v1717 = vadd.f32 %v1620, %v1685
        %v1718 = vadd.f32 %v1621, %v1686
        %v1719 = vadd.f32 %v1622, %v1687
        %v1720 = vadd.f32 %v1623, %v1688
        %v1721 = vadd.f32 %v1624, %v1689
        %v1722 = vadd.f32 %v1625, %v1690
        %v1723 = vadd.f32 %v1626, %v1691
        %v1724 = vadd.f32 %v1627, %v1692
        %v1725 = vadd.f32 %v1628, %v1693
        %v1726 = vadd.f32 %v1629, %v1694
        %v1727 = vadd.f32 %v1630, %v1695
        %v1728 = vadd.f32 %v1631, %v1696
        %v1729 = vld [vmem:[%s1305 + $0x1] sm:$0xff]
        %v1730 = vld [vmem:[%s1305 + $0x9] sm:$0xff]
        %v1731 = vld [vmem:[%s1305 + $0x19] sm:$0xff]
        %v1732 = vld [vmem:[%s1305 + $0x21] sm:$0xff]
        %v1733 = vld [vmem:[%s1305 + $0x31] sm:$0xff]
        %v1734 = vld [vmem:[%s1305 + $0x39] sm:$0xff]
        %v1735 = vld [vmem:[%s1305 + $0x49] sm:$0xff]
        %v1736 = vld [vmem:[%s1305 + $0x51] sm:$0xff]
        %v1737 = vld [vmem:[%s1305 + $0x61] sm:$0xff]
        %v1738 = vld [vmem:[%s1305 + $0x69] sm:$0xff]
        %v1739 = vld [vmem:[%s1305 + $0x79] sm:$0xff]
        %v1740 = vld [vmem:[%s1305 + $0x81] sm:$0xff]
        %v1741 = vld [vmem:[%s1305 + $0x91] sm:$0xff]
        %v1742 = vld [vmem:[%s1305 + $0x99] sm:$0xff]
        %v1743 = vld [vmem:[%s1305 + $0xa9] sm:$0xff]
        %v1744 = vld [vmem:[%s1305 + $0xb1] sm:$0xff]
        %v1745 = vld [vmem:[%s1305 + $0xc1] sm:$0xff]
        %v1746 = vld [vmem:[%s1305 + $0xc9] sm:$0xff]
        %v1747 = vld [vmem:[%s1305 + $0xd9] sm:$0xff]
        %v1748 = vld [vmem:[%s1305 + $0xe1] sm:$0xff]
        %v1749 = vld [vmem:[%s1305 + $0xf1] sm:$0xff]
        %v1750 = vld [vmem:[%s1305 + $0xf9] sm:$0xff]
        %v1751 = vld [vmem:[%s1305 + $0x109] sm:$0xff]
        %v1752 = vld [vmem:[%s1305 + $0x111] sm:$0xff]
        %v1753 = vld [vmem:[%s1305 + $0x121] sm:$0xff]
        %v1754 = vld [vmem:[%s1305 + $0x129] sm:$0xff]
        %v1755 = vld [vmem:[%s1305 + $0x139] sm:$0xff]
        %v1756 = vld [vmem:[%s1305 + $0x141] sm:$0xff]
        %v1757 = vld [vmem:[%s1305 + $0x151] sm:$0xff]
        %v1758 = vld [vmem:[%s1305 + $0x159] sm:$0xff]
        %v1759 = vld [vmem:[%s1305 + $0x169] sm:$0xff]
        %v1760 = vld [vmem:[%s1305 + $0x171] sm:$0xff]
        %v1761 = vperm.slane %v1371, 1
        %v1762 = vmul.f32 %v1729, %v1761
        %v1763 = vmul.f32 %v1730, %v1761
        %v1764 = vmul.f32 %v1731, %v1761
        %v1765 = vmul.f32 %v1732, %v1761
        %v1766 = vmul.f32 %v1733, %v1761
        %v1767 = vmul.f32 %v1734, %v1761
        %v1768 = vmul.f32 %v1735, %v1761
        %v1769 = vmul.f32 %v1736, %v1761
        %v1770 = vmul.f32 %v1737, %v1761
        %v1771 = vmul.f32 %v1738, %v1761
        %v1772 = vmul.f32 %v1739, %v1761
        %v1773 = vmul.f32 %v1740, %v1761
        %v1774 = vmul.f32 %v1741, %v1761
        %v1775 = vmul.f32 %v1742, %v1761
        %v1776 = vmul.f32 %v1743, %v1761
        %v1777 = vmul.f32 %v1744, %v1761
        %v1778 = vmul.f32 %v1745, %v1761
        %v1779 = vmul.f32 %v1746, %v1761
        %v1780 = vmul.f32 %v1747, %v1761
        %v1781 = vmul.f32 %v1748, %v1761
        %v1782 = vmul.f32 %v1749, %v1761
        %v1783 = vmul.f32 %v1750, %v1761
        %v1784 = vmul.f32 %v1751, %v1761
        %v1785 = vmul.f32 %v1752, %v1761
        %v1786 = vmul.f32 %v1753, %v1761
        %v1787 = vmul.f32 %v1754, %v1761
        %v1788 = vmul.f32 %v1755, %v1761
        %v1789 = vmul.f32 %v1756, %v1761
        %v1790 = vmul.f32 %v1757, %v1761
        %v1791 = vmul.f32 %v1758, %v1761
        %v1792 = vmul.f32 %v1759, %v1761
        %v1793 = vmul.f32 %v1760, %v1761
        %v1794 = vadd.f32 %v1697, %v1762
        %v1795 = vadd.f32 %v1698, %v1763
        %v1796 = vadd.f32 %v1699, %v1764
        %v1797 = vadd.f32 %v1700, %v1765
        %v1798 = vadd.f32 %v1701, %v1766
        %v1799 = vadd.f32 %v1702, %v1767
        %v1800 = vadd.f32 %v1703, %v1768
        %v1801 = vadd.f32 %v1704, %v1769
        %v1802 = vadd.f32 %v1705, %v1770
        %v1803 = vadd.f32 %v1706, %v1771
        %v1804 = vadd.f32 %v1707, %v1772
        %v1805 = vadd.f32 %v1708, %v1773
        %v1806 = vadd.f32 %v1709, %v1774
        %v1807 = vadd.f32 %v1710, %v1775
        %v1808 = vadd.f32 %v1711, %v1776
        %v1809 = vadd.f32 %v1712, %v1777
        %v1810 = vadd.f32 %v1713, %v1778
        %v1811 = vadd.f32 %v1714, %v1779
        %v1812 = vadd.f32 %v1715, %v1780
        %v1813 = vadd.f32 %v1716, %v1781
        %v1814 = vadd.f32 %v1717, %v1782
        %v1815 = vadd.f32 %v1718, %v1783
        %v1816 = vadd.f32 %v1719, %v1784
        %v1817 = vadd.f32 %v1720, %v1785
        %v1818 = vadd.f32 %v1721, %v1786
        %v1819 = vadd.f32 %v1722, %v1787
        %v1820 = vadd.f32 %v1723, %v1788
        %v1821 = vadd.f32 %v1724, %v1789
        %v1822 = vadd.f32 %v1725, %v1790
        %v1823 = vadd.f32 %v1726, %v1791
        %v1824 = vadd.f32 %v1727, %v1792
        %v1825 = vadd.f32 %v1728, %v1793
        %v1826 = vld [vmem:[%s1305 + $0x2] sm:$0xff]
        %v1827 = vld [vmem:[%s1305 + $0xa] sm:$0xff]
        %v1828 = vld [vmem:[%s1305 + $0x1a] sm:$0xff]
        %v1829 = vld [vmem:[%s1305 + $0x22] sm:$0xff]
        %v1830 = vld [vmem:[%s1305 + $0x32] sm:$0xff]
        %v1831 = vld [vmem:[%s1305 + $0x3a] sm:$0xff]
        %v1832 = vld [vmem:[%s1305 + $0x4a] sm:$0xff]
        %v1833 = vld [vmem:[%s1305 + $0x52] sm:$0xff]
        %v1834 = vld [vmem:[%s1305 + $0x62] sm:$0xff]
        %v1835 = vld [vmem:[%s1305 + $0x6a] sm:$0xff]
        %v1836 = vld [vmem:[%s1305 + $0x7a] sm:$0xff]
        %v1837 = vld [vmem:[%s1305 + $0x82] sm:$0xff]
        %v1838 = vld [vmem:[%s1305 + $0x92] sm:$0xff]
        %v1839 = vld [vmem:[%s1305 + $0x9a] sm:$0xff]
        %v1840 = vld [vmem:[%s1305 + $0xaa] sm:$0xff]
        %v1841 = vld [vmem:[%s1305 + $0xb2] sm:$0xff]
        %v1842 = vld [vmem:[%s1305 + $0xc2] sm:$0xff]
        %v1843 = vld [vmem:[%s1305 + $0xca] sm:$0xff]
        %v1844 = vld [vmem:[%s1305 + $0xda] sm:$0xff]
        %v1845 = vld [vmem:[%s1305 + $0xe2] sm:$0xff]
        %v1846 = vld [vmem:[%s1305 + $0xf2] sm:$0xff]
        %v1847 = vld [vmem:[%s1305 + $0xfa] sm:$0xff]
        %v1848 = vld [vmem:[%s1305 + $0x10a] sm:$0xff]
        %v1849 = vld [vmem:[%s1305 + $0x112] sm:$0xff]
        %v1850 = vld [vmem:[%s1305 + $0x122] sm:$0xff]
        %v1851 = vld [vmem:[%s1305 + $0x12a] sm:$0xff]
        %v1852 = vld [vmem:[%s1305 + $0x13a] sm:$0xff]
        %v1853 = vld [vmem:[%s1305 + $0x142] sm:$0xff]
        %v1854 = vld [vmem:[%s1305 + $0x152] sm:$0xff]
        %v1855 = vld [vmem:[%s1305 + $0x15a] sm:$0xff]
        %v1856 = vld [vmem:[%s1305 + $0x16a] sm:$0xff]
        %v1857 = vld [vmem:[%s1305 + $0x172] sm:$0xff]
        %v1858 = vperm.slane %v1371, 2
        %v1859 = vmul.f32 %v1826, %v1858
        %v1860 = vmul.f32 %v1827, %v1858
        %v1861 = vmul.f32 %v1828, %v1858
        %v1862 = vmul.f32 %v1829, %v1858
        %v1863 = vmul.f32 %v1830, %v1858
        %v1864 = vmul.f32 %v1831, %v1858
        %v1865 = vmul.f32 %v1832, %v1858
        %v1866 = vmul.f32 %v1833, %v1858
        %v1867 = vmul.f32 %v1834, %v1858
        %v1868 = vmul.f32 %v1835, %v1858
        %v1869 = vmul.f32 %v1836, %v1858
        %v1870 = vmul.f32 %v1837, %v1858
        %v1871 = vmul.f32 %v1838, %v1858
        %v1872 = vmul.f32 %v1839, %v1858
        %v1873 = vmul.f32 %v1840, %v1858
        %v1874 = vmul.f32 %v1841, %v1858
        %v1875 = vmul.f32 %v1842, %v1858
        %v1876 = vmul.f32 %v1843, %v1858
        %v1877 = vmul.f32 %v1844, %v1858
        %v1878 = vmul.f32 %v1845, %v1858
        %v1879 = vmul.f32 %v1846, %v1858
        %v1880 = vmul.f32 %v1847, %v1858
        %v1881 = vmul.f32 %v1848, %v1858
        %v1882 = vmul.f32 %v1849, %v1858
        %v1883 = vmul.f32 %v1850, %v1858
        %v1884 = vmul.f32 %v1851, %v1858
        %v1885 = vmul.f32 %v1852, %v1858
        %v1886 = vmul.f32 %v1853, %v1858
        %v1887 = vmul.f32 %v1854, %v1858
        %v1888 = vmul.f32 %v1855, %v1858
        %v1889 = vmul.f32 %v1856, %v1858
        %v1890 = vmul.f32 %v1857, %v1858
        %v1891 = vadd.f32 %v1794, %v1859
        %v1892 = vadd.f32 %v1795, %v1860
        %v1893 = vadd.f32 %v1796, %v1861
        %v1894 = vadd.f32 %v1797, %v1862
        %v1895 = vadd.f32 %v1798, %v1863
        %v1896 = vadd.f32 %v1799, %v1864
        %v1897 = vadd.f32 %v1800, %v1865
        %v1898 = vadd.f32 %v1801, %v1866
        %v1899 = vadd.f32 %v1802, %v1867
        %v1900 = vadd.f32 %v1803, %v1868
        %v1901 = vadd.f32 %v1804, %v1869
        %v1902 = vadd.f32 %v1805, %v1870
        %v1903 = vadd.f32 %v1806, %v1871
        %v1904 = vadd.f32 %v1807, %v1872
        %v1905 = vadd.f32 %v1808, %v1873
        %v1906 = vadd.f32 %v1809, %v1874
        %v1907 = vadd.f32 %v1810, %v1875
        %v1908 = vadd.f32 %v1811, %v1876
        %v1909 = vadd.f32 %v1812, %v1877
        %v1910 = vadd.f32 %v1813, %v1878
        %v1911 = vadd.f32 %v1814, %v1879
        %v1912 = vadd.f32 %v1815, %v1880
        %v1913 = vadd.f32 %v1816, %v1881
        %v1914 = vadd.f32 %v1817, %v1882
        %v1915 = vadd.f32 %v1818, %v1883
        %v1916 = vadd.f32 %v1819, %v1884
        %v1917 = vadd.f32 %v1820, %v1885
        %v1918 = vadd.f32 %v1821, %v1886
        %v1919 = vadd.f32 %v1822, %v1887
        %v1920 = vadd.f32 %v1823, %v1888
        %v1921 = vadd.f32 %v1824, %v1889
        %v1922 = vadd.f32 %v1825, %v1890
        %s1923 = scalar_lea.vmem [#allocation2], 48
        %v1924 = vld [vmem:[%s1923] sm:$0xff]
        %v1925 = vld [vmem:[%s1923 + $0x8] sm:$0xff]
        %v1926 = vld [vmem:[%s1923 + $0x18] sm:$0xff]
        %v1927 = vld [vmem:[%s1923 + $0x20] sm:$0xff]
        %v1928 = vld [vmem:[%s1923 + $0x30] sm:$0xff]
        %v1929 = vld [vmem:[%s1923 + $0x38] sm:$0xff]
        %v1930 = vld [vmem:[%s1923 + $0x48] sm:$0xff]
        %v1931 = vld [vmem:[%s1923 + $0x50] sm:$0xff]
        %v1932 = vld [vmem:[%s1923 + $0x60] sm:$0xff]
        %v1933 = vld [vmem:[%s1923 + $0x68] sm:$0xff]
        %v1934 = vld [vmem:[%s1923 + $0x78] sm:$0xff]
        %v1935 = vld [vmem:[%s1923 + $0x80] sm:$0xff]
        %v1936 = vld [vmem:[%s1923 + $0x90] sm:$0xff]
        %v1937 = vld [vmem:[%s1923 + $0x98] sm:$0xff]
        %v1938 = vld [vmem:[%s1923 + $0xa8] sm:$0xff]
        %v1939 = vld [vmem:[%s1923 + $0xb0] sm:$0xff]
        %v1940 = vld [vmem:[%s1923 + $0xc0] sm:$0xff]
        %v1941 = vld [vmem:[%s1923 + $0xc8] sm:$0xff]
        %v1942 = vld [vmem:[%s1923 + $0xd8] sm:$0xff]
        %v1943 = vld [vmem:[%s1923 + $0xe0] sm:$0xff]
        %v1944 = vld [vmem:[%s1923 + $0xf0] sm:$0xff]
        %v1945 = vld [vmem:[%s1923 + $0xf8] sm:$0xff]
        %v1946 = vld [vmem:[%s1923 + $0x108] sm:$0xff]
        %v1947 = vld [vmem:[%s1923 + $0x110] sm:$0xff]
        %v1948 = vld [vmem:[%s1923 + $0x120] sm:$0xff]
        %v1949 = vld [vmem:[%s1923 + $0x128] sm:$0xff]
        %v1950 = vld [vmem:[%s1923 + $0x138] sm:$0xff]
        %v1951 = vld [vmem:[%s1923 + $0x140] sm:$0xff]
        %v1952 = vld [vmem:[%s1923 + $0x150] sm:$0xff]
        %v1953 = vld [vmem:[%s1923 + $0x158] sm:$0xff]
        %v1954 = vld [vmem:[%s1923 + $0x168] sm:$0xff]
        %v1955 = vld [vmem:[%s1923 + $0x170] sm:$0xff]
        %v1956 = vperm.slane %v1372, 0
        %v1957 = vmul.f32 %v1924, %v1956
        %v1958 = vmul.f32 %v1925, %v1956
        %v1959 = vmul.f32 %v1926, %v1956
        %v1960 = vmul.f32 %v1927, %v1956
        %v1961 = vmul.f32 %v1928, %v1956
        %v1962 = vmul.f32 %v1929, %v1956
        %v1963 = vmul.f32 %v1930, %v1956
        %v1964 = vmul.f32 %v1931, %v1956
        %v1965 = vmul.f32 %v1932, %v1956
        %v1966 = vmul.f32 %v1933, %v1956
        %v1967 = vmul.f32 %v1934, %v1956
        %v1968 = vmul.f32 %v1935, %v1956
        %v1969 = vmul.f32 %v1936, %v1956
        %v1970 = vmul.f32 %v1937, %v1956
        %v1971 = vmul.f32 %v1938, %v1956
        %v1972 = vmul.f32 %v1939, %v1956
        %v1973 = vmul.f32 %v1940, %v1956
        %v1974 = vmul.f32 %v1941, %v1956
        %v1975 = vmul.f32 %v1942, %v1956
        %v1976 = vmul.f32 %v1943, %v1956
        %v1977 = vmul.f32 %v1944, %v1956
        %v1978 = vmul.f32 %v1945, %v1956
        %v1979 = vmul.f32 %v1946, %v1956
        %v1980 = vmul.f32 %v1947, %v1956
        %v1981 = vmul.f32 %v1948, %v1956
        %v1982 = vmul.f32 %v1949, %v1956
        %v1983 = vmul.f32 %v1950, %v1956
        %v1984 = vmul.f32 %v1951, %v1956
        %v1985 = vmul.f32 %v1952, %v1956
        %v1986 = vmul.f32 %v1953, %v1956
        %v1987 = vmul.f32 %v1954, %v1956
        %v1988 = vmul.f32 %v1955, %v1956
        %v1989 = vadd.f32 %v1891, %v1957
        %v1990 = vadd.f32 %v1892, %v1958
        %v1991 = vadd.f32 %v1893, %v1959
        %v1992 = vadd.f32 %v1894, %v1960
        %v1993 = vadd.f32 %v1895, %v1961
        %v1994 = vadd.f32 %v1896, %v1962
        %v1995 = vadd.f32 %v1897, %v1963
        %v1996 = vadd.f32 %v1898, %v1964
        %v1997 = vadd.f32 %v1899, %v1965
        %v1998 = vadd.f32 %v1900, %v1966
        %v1999 = vadd.f32 %v1901, %v1967
        %v2000 = vadd.f32 %v1902, %v1968
        %v2001 = vadd.f32 %v1903, %v1969
        %v2002 = vadd.f32 %v1904, %v1970
        %v2003 = vadd.f32 %v1905, %v1971
        %v2004 = vadd.f32 %v1906, %v1972
        %v2005 = vadd.f32 %v1907, %v1973
        %v2006 = vadd.f32 %v1908, %v1974
        %v2007 = vadd.f32 %v1909, %v1975
        %v2008 = vadd.f32 %v1910, %v1976
        %v2009 = vadd.f32 %v1911, %v1977
        %v2010 = vadd.f32 %v1912, %v1978
        %v2011 = vadd.f32 %v1913, %v1979
        %v2012 = vadd.f32 %v1914, %v1980
        %v2013 = vadd.f32 %v1915, %v1981
        %v2014 = vadd.f32 %v1916, %v1982
        %v2015 = vadd.f32 %v1917, %v1983
        %v2016 = vadd.f32 %v1918, %v1984
        %v2017 = vadd.f32 %v1919, %v1985
        %v2018 = vadd.f32 %v1920, %v1986
        %v2019 = vadd.f32 %v1921, %v1987
        %v2020 = vadd.f32 %v1922, %v1988
        %v2021 = vld [vmem:[%s1923 + $0x1] sm:$0xff]
        %v2022 = vld [vmem:[%s1923 + $0x9] sm:$0xff]
        %v2023 = vld [vmem:[%s1923 + $0x19] sm:$0xff]
        %v2024 = vld [vmem:[%s1923 + $0x21] sm:$0xff]
        %v2025 = vld [vmem:[%s1923 + $0x31] sm:$0xff]
        %v2026 = vld [vmem:[%s1923 + $0x39] sm:$0xff]
        %v2027 = vld [vmem:[%s1923 + $0x49] sm:$0xff]
        %v2028 = vld [vmem:[%s1923 + $0x51] sm:$0xff]
        %v2029 = vld [vmem:[%s1923 + $0x61] sm:$0xff]
        %v2030 = vld [vmem:[%s1923 + $0x69] sm:$0xff]
        %v2031 = vld [vmem:[%s1923 + $0x79] sm:$0xff]
        %v2032 = vld [vmem:[%s1923 + $0x81] sm:$0xff]
        %v2033 = vld [vmem:[%s1923 + $0x91] sm:$0xff]
        %v2034 = vld [vmem:[%s1923 + $0x99] sm:$0xff]
        %v2035 = vld [vmem:[%s1923 + $0xa9] sm:$0xff]
        %v2036 = vld [vmem:[%s1923 + $0xb1] sm:$0xff]
        %v2037 = vld [vmem:[%s1923 + $0xc1] sm:$0xff]
        %v2038 = vld [vmem:[%s1923 + $0xc9] sm:$0xff]
        %v2039 = vld [vmem:[%s1923 + $0xd9] sm:$0xff]
        %v2040 = vld [vmem:[%s1923 + $0xe1] sm:$0xff]
        %v2041 = vld [vmem:[%s1923 + $0xf1] sm:$0xff]
        %v2042 = vld [vmem:[%s1923 + $0xf9] sm:$0xff]
        %v2043 = vld [vmem:[%s1923 + $0x109] sm:$0xff]
        %v2044 = vld [vmem:[%s1923 + $0x111] sm:$0xff]
        %v2045 = vld [vmem:[%s1923 + $0x121] sm:$0xff]
        %v2046 = vld [vmem:[%s1923 + $0x129] sm:$0xff]
        %v2047 = vld [vmem:[%s1923 + $0x139] sm:$0xff]
        %v2048 = vld [vmem:[%s1923 + $0x141] sm:$0xff]
        %v2049 = vld [vmem:[%s1923 + $0x151] sm:$0xff]
        %v2050 = vld [vmem:[%s1923 + $0x159] sm:$0xff]
        %v2051 = vld [vmem:[%s1923 + $0x169] sm:$0xff]
        %v2052 = vld [vmem:[%s1923 + $0x171] sm:$0xff]
        %v2053 = vperm.slane %v1372, 1
        %v2054 = vmul.f32 %v2021, %v2053
        %v2055 = vmul.f32 %v2022, %v2053
        %v2056 = vmul.f32 %v2023, %v2053
        %v2057 = vmul.f32 %v2024, %v2053
        %v2058 = vmul.f32 %v2025, %v2053
        %v2059 = vmul.f32 %v2026, %v2053
        %v2060 = vmul.f32 %v2027, %v2053
        %v2061 = vmul.f32 %v2028, %v2053
        %v2062 = vmul.f32 %v2029, %v2053
        %v2063 = vmul.f32 %v2030, %v2053
        %v2064 = vmul.f32 %v2031, %v2053
        %v2065 = vmul.f32 %v2032, %v2053
        %v2066 = vmul.f32 %v2033, %v2053
        %v2067 = vmul.f32 %v2034, %v2053
        %v2068 = vmul.f32 %v2035, %v2053
        %v2069 = vmul.f32 %v2036, %v2053
        %v2070 = vmul.f32 %v2037, %v2053
        %v2071 = vmul.f32 %v2038, %v2053
        %v2072 = vmul.f32 %v2039, %v2053
        %v2073 = vmul.f32 %v2040, %v2053
        %v2074 = vmul.f32 %v2041, %v2053
        %v2075 = vmul.f32 %v2042, %v2053
        %v2076 = vmul.f32 %v2043, %v2053
        %v2077 = vmul.f32 %v2044, %v2053
        %v2078 = vmul.f32 %v2045, %v2053
        %v2079 = vmul.f32 %v2046, %v2053
        %v2080 = vmul.f32 %v2047, %v2053
        %v2081 = vmul.f32 %v2048, %v2053
        %v2082 = vmul.f32 %v2049, %v2053
        %v2083 = vmul.f32 %v2050, %v2053
        %v2084 = vmul.f32 %v2051, %v2053
        %v2085 = vmul.f32 %v2052, %v2053
        %v2086 = vadd.f32 %v1989, %v2054
        %v2087 = vadd.f32 %v1990, %v2055
        %v2088 = vadd.f32 %v1991, %v2056
        %v2089 = vadd.f32 %v1992, %v2057
        %v2090 = vadd.f32 %v1993, %v2058
        %v2091 = vadd.f32 %v1994, %v2059
        %v2092 = vadd.f32 %v1995, %v2060
        %v2093 = vadd.f32 %v1996, %v2061
        %v2094 = vadd.f32 %v1997, %v2062
        %v2095 = vadd.f32 %v1998, %v2063
        %v2096 = vadd.f32 %v1999, %v2064
        %v2097 = vadd.f32 %v2000, %v2065
        %v2098 = vadd.f32 %v2001, %v2066
        %v2099 = vadd.f32 %v2002, %v2067
        %v2100 = vadd.f32 %v2003, %v2068
        %v2101 = vadd.f32 %v2004, %v2069
        %v2102 = vadd.f32 %v2005, %v2070
        %v2103 = vadd.f32 %v2006, %v2071
        %v2104 = vadd.f32 %v2007, %v2072
        %v2105 = vadd.f32 %v2008, %v2073
        %v2106 = vadd.f32 %v2009, %v2074
        %v2107 = vadd.f32 %v2010, %v2075
        %v2108 = vadd.f32 %v2011, %v2076
        %v2109 = vadd.f32 %v2012, %v2077
        %v2110 = vadd.f32 %v2013, %v2078
        %v2111 = vadd.f32 %v2014, %v2079
        %v2112 = vadd.f32 %v2015, %v2080
        %v2113 = vadd.f32 %v2016, %v2081
        %v2114 = vadd.f32 %v2017, %v2082
        %v2115 = vadd.f32 %v2018, %v2083
        %v2116 = vadd.f32 %v2019, %v2084
        %v2117 = vadd.f32 %v2020, %v2085
        %v2118 = vld [vmem:[%s1923 + $0x2] sm:$0xff]
        %v2119 = vld [vmem:[%s1923 + $0xa] sm:$0xff]
        %v2120 = vld [vmem:[%s1923 + $0x1a] sm:$0xff]
        %v2121 = vld [vmem:[%s1923 + $0x22] sm:$0xff]
        %v2122 = vld [vmem:[%s1923 + $0x32] sm:$0xff]
        %v2123 = vld [vmem:[%s1923 + $0x3a] sm:$0xff]
        %v2124 = vld [vmem:[%s1923 + $0x4a] sm:$0xff]
        %v2125 = vld [vmem:[%s1923 + $0x52] sm:$0xff]
        %v2126 = vld [vmem:[%s1923 + $0x62] sm:$0xff]
        %v2127 = vld [vmem:[%s1923 + $0x6a] sm:$0xff]
        %v2128 = vld [vmem:[%s1923 + $0x7a] sm:$0xff]
        %v2129 = vld [vmem:[%s1923 + $0x82] sm:$0xff]
        %v2130 = vld [vmem:[%s1923 + $0x92] sm:$0xff]
        %v2131 = vld [vmem:[%s1923 + $0x9a] sm:$0xff]
        %v2132 = vld [vmem:[%s1923 + $0xaa] sm:$0xff]
        %v2133 = vld [vmem:[%s1923 + $0xb2] sm:$0xff]
        %v2134 = vld [vmem:[%s1923 + $0xc2] sm:$0xff]
        %v2135 = vld [vmem:[%s1923 + $0xca] sm:$0xff]
        %v2136 = vld [vmem:[%s1923 + $0xda] sm:$0xff]
        %v2137 = vld [vmem:[%s1923 + $0xe2] sm:$0xff]
        %v2138 = vld [vmem:[%s1923 + $0xf2] sm:$0xff]
        %v2139 = vld [vmem:[%s1923 + $0xfa] sm:$0xff]
        %v2140 = vld [vmem:[%s1923 + $0x10a] sm:$0xff]
        %v2141 = vld [vmem:[%s1923 + $0x112] sm:$0xff]
        %v2142 = vld [vmem:[%s1923 + $0x122] sm:$0xff]
        %v2143 = vld [vmem:[%s1923 + $0x12a] sm:$0xff]
        %v2144 = vld [vmem:[%s1923 + $0x13a] sm:$0xff]
        %v2145 = vld [vmem:[%s1923 + $0x142] sm:$0xff]
        %v2146 = vld [vmem:[%s1923 + $0x152] sm:$0xff]
        %v2147 = vld [vmem:[%s1923 + $0x15a] sm:$0xff]
        %v2148 = vld [vmem:[%s1923 + $0x16a] sm:$0xff]
        %v2149 = vld [vmem:[%s1923 + $0x172] sm:$0xff]
        %v2150 = vperm.slane %v1372, 2
        %v2151 = vmul.f32 %v2118, %v2150
        %v2152 = vmul.f32 %v2119, %v2150
        %v2153 = vmul.f32 %v2120, %v2150
        %v2154 = vmul.f32 %v2121, %v2150
        %v2155 = vmul.f32 %v2122, %v2150
        %v2156 = vmul.f32 %v2123, %v2150
        %v2157 = vmul.f32 %v2124, %v2150
        %v2158 = vmul.f32 %v2125, %v2150
        %v2159 = vmul.f32 %v2126, %v2150
        %v2160 = vmul.f32 %v2127, %v2150
        %v2161 = vmul.f32 %v2128, %v2150
        %v2162 = vmul.f32 %v2129, %v2150
        %v2163 = vmul.f32 %v2130, %v2150
        %v2164 = vmul.f32 %v2131, %v2150
        %v2165 = vmul.f32 %v2132, %v2150
        %v2166 = vmul.f32 %v2133, %v2150
        %v2167 = vmul.f32 %v2134, %v2150
        %v2168 = vmul.f32 %v2135, %v2150
        %v2169 = vmul.f32 %v2136, %v2150
        %v2170 = vmul.f32 %v2137, %v2150
        %v2171 = vmul.f32 %v2138, %v2150
        %v2172 = vmul.f32 %v2139, %v2150
        %v2173 = vmul.f32 %v2140, %v2150
        %v2174 = vmul.f32 %v2141, %v2150
        %v2175 = vmul.f32 %v2142, %v2150
        %v2176 = vmul.f32 %v2143, %v2150
        %v2177 = vmul.f32 %v2144, %v2150
        %v2178 = vmul.f32 %v2145, %v2150
        %v2179 = vmul.f32 %v2146, %v2150
        %v2180 = vmul.f32 %v2147, %v2150
        %v2181 = vmul.f32 %v2148, %v2150
        %v2182 = vmul.f32 %v2149, %v2150
        %v2183 = vadd.f32 %v2086, %v2151
        %v2184 = vadd.f32 %v2087, %v2152
        %v2185 = vadd.f32 %v2088, %v2153
        %v2186 = vadd.f32 %v2089, %v2154
        %v2187 = vadd.f32 %v2090, %v2155
        %v2188 = vadd.f32 %v2091, %v2156
        %v2189 = vadd.f32 %v2092, %v2157
        %v2190 = vadd.f32 %v2093, %v2158
        %v2191 = vadd.f32 %v2094, %v2159
        %v2192 = vadd.f32 %v2095, %v2160
        %v2193 = vadd.f32 %v2096, %v2161
        %v2194 = vadd.f32 %v2097, %v2162
        %v2195 = vadd.f32 %v2098, %v2163
        %v2196 = vadd.f32 %v2099, %v2164
        %v2197 = vadd.f32 %v2100, %v2165
        %v2198 = vadd.f32 %v2101, %v2166
        %v2199 = vadd.f32 %v2102, %v2167
        %v2200 = vadd.f32 %v2103, %v2168
        %v2201 = vadd.f32 %v2104, %v2169
        %v2202 = vadd.f32 %v2105, %v2170
        %v2203 = vadd.f32 %v2106, %v2171
        %v2204 = vadd.f32 %v2107, %v2172
        %v2205 = vadd.f32 %v2108, %v2173
        %v2206 = vadd.f32 %v2109, %v2174
        %v2207 = vadd.f32 %v2110, %v2175
        %v2208 = vadd.f32 %v2111, %v2176
        %v2209 = vadd.f32 %v2112, %v2177
        %v2210 = vadd.f32 %v2113, %v2178
        %v2211 = vadd.f32 %v2114, %v2179
        %v2212 = vadd.f32 %v2115, %v2180
        %v2213 = vadd.f32 %v2116, %v2181
        %v2214 = vadd.f32 %v2117, %v2182
        %v2215 = vld [vmem:[%s372] sm:$0x1]
        %v2217 = vperm.slane %v2215, 0
        %v2219 = vadd.f32 %v2183, %v2217
        %v2220 = vadd.f32 %v2184, %v2217
        %v2221 = vadd.f32 %v2185, %v2217
        %v2222 = vadd.f32 %v2186, %v2217
        %v2223 = vadd.f32 %v2187, %v2217
        %v2224 = vadd.f32 %v2188, %v2217
        %v2225 = vadd.f32 %v2189, %v2217
        %v2226 = vadd.f32 %v2190, %v2217
        %v2227 = vadd.f32 %v2191, %v2217
        %v2228 = vadd.f32 %v2192, %v2217
        %v2229 = vadd.f32 %v2193, %v2217
        %v2230 = vadd.f32 %v2194, %v2217
        %v2231 = vadd.f32 %v2195, %v2217
        %v2232 = vadd.f32 %v2196, %v2217
        %v2233 = vadd.f32 %v2197, %v2217
        %v2234 = vadd.f32 %v2198, %v2217
        %v2235 = vadd.f32 %v2199, %v2217
        %v2236 = vadd.f32 %v2200, %v2217
        %v2237 = vadd.f32 %v2201, %v2217
        %v2238 = vadd.f32 %v2202, %v2217
        %v2239 = vadd.f32 %v2203, %v2217
        %v2240 = vadd.f32 %v2204, %v2217
        %v2241 = vadd.f32 %v2205, %v2217
        %v2242 = vadd.f32 %v2206, %v2217
        %v2243 = vadd.f32 %v2207, %v2217
        %v2244 = vadd.f32 %v2208, %v2217
        %v2245 = vadd.f32 %v2209, %v2217
        %v2246 = vadd.f32 %v2210, %v2217
        %v2247 = vadd.f32 %v2211, %v2217
        %v2248 = vadd.f32 %v2212, %v2217
        %v2249 = vadd.f32 %v2213, %v2217
        %v2250 = vadd.f32 %v2214, %v2217
        %v2251 = vxor.u32 %v2219, 2147483648
        %v2252 = vxor.u32 %v2220, 2147483648
        %v2253 = vxor.u32 %v2221, 2147483648
        %v2254 = vxor.u32 %v2222, 2147483648
        %v2255 = vxor.u32 %v2223, 2147483648
        %v2256 = vxor.u32 %v2224, 2147483648
        %v2257 = vxor.u32 %v2225, 2147483648
        %v2258 = vxor.u32 %v2226, 2147483648
        %v2259 = vxor.u32 %v2227, 2147483648
        %v2260 = vxor.u32 %v2228, 2147483648
        %v2261 = vxor.u32 %v2229, 2147483648
        %v2262 = vxor.u32 %v2230, 2147483648
        %v2263 = vxor.u32 %v2231, 2147483648
        %v2264 = vxor.u32 %v2232, 2147483648
        %v2265 = vxor.u32 %v2233, 2147483648
        %v2266 = vxor.u32 %v2234, 2147483648
        %v2267 = vxor.u32 %v2235, 2147483648
        %v2268 = vxor.u32 %v2236, 2147483648
        %v2269 = vxor.u32 %v2237, 2147483648
        %v2270 = vxor.u32 %v2238, 2147483648
        %v2271 = vxor.u32 %v2239, 2147483648
        %v2272 = vxor.u32 %v2240, 2147483648
        %v2273 = vxor.u32 %v2241, 2147483648
        %v2274 = vxor.u32 %v2242, 2147483648
        %v2275 = vxor.u32 %v2243, 2147483648
        %v2276 = vxor.u32 %v2244, 2147483648
        %v2277 = vxor.u32 %v2245, 2147483648
        %v2278 = vxor.u32 %v2246, 2147483648
        %v2279 = vxor.u32 %v2247, 2147483648
        %v2280 = vxor.u32 %v2248, 2147483648
        %v2281 = vxor.u32 %v2249, 2147483648
        %v2282 = vxor.u32 %v2250, 2147483648
        %v2283 = vmul.f32 %v2251, 1.442695
        %v2284 = vpow.pop %v2283
        %v2285 = vmul.f32 %v2252, 1.442695
        %v2286 = vpow.pop %v2285
        %v2287 = vmul.f32 %v2253, 1.442695
        %v2288 = vpow.pop %v2287
        %v2289 = vmul.f32 %v2254, 1.442695
        %v2290 = vpow.pop %v2289
        %v2291 = vmul.f32 %v2255, 1.442695
        %v2292 = vpow.pop %v2291
        %v2293 = vmul.f32 %v2256, 1.442695
        %v2294 = vpow.pop %v2293
        %v2295 = vmul.f32 %v2257, 1.442695
        %v2296 = vpow.pop %v2295
        %v2297 = vmul.f32 %v2258, 1.442695
        %v2298 = vpow.pop %v2297
        %v2299 = vmul.f32 %v2259, 1.442695
        %v2300 = vpow.pop %v2299
        %v2301 = vmul.f32 %v2260, 1.442695
        %v2302 = vpow.pop %v2301
        %v2303 = vmul.f32 %v2261, 1.442695
        %v2304 = vpow.pop %v2303
        %v2305 = vmul.f32 %v2262, 1.442695
        %v2306 = vpow.pop %v2305
        %v2307 = vmul.f32 %v2263, 1.442695
        %v2308 = vpow.pop %v2307
        %v2309 = vmul.f32 %v2264, 1.442695
        %v2310 = vpow.pop %v2309
        %v2311 = vmul.f32 %v2265, 1.442695
        %v2312 = vpow.pop %v2311
        %v2313 = vmul.f32 %v2266, 1.442695
        %v2314 = vpow.pop %v2313
        %v2315 = vmul.f32 %v2267, 1.442695
        %v2316 = vpow.pop %v2315
        %v2317 = vmul.f32 %v2268, 1.442695
        %v2318 = vpow.pop %v2317
        %v2319 = vmul.f32 %v2269, 1.442695
        %v2320 = vpow.pop %v2319
        %v2321 = vmul.f32 %v2270, 1.442695
        %v2322 = vpow.pop %v2321
        %v2323 = vmul.f32 %v2271, 1.442695
        %v2324 = vpow.pop %v2323
        %v2325 = vmul.f32 %v2272, 1.442695
        %v2326 = vpow.pop %v2325
        %v2327 = vmul.f32 %v2273, 1.442695
        %v2328 = vpow.pop %v2327
        %v2329 = vmul.f32 %v2274, 1.442695
        %v2330 = vpow.pop %v2329
        %v2331 = vmul.f32 %v2275, 1.442695
        %v2332 = vpow.pop %v2331
        %v2333 = vmul.f32 %v2276, 1.442695
        %v2334 = vpow.pop %v2333
        %v2335 = vmul.f32 %v2277, 1.442695
        %v2336 = vpow.pop %v2335
        %v2337 = vmul.f32 %v2278, 1.442695
        %v2338 = vpow.pop %v2337
        %v2339 = vmul.f32 %v2279, 1.442695
        %v2340 = vpow.pop %v2339
        %v2341 = vmul.f32 %v2280, 1.442695
        %v2342 = vpow.pop %v2341
        %v2343 = vmul.f32 %v2281, 1.442695
        %v2344 = vpow.pop %v2343
        %v2345 = vmul.f32 %v2282, 1.442695
        %v2346 = vpow.pop %v2345
        %v2347 = vadd.f32 %v2284, 1.0
        %v2348 = vadd.f32 %v2286, 1.0
        %v2349 = vadd.f32 %v2288, 1.0
        %v2350 = vadd.f32 %v2290, 1.0
        %v2351 = vadd.f32 %v2292, 1.0
        %v2352 = vadd.f32 %v2294, 1.0
        %v2353 = vadd.f32 %v2296, 1.0
        %v2354 = vadd.f32 %v2298, 1.0
        %v2355 = vadd.f32 %v2300, 1.0
        %v2356 = vadd.f32 %v2302, 1.0
        %v2357 = vadd.f32 %v2304, 1.0
        %v2358 = vadd.f32 %v2306, 1.0
        %v2359 = vadd.f32 %v2308, 1.0
        %v2360 = vadd.f32 %v2310, 1.0
        %v2361 = vadd.f32 %v2312, 1.0
        %v2362 = vadd.f32 %v2314, 1.0
        %v2363 = vadd.f32 %v2316, 1.0
        %v2364 = vadd.f32 %v2318, 1.0
        %v2365 = vadd.f32 %v2320, 1.0
        %v2366 = vadd.f32 %v2322, 1.0
        %v2367 = vadd.f32 %v2324, 1.0
        %v2368 = vadd.f32 %v2326, 1.0
        %v2369 = vadd.f32 %v2328, 1.0
        %v2370 = vadd.f32 %v2330, 1.0
        %v2371 = vadd.f32 %v2332, 1.0
        %v2372 = vadd.f32 %v2334, 1.0
        %v2373 = vadd.f32 %v2336, 1.0
        %v2374 = vadd.f32 %v2338, 1.0
        %v2375 = vadd.f32 %v2340, 1.0
        %v2376 = vadd.f32 %v2342, 1.0
        %v2377 = vadd.f32 %v2344, 1.0
        %v2378 = vadd.f32 %v2346, 1.0
        %v2379 = vrcp.pop %v2347
        %v2380 = vmul.f32 %v2347, %v2379
        %v2381 = vsub.f32 1.0, %v2380
        %v2382 = vmul.f32 %v2379, %v2381
        %v2383 = vadd.f32 %v2379, %v2382
        %vm2384 = vweird.f32 %v2347
        %vm2385 = vweird.f32 %v2379
        %vm2386 = vmor %vm2384, %vm2385
        %v2387 = vsel %vm2386, %v2379, %v2383
        %v2388 = vand.u32 2147483647, %v2347
        %vm2389 = vcmp.eq.f32.partialorder %v2388, 8.507059e+37
        %v2390 = vand.u32 %v2347, 2147483648
        %v2391 = vor.u32 1.1754944e-38, %v2390
        %v2392 = vsel %vm2389, %v2391, %v2387
        %v2393 = vmul.f32 1.0, %v2392
        %v2394 = vrcp.pop %v2348
        %v2395 = vmul.f32 %v2348, %v2394
        %v2396 = vsub.f32 1.0, %v2395
        %v2397 = vmul.f32 %v2394, %v2396
        %v2398 = vadd.f32 %v2394, %v2397
        %vm2399 = vweird.f32 %v2348
        %vm2400 = vweird.f32 %v2394
        %vm2401 = vmor %vm2399, %vm2400
        %v2402 = vsel %vm2401, %v2394, %v2398
        %v2403 = vand.u32 2147483647, %v2348
        %vm2404 = vcmp.eq.f32.partialorder %v2403, 8.507059e+37
        %v2405 = vand.u32 %v2348, 2147483648
        %v2406 = vor.u32 1.1754944e-38, %v2405
        %v2407 = vsel %vm2404, %v2406, %v2402
        %v2408 = vmul.f32 1.0, %v2407
        %v2409 = vrcp.pop %v2349
        %v2410 = vmul.f32 %v2349, %v2409
        %v2411 = vsub.f32 1.0, %v2410
        %v2412 = vmul.f32 %v2409, %v2411
        %v2413 = vadd.f32 %v2409, %v2412
        %vm2414 = vweird.f32 %v2349
        %vm2415 = vweird.f32 %v2409
        %vm2416 = vmor %vm2414, %vm2415
        %v2417 = vsel %vm2416, %v2409, %v2413
        %v2418 = vand.u32 2147483647, %v2349
        %vm2419 = vcmp.eq.f32.partialorder %v2418, 8.507059e+37
        %v2420 = vand.u32 %v2349, 2147483648
        %v2421 = vor.u32 1.1754944e-38, %v2420
        %v2422 = vsel %vm2419, %v2421, %v2417
        %v2423 = vmul.f32 1.0, %v2422
        %v2424 = vrcp.pop %v2350
        %v2425 = vmul.f32 %v2350, %v2424
        %v2426 = vsub.f32 1.0, %v2425
        %v2427 = vmul.f32 %v2424, %v2426
        %v2428 = vadd.f32 %v2424, %v2427
        %vm2429 = vweird.f32 %v2350
        %vm2430 = vweird.f32 %v2424
        %vm2431 = vmor %vm2429, %vm2430
        %v2432 = vsel %vm2431, %v2424, %v2428
        %v2433 = vand.u32 2147483647, %v2350
        %vm2434 = vcmp.eq.f32.partialorder %v2433, 8.507059e+37
        %v2435 = vand.u32 %v2350, 2147483648
        %v2436 = vor.u32 1.1754944e-38, %v2435
        %v2437 = vsel %vm2434, %v2436, %v2432
        %v2438 = vmul.f32 1.0, %v2437
        %v2439 = vrcp.pop %v2351
        %v2440 = vmul.f32 %v2351, %v2439
        %v2441 = vsub.f32 1.0, %v2440
        %v2442 = vmul.f32 %v2439, %v2441
        %v2443 = vadd.f32 %v2439, %v2442
        %vm2444 = vweird.f32 %v2351
        %vm2445 = vweird.f32 %v2439
        %vm2446 = vmor %vm2444, %vm2445
        %v2447 = vsel %vm2446, %v2439, %v2443
        %v2448 = vand.u32 2147483647, %v2351
        %vm2449 = vcmp.eq.f32.partialorder %v2448, 8.507059e+37
        %v2450 = vand.u32 %v2351, 2147483648
        %v2451 = vor.u32 1.1754944e-38, %v2450
        %v2452 = vsel %vm2449, %v2451, %v2447
        %v2453 = vmul.f32 1.0, %v2452
        %v2454 = vrcp.pop %v2352
        %v2455 = vmul.f32 %v2352, %v2454
        %v2456 = vsub.f32 1.0, %v2455
        %v2457 = vmul.f32 %v2454, %v2456
        %v2458 = vadd.f32 %v2454, %v2457
        %vm2459 = vweird.f32 %v2352
        %vm2460 = vweird.f32 %v2454
        %vm2461 = vmor %vm2459, %vm2460
        %v2462 = vsel %vm2461, %v2454, %v2458
        %v2463 = vand.u32 2147483647, %v2352
        %vm2464 = vcmp.eq.f32.partialorder %v2463, 8.507059e+37
        %v2465 = vand.u32 %v2352, 2147483648
        %v2466 = vor.u32 1.1754944e-38, %v2465
        %v2467 = vsel %vm2464, %v2466, %v2462
        %v2468 = vmul.f32 1.0, %v2467
        %v2469 = vrcp.pop %v2353
        %v2470 = vmul.f32 %v2353, %v2469
        %v2471 = vsub.f32 1.0, %v2470
        %v2472 = vmul.f32 %v2469, %v2471
        %v2473 = vadd.f32 %v2469, %v2472
        %vm2474 = vweird.f32 %v2353
        %vm2475 = vweird.f32 %v2469
        %vm2476 = vmor %vm2474, %vm2475
        %v2477 = vsel %vm2476, %v2469, %v2473
        %v2478 = vand.u32 2147483647, %v2353
        %vm2479 = vcmp.eq.f32.partialorder %v2478, 8.507059e+37
        %v2480 = vand.u32 %v2353, 2147483648
        %v2481 = vor.u32 1.1754944e-38, %v2480
        %v2482 = vsel %vm2479, %v2481, %v2477
        %v2483 = vmul.f32 1.0, %v2482
        %v2484 = vrcp.pop %v2354
        %v2485 = vmul.f32 %v2354, %v2484
        %v2486 = vsub.f32 1.0, %v2485
        %v2487 = vmul.f32 %v2484, %v2486
        %v2488 = vadd.f32 %v2484, %v2487
        %vm2489 = vweird.f32 %v2354
        %vm2490 = vweird.f32 %v2484
        %vm2491 = vmor %vm2489, %vm2490
        %v2492 = vsel %vm2491, %v2484, %v2488
        %v2493 = vand.u32 2147483647, %v2354
        %vm2494 = vcmp.eq.f32.partialorder %v2493, 8.507059e+37
        %v2495 = vand.u32 %v2354, 2147483648
        %v2496 = vor.u32 1.1754944e-38, %v2495
        %v2497 = vsel %vm2494, %v2496, %v2492
        %v2498 = vmul.f32 1.0, %v2497
        %v2499 = vrcp.pop %v2355
        %v2500 = vmul.f32 %v2355, %v2499
        %v2501 = vsub.f32 1.0, %v2500
        %v2502 = vmul.f32 %v2499, %v2501
        %v2503 = vadd.f32 %v2499, %v2502
        %vm2504 = vweird.f32 %v2355
        %vm2505 = vweird.f32 %v2499
        %vm2506 = vmor %vm2504, %vm2505
        %v2507 = vsel %vm2506, %v2499, %v2503
        %v2508 = vand.u32 2147483647, %v2355
        %vm2509 = vcmp.eq.f32.partialorder %v2508, 8.507059e+37
        %v2510 = vand.u32 %v2355, 2147483648
        %v2511 = vor.u32 1.1754944e-38, %v2510
        %v2512 = vsel %vm2509, %v2511, %v2507
        %v2513 = vmul.f32 1.0, %v2512
        %v2514 = vrcp.pop %v2356
        %v2515 = vmul.f32 %v2356, %v2514
        %v2516 = vsub.f32 1.0, %v2515
        %v2517 = vmul.f32 %v2514, %v2516
        %v2518 = vadd.f32 %v2514, %v2517
        %vm2519 = vweird.f32 %v2356
        %vm2520 = vweird.f32 %v2514
        %vm2521 = vmor %vm2519, %vm2520
        %v2522 = vsel %vm2521, %v2514, %v2518
        %v2523 = vand.u32 2147483647, %v2356
        %vm2524 = vcmp.eq.f32.partialorder %v2523, 8.507059e+37
        %v2525 = vand.u32 %v2356, 2147483648
        %v2526 = vor.u32 1.1754944e-38, %v2525
        %v2527 = vsel %vm2524, %v2526, %v2522
        %v2528 = vmul.f32 1.0, %v2527
        %v2529 = vrcp.pop %v2357
        %v2530 = vmul.f32 %v2357, %v2529
        %v2531 = vsub.f32 1.0, %v2530
        %v2532 = vmul.f32 %v2529, %v2531
        %v2533 = vadd.f32 %v2529, %v2532
        %vm2534 = vweird.f32 %v2357
        %vm2535 = vweird.f32 %v2529
        %vm2536 = vmor %vm2534, %vm2535
        %v2537 = vsel %vm2536, %v2529, %v2533
        %v2538 = vand.u32 2147483647, %v2357
        %vm2539 = vcmp.eq.f32.partialorder %v2538, 8.507059e+37
        %v2540 = vand.u32 %v2357, 2147483648
        %v2541 = vor.u32 1.1754944e-38, %v2540
        %v2542 = vsel %vm2539, %v2541, %v2537
        %v2543 = vmul.f32 1.0, %v2542
        %v2544 = vrcp.pop %v2358
        %v2545 = vmul.f32 %v2358, %v2544
        %v2546 = vsub.f32 1.0, %v2545
        %v2547 = vmul.f32 %v2544, %v2546
        %v2548 = vadd.f32 %v2544, %v2547
        %vm2549 = vweird.f32 %v2358
        %vm2550 = vweird.f32 %v2544
        %vm2551 = vmor %vm2549, %vm2550
        %v2552 = vsel %vm2551, %v2544, %v2548
        %v2553 = vand.u32 2147483647, %v2358
        %vm2554 = vcmp.eq.f32.partialorder %v2553, 8.507059e+37
        %v2555 = vand.u32 %v2358, 2147483648
        %v2556 = vor.u32 1.1754944e-38, %v2555
        %v2557 = vsel %vm2554, %v2556, %v2552
        %v2558 = vmul.f32 1.0, %v2557
        %v2559 = vrcp.pop %v2359
        %v2560 = vmul.f32 %v2359, %v2559
        %v2561 = vsub.f32 1.0, %v2560
        %v2562 = vmul.f32 %v2559, %v2561
        %v2563 = vadd.f32 %v2559, %v2562
        %vm2564 = vweird.f32 %v2359
        %vm2565 = vweird.f32 %v2559
        %vm2566 = vmor %vm2564, %vm2565
        %v2567 = vsel %vm2566, %v2559, %v2563
        %v2568 = vand.u32 2147483647, %v2359
        %vm2569 = vcmp.eq.f32.partialorder %v2568, 8.507059e+37
        %v2570 = vand.u32 %v2359, 2147483648
        %v2571 = vor.u32 1.1754944e-38, %v2570
        %v2572 = vsel %vm2569, %v2571, %v2567
        %v2573 = vmul.f32 1.0, %v2572
        %v2574 = vrcp.pop %v2360
        %v2575 = vmul.f32 %v2360, %v2574
        %v2576 = vsub.f32 1.0, %v2575
        %v2577 = vmul.f32 %v2574, %v2576
        %v2578 = vadd.f32 %v2574, %v2577
        %vm2579 = vweird.f32 %v2360
        %vm2580 = vweird.f32 %v2574
        %vm2581 = vmor %vm2579, %vm2580
        %v2582 = vsel %vm2581, %v2574, %v2578
        %v2583 = vand.u32 2147483647, %v2360
        %vm2584 = vcmp.eq.f32.partialorder %v2583, 8.507059e+37
        %v2585 = vand.u32 %v2360, 2147483648
        %v2586 = vor.u32 1.1754944e-38, %v2585
        %v2587 = vsel %vm2584, %v2586, %v2582
        %v2588 = vmul.f32 1.0, %v2587
        %v2589 = vrcp.pop %v2361
        %v2590 = vmul.f32 %v2361, %v2589
        %v2591 = vsub.f32 1.0, %v2590
        %v2592 = vmul.f32 %v2589, %v2591
        %v2593 = vadd.f32 %v2589, %v2592
        %vm2594 = vweird.f32 %v2361
        %vm2595 = vweird.f32 %v2589
        %vm2596 = vmor %vm2594, %vm2595
        %v2597 = vsel %vm2596, %v2589, %v2593
        %v2598 = vand.u32 2147483647, %v2361
        %vm2599 = vcmp.eq.f32.partialorder %v2598, 8.507059e+37
        %v2600 = vand.u32 %v2361, 2147483648
        %v2601 = vor.u32 1.1754944e-38, %v2600
        %v2602 = vsel %vm2599, %v2601, %v2597
        %v2603 = vmul.f32 1.0, %v2602
        %v2604 = vrcp.pop %v2362
        %v2605 = vmul.f32 %v2362, %v2604
        %v2606 = vsub.f32 1.0, %v2605
        %v2607 = vmul.f32 %v2604, %v2606
        %v2608 = vadd.f32 %v2604, %v2607
        %vm2609 = vweird.f32 %v2362
        %vm2610 = vweird.f32 %v2604
        %vm2611 = vmor %vm2609, %vm2610
        %v2612 = vsel %vm2611, %v2604, %v2608
        %v2613 = vand.u32 2147483647, %v2362
        %vm2614 = vcmp.eq.f32.partialorder %v2613, 8.507059e+37
        %v2615 = vand.u32 %v2362, 2147483648
        %v2616 = vor.u32 1.1754944e-38, %v2615
        %v2617 = vsel %vm2614, %v2616, %v2612
        %v2618 = vmul.f32 1.0, %v2617
        %v2619 = vrcp.pop %v2363
        %v2620 = vmul.f32 %v2363, %v2619
        %v2621 = vsub.f32 1.0, %v2620
        %v2622 = vmul.f32 %v2619, %v2621
        %v2623 = vadd.f32 %v2619, %v2622
        %vm2624 = vweird.f32 %v2363
        %vm2625 = vweird.f32 %v2619
        %vm2626 = vmor %vm2624, %vm2625
        %v2627 = vsel %vm2626, %v2619, %v2623
        %v2628 = vand.u32 2147483647, %v2363
        %vm2629 = vcmp.eq.f32.partialorder %v2628, 8.507059e+37
        %v2630 = vand.u32 %v2363, 2147483648
        %v2631 = vor.u32 1.1754944e-38, %v2630
        %v2632 = vsel %vm2629, %v2631, %v2627
        %v2633 = vmul.f32 1.0, %v2632
        %v2634 = vrcp.pop %v2364
        %v2635 = vmul.f32 %v2364, %v2634
        %v2636 = vsub.f32 1.0, %v2635
        %v2637 = vmul.f32 %v2634, %v2636
        %v2638 = vadd.f32 %v2634, %v2637
        %vm2639 = vweird.f32 %v2364
        %vm2640 = vweird.f32 %v2634
        %vm2641 = vmor %vm2639, %vm2640
        %v2642 = vsel %vm2641, %v2634, %v2638
        %v2643 = vand.u32 2147483647, %v2364
        %vm2644 = vcmp.eq.f32.partialorder %v2643, 8.507059e+37
        %v2645 = vand.u32 %v2364, 2147483648
        %v2646 = vor.u32 1.1754944e-38, %v2645
        %v2647 = vsel %vm2644, %v2646, %v2642
        %v2648 = vmul.f32 1.0, %v2647
        %v2649 = vrcp.pop %v2365
        %v2650 = vmul.f32 %v2365, %v2649
        %v2651 = vsub.f32 1.0, %v2650
        %v2652 = vmul.f32 %v2649, %v2651
        %v2653 = vadd.f32 %v2649, %v2652
        %vm2654 = vweird.f32 %v2365
        %vm2655 = vweird.f32 %v2649
        %vm2656 = vmor %vm2654, %vm2655
        %v2657 = vsel %vm2656, %v2649, %v2653
        %v2658 = vand.u32 2147483647, %v2365
        %vm2659 = vcmp.eq.f32.partialorder %v2658, 8.507059e+37
        %v2660 = vand.u32 %v2365, 2147483648
        %v2661 = vor.u32 1.1754944e-38, %v2660
        %v2662 = vsel %vm2659, %v2661, %v2657
        %v2663 = vmul.f32 1.0, %v2662
        %v2664 = vrcp.pop %v2366
        %v2665 = vmul.f32 %v2366, %v2664
        %v2666 = vsub.f32 1.0, %v2665
        %v2667 = vmul.f32 %v2664, %v2666
        %v2668 = vadd.f32 %v2664, %v2667
        %vm2669 = vweird.f32 %v2366
        %vm2670 = vweird.f32 %v2664
        %vm2671 = vmor %vm2669, %vm2670
        %v2672 = vsel %vm2671, %v2664, %v2668
        %v2673 = vand.u32 2147483647, %v2366
        %vm2674 = vcmp.eq.f32.partialorder %v2673, 8.507059e+37
        %v2675 = vand.u32 %v2366, 2147483648
        %v2676 = vor.u32 1.1754944e-38, %v2675
        %v2677 = vsel %vm2674, %v2676, %v2672
        %v2678 = vmul.f32 1.0, %v2677
        %v2679 = vrcp.pop %v2367
        %v2680 = vmul.f32 %v2367, %v2679
        %v2681 = vsub.f32 1.0, %v2680
        %v2682 = vmul.f32 %v2679, %v2681
        %v2683 = vadd.f32 %v2679, %v2682
        %vm2684 = vweird.f32 %v2367
        %vm2685 = vweird.f32 %v2679
        %vm2686 = vmor %vm2684, %vm2685
        %v2687 = vsel %vm2686, %v2679, %v2683
        %v2688 = vand.u32 2147483647, %v2367
        %vm2689 = vcmp.eq.f32.partialorder %v2688, 8.507059e+37
        %v2690 = vand.u32 %v2367, 2147483648
        %v2691 = vor.u32 1.1754944e-38, %v2690
        %v2692 = vsel %vm2689, %v2691, %v2687
        %v2693 = vmul.f32 1.0, %v2692
        %v2694 = vrcp.pop %v2368
        %v2695 = vmul.f32 %v2368, %v2694
        %v2696 = vsub.f32 1.0, %v2695
        %v2697 = vmul.f32 %v2694, %v2696
        %v2698 = vadd.f32 %v2694, %v2697
        %vm2699 = vweird.f32 %v2368
        %vm2700 = vweird.f32 %v2694
        %vm2701 = vmor %vm2699, %vm2700
        %v2702 = vsel %vm2701, %v2694, %v2698
        %v2703 = vand.u32 2147483647, %v2368
        %vm2704 = vcmp.eq.f32.partialorder %v2703, 8.507059e+37
        %v2705 = vand.u32 %v2368, 2147483648
        %v2706 = vor.u32 1.1754944e-38, %v2705
        %v2707 = vsel %vm2704, %v2706, %v2702
        %v2708 = vmul.f32 1.0, %v2707
        %v2709 = vrcp.pop %v2369
        %v2710 = vmul.f32 %v2369, %v2709
        %v2711 = vsub.f32 1.0, %v2710
        %v2712 = vmul.f32 %v2709, %v2711
        %v2713 = vadd.f32 %v2709, %v2712
        %vm2714 = vweird.f32 %v2369
        %vm2715 = vweird.f32 %v2709
        %vm2716 = vmor %vm2714, %vm2715
        %v2717 = vsel %vm2716, %v2709, %v2713
        %v2718 = vand.u32 2147483647, %v2369
        %vm2719 = vcmp.eq.f32.partialorder %v2718, 8.507059e+37
        %v2720 = vand.u32 %v2369, 2147483648
        %v2721 = vor.u32 1.1754944e-38, %v2720
        %v2722 = vsel %vm2719, %v2721, %v2717
        %v2723 = vmul.f32 1.0, %v2722
        %v2724 = vrcp.pop %v2370
        %v2725 = vmul.f32 %v2370, %v2724
        %v2726 = vsub.f32 1.0, %v2725
        %v2727 = vmul.f32 %v2724, %v2726
        %v2728 = vadd.f32 %v2724, %v2727
        %vm2729 = vweird.f32 %v2370
        %vm2730 = vweird.f32 %v2724
        %vm2731 = vmor %vm2729, %vm2730
        %v2732 = vsel %vm2731, %v2724, %v2728
        %v2733 = vand.u32 2147483647, %v2370
        %vm2734 = vcmp.eq.f32.partialorder %v2733, 8.507059e+37
        %v2735 = vand.u32 %v2370, 2147483648
        %v2736 = vor.u32 1.1754944e-38, %v2735
        %v2737 = vsel %vm2734, %v2736, %v2732
        %v2738 = vmul.f32 1.0, %v2737
        %v2739 = vrcp.pop %v2371
        %v2740 = vmul.f32 %v2371, %v2739
        %v2741 = vsub.f32 1.0, %v2740
        %v2742 = vmul.f32 %v2739, %v2741
        %v2743 = vadd.f32 %v2739, %v2742
        %vm2744 = vweird.f32 %v2371
        %vm2745 = vweird.f32 %v2739
        %vm2746 = vmor %vm2744, %vm2745
        %v2747 = vsel %vm2746, %v2739, %v2743
        %v2748 = vand.u32 2147483647, %v2371
        %vm2749 = vcmp.eq.f32.partialorder %v2748, 8.507059e+37
        %v2750 = vand.u32 %v2371, 2147483648
        %v2751 = vor.u32 1.1754944e-38, %v2750
        %v2752 = vsel %vm2749, %v2751, %v2747
        %v2753 = vmul.f32 1.0, %v2752
        %v2754 = vrcp.pop %v2372
        %v2755 = vmul.f32 %v2372, %v2754
        %v2756 = vsub.f32 1.0, %v2755
        %v2757 = vmul.f32 %v2754, %v2756
        %v2758 = vadd.f32 %v2754, %v2757
        %vm2759 = vweird.f32 %v2372
        %vm2760 = vweird.f32 %v2754
        %vm2761 = vmor %vm2759, %vm2760
        %v2762 = vsel %vm2761, %v2754, %v2758
        %v2763 = vand.u32 2147483647, %v2372
        %vm2764 = vcmp.eq.f32.partialorder %v2763, 8.507059e+37
        %v2765 = vand.u32 %v2372, 2147483648
        %v2766 = vor.u32 1.1754944e-38, %v2765
        %v2767 = vsel %vm2764, %v2766, %v2762
        %v2768 = vmul.f32 1.0, %v2767
        %v2769 = vrcp.pop %v2373
        %v2770 = vmul.f32 %v2373, %v2769
        %v2771 = vsub.f32 1.0, %v2770
        %v2772 = vmul.f32 %v2769, %v2771
        %v2773 = vadd.f32 %v2769, %v2772
        %vm2774 = vweird.f32 %v2373
        %vm2775 = vweird.f32 %v2769
        %vm2776 = vmor %vm2774, %vm2775
        %v2777 = vsel %vm2776, %v2769, %v2773
        %v2778 = vand.u32 2147483647, %v2373
        %vm2779 = vcmp.eq.f32.partialorder %v2778, 8.507059e+37
        %v2780 = vand.u32 %v2373, 2147483648
        %v2781 = vor.u32 1.1754944e-38, %v2780
        %v2782 = vsel %vm2779, %v2781, %v2777
        %v2783 = vmul.f32 1.0, %v2782
        %v2784 = vrcp.pop %v2374
        %v2785 = vmul.f32 %v2374, %v2784
        %v2786 = vsub.f32 1.0, %v2785
        %v2787 = vmul.f32 %v2784, %v2786
        %v2788 = vadd.f32 %v2784, %v2787
        %vm2789 = vweird.f32 %v2374
        %vm2790 = vweird.f32 %v2784
        %vm2791 = vmor %vm2789, %vm2790
        %v2792 = vsel %vm2791, %v2784, %v2788
        %v2793 = vand.u32 2147483647, %v2374
        %vm2794 = vcmp.eq.f32.partialorder %v2793, 8.507059e+37
        %v2795 = vand.u32 %v2374, 2147483648
        %v2796 = vor.u32 1.1754944e-38, %v2795
        %v2797 = vsel %vm2794, %v2796, %v2792
        %v2798 = vmul.f32 1.0, %v2797
        %v2799 = vrcp.pop %v2375
        %v2800 = vmul.f32 %v2375, %v2799
        %v2801 = vsub.f32 1.0, %v2800
        %v2802 = vmul.f32 %v2799, %v2801
        %v2803 = vadd.f32 %v2799, %v2802
        %vm2804 = vweird.f32 %v2375
        %vm2805 = vweird.f32 %v2799
        %vm2806 = vmor %vm2804, %vm2805
        %v2807 = vsel %vm2806, %v2799, %v2803
        %v2808 = vand.u32 2147483647, %v2375
        %vm2809 = vcmp.eq.f32.partialorder %v2808, 8.507059e+37
        %v2810 = vand.u32 %v2375, 2147483648
        %v2811 = vor.u32 1.1754944e-38, %v2810
        %v2812 = vsel %vm2809, %v2811, %v2807
        %v2813 = vmul.f32 1.0, %v2812
        %v2814 = vrcp.pop %v2376
        %v2815 = vmul.f32 %v2376, %v2814
        %v2816 = vsub.f32 1.0, %v2815
        %v2817 = vmul.f32 %v2814, %v2816
        %v2818 = vadd.f32 %v2814, %v2817
        %vm2819 = vweird.f32 %v2376
        %vm2820 = vweird.f32 %v2814
        %vm2821 = vmor %vm2819, %vm2820
        %v2822 = vsel %vm2821, %v2814, %v2818
        %v2823 = vand.u32 2147483647, %v2376
        %vm2824 = vcmp.eq.f32.partialorder %v2823, 8.507059e+37
        %v2825 = vand.u32 %v2376, 2147483648
        %v2826 = vor.u32 1.1754944e-38, %v2825
        %v2827 = vsel %vm2824, %v2826, %v2822
        %v2828 = vmul.f32 1.0, %v2827
        %v2829 = vrcp.pop %v2377
        %v2830 = vmul.f32 %v2377, %v2829
        %v2831 = vsub.f32 1.0, %v2830
        %v2832 = vmul.f32 %v2829, %v2831
        %v2833 = vadd.f32 %v2829, %v2832
        %vm2834 = vweird.f32 %v2377
        %vm2835 = vweird.f32 %v2829
        %vm2836 = vmor %vm2834, %vm2835
        %v2837 = vsel %vm2836, %v2829, %v2833
        %v2838 = vand.u32 2147483647, %v2377
        %vm2839 = vcmp.eq.f32.partialorder %v2838, 8.507059e+37
        %v2840 = vand.u32 %v2377, 2147483648
        %v2841 = vor.u32 1.1754944e-38, %v2840
        %v2842 = vsel %vm2839, %v2841, %v2837
        %v2843 = vmul.f32 1.0, %v2842
        %v2844 = vrcp.pop %v2378
        %v2845 = vmul.f32 %v2378, %v2844
        %v2846 = vsub.f32 1.0, %v2845
        %v2847 = vmul.f32 %v2844, %v2846
        %v2848 = vadd.f32 %v2844, %v2847
        %vm2849 = vweird.f32 %v2378
        %vm2850 = vweird.f32 %v2844
        %vm2851 = vmor %vm2849, %vm2850
        %v2852 = vsel %vm2851, %v2844, %v2848
        %v2853 = vand.u32 2147483647, %v2378
        %vm2854 = vcmp.eq.f32.partialorder %v2853, 8.507059e+37
        %v2855 = vand.u32 %v2378, 2147483648
        %v2856 = vor.u32 1.1754944e-38, %v2855
        %v2857 = vsel %vm2854, %v2856, %v2852
        %v2858 = vmul.f32 1.0, %v2857
        %v2859 = vmul.f32 %v2219, %v2393
        %v2860 = vmul.f32 %v2220, %v2408
        %v2861 = vmul.f32 %v2221, %v2423
        %v2862 = vmul.f32 %v2222, %v2438
        %v2863 = vmul.f32 %v2223, %v2453
        %v2864 = vmul.f32 %v2224, %v2468
        %v2865 = vmul.f32 %v2225, %v2483
        %v2866 = vmul.f32 %v2226, %v2498
        %v2867 = vmul.f32 %v2227, %v2513
        %v2868 = vmul.f32 %v2228, %v2528
        %v2869 = vmul.f32 %v2229, %v2543
        %v2870 = vmul.f32 %v2230, %v2558
        %v2871 = vmul.f32 %v2231, %v2573
        %v2872 = vmul.f32 %v2232, %v2588
        %v2873 = vmul.f32 %v2233, %v2603
        %v2874 = vmul.f32 %v2234, %v2618
        %v2875 = vmul.f32 %v2235, %v2633
        %v2876 = vmul.f32 %v2236, %v2648
        %v2877 = vmul.f32 %v2237, %v2663
        %v2878 = vmul.f32 %v2238, %v2678
        %v2879 = vmul.f32 %v2239, %v2693
        %v2880 = vmul.f32 %v2240, %v2708
        %v2881 = vmul.f32 %v2241, %v2723
        %v2882 = vmul.f32 %v2242, %v2738
        %v2883 = vmul.f32 %v2243, %v2753
        %v2884 = vmul.f32 %v2244, %v2768
        %v2885 = vmul.f32 %v2245, %v2783
        %v2886 = vmul.f32 %v2246, %v2798
        %v2887 = vmul.f32 %v2247, %v2813
        %v2888 = vmul.f32 %v2248, %v2828
        %v2889 = vmul.f32 %v2249, %v2843
        %v2890 = vmul.f32 %v2250, %v2858
        %v2891 = vpack.c.bf16 %v2859, %v2859
        %v2892 = vpack.c.bf16 %v2860, %v2860
        %v2893 = vpack.c.bf16 %v2861, %v2861
        %v2894 = vpack.c.bf16 %v2862, %v2862
        %v2895 = vpack.c.bf16 %v2863, %v2863
        %v2896 = vpack.c.bf16 %v2864, %v2864
        %v2897 = vpack.c.bf16 %v2865, %v2865
        %v2898 = vpack.c.bf16 %v2866, %v2866
        %v2899 = vpack.c.bf16 %v2867, %v2867
        %v2900 = vpack.c.bf16 %v2868, %v2868
        %v2901 = vpack.c.bf16 %v2869, %v2869
        %v2902 = vpack.c.bf16 %v2870, %v2870
        %v2903 = vpack.c.bf16 %v2871, %v2871
        %v2904 = vpack.c.bf16 %v2872, %v2872
        %v2905 = vpack.c.bf16 %v2873, %v2873
        %v2906 = vpack.c.bf16 %v2874, %v2874
        %v2907 = vpack.c.bf16 %v2875, %v2875
        %v2908 = vpack.c.bf16 %v2876, %v2876
        %v2909 = vpack.c.bf16 %v2877, %v2877
        %v2910 = vpack.c.bf16 %v2878, %v2878
        %v2911 = vpack.c.bf16 %v2879, %v2879
        %v2912 = vpack.c.bf16 %v2880, %v2880
        %v2913 = vpack.c.bf16 %v2881, %v2881
        %v2914 = vpack.c.bf16 %v2882, %v2882
        %v2915 = vpack.c.bf16 %v2883, %v2883
        %v2916 = vpack.c.bf16 %v2884, %v2884
        %v2917 = vpack.c.bf16 %v2885, %v2885
        %v2918 = vpack.c.bf16 %v2886, %v2886
        %v2919 = vpack.c.bf16 %v2887, %v2887
        %v2920 = vpack.c.bf16 %v2888, %v2888
        %v2921 = vpack.c.bf16 %v2889, %v2889
        %v2922 = vpack.c.bf16 %v2890, %v2890
        %2923 = vst [vmem:[%s360] sm:$0xf] %v2891
        %2924 = vst [vmem:[%s360 + $0x4] sm:$0xf] %v2892
        %2925 = vst [vmem:[%s360 + $0x8] sm:$0xf] %v2893
        %2926 = vst [vmem:[%s360 + $0xc] sm:$0xf] %v2894
        %2927 = vst [vmem:[%s360 + $0x10] sm:$0xf] %v2895
        %2928 = vst [vmem:[%s360 + $0x14] sm:$0xf] %v2896
        %2929 = vst [vmem:[%s360 + $0x18] sm:$0xf] %v2897
        %2930 = vst [vmem:[%s360 + $0x1c] sm:$0xf] %v2898
        %2931 = vst [vmem:[%s360 + $0x20] sm:$0xf] %v2899
        %2932 = vst [vmem:[%s360 + $0x24] sm:$0xf] %v2900
        %2933 = vst [vmem:[%s360 + $0x28] sm:$0xf] %v2901
        %2934 = vst [vmem:[%s360 + $0x2c] sm:$0xf] %v2902
        %2935 = vst [vmem:[%s360 + $0x30] sm:$0xf] %v2903
        %2936 = vst [vmem:[%s360 + $0x34] sm:$0xf] %v2904
        %2937 = vst [vmem:[%s360 + $0x38] sm:$0xf] %v2905
        %2938 = vst [vmem:[%s360 + $0x3c] sm:$0xf] %v2906
        %2939 = vst [vmem:[%s360 + $0x40] sm:$0xf] %v2907
        %2940 = vst [vmem:[%s360 + $0x44] sm:$0xf] %v2908
        %2941 = vst [vmem:[%s360 + $0x48] sm:$0xf] %v2909
        %2942 = vst [vmem:[%s360 + $0x4c] sm:$0xf] %v2910
        %2943 = vst [vmem:[%s360 + $0x50] sm:$0xf] %v2911
        %2944 = vst [vmem:[%s360 + $0x54] sm:$0xf] %v2912
        %2945 = vst [vmem:[%s360 + $0x58] sm:$0xf] %v2913
        %2946 = vst [vmem:[%s360 + $0x5c] sm:$0xf] %v2914
        %2947 = vst [vmem:[%s360 + $0x60] sm:$0xf] %v2915
        %2948 = vst [vmem:[%s360 + $0x64] sm:$0xf] %v2916
        %2949 = vst [vmem:[%s360 + $0x68] sm:$0xf] %v2917
        %2950 = vst [vmem:[%s360 + $0x6c] sm:$0xf] %v2918
        %2951 = vst [vmem:[%s360 + $0x70] sm:$0xf] %v2919
        %2952 = vst [vmem:[%s360 + $0x74] sm:$0xf] %v2920
        %2953 = vst [vmem:[%s360 + $0x78] sm:$0xf] %v2921
        %2954 = vst [vmem:[%s360 + $0x7c] sm:$0xf] %v2922
        %v2955 = vadd.f32 %v2859, %v2860
        %v2956 = vadd.f32 %v2955, %v2861
        %v2957 = vadd.f32 %v2956, %v2862
        %v2958 = vadd.f32 %v2957, %v2863
        %v2959 = vadd.f32 %v2958, %v2864
        %v2960 = vadd.f32 %v2959, %v2865
        %v2961 = vadd.f32 %v2960, %v2866
        %v2962 = vadd.f32 %v2961, %v2867
        %v2963 = vadd.f32 %v2962, %v2868
        %v2964 = vadd.f32 %v2963, %v2869
        %v2965 = vadd.f32 %v2964, %v2870
        %v2966 = vadd.f32 %v2965, %v2871
        %v2967 = vadd.f32 %v2966, %v2872
        %v2968 = vadd.f32 %v2967, %v2873
        %v2969 = vadd.f32 %v2968, %v2874
        %v2970 = vadd.f32 %v2969, %v2875
        %v2971 = vadd.f32 %v2970, %v2876
        %v2972 = vadd.f32 %v2971, %v2877
        %v2973 = vadd.f32 %v2972, %v2878
        %v2974 = vadd.f32 %v2973, %v2879
        %v2975 = vadd.f32 %v2974, %v2880
        %v2976 = vadd.f32 %v2975, %v2881
        %v2977 = vadd.f32 %v2976, %v2882
        %v2978 = vadd.f32 %v2977, %v2883
        %v2979 = vadd.f32 %v2978, %v2884
        %v2980 = vadd.f32 %v2979, %v2885
        %v2981 = vadd.f32 %v2980, %v2886
        %v2982 = vadd.f32 %v2981, %v2887
        %v2983 = vadd.f32 %v2982, %v2888
        %v2984 = vadd.f32 %v2983, %v2889
        %v2985 = vadd.f32 %v2984, %v2890
        %v2986 = vrot.slane %v2985, 4
        %v2987 = vadd.f32 %v2985, %v2986
        %v2988 = vrot.slane %v2987, 2
        %v2989 = vadd.f32 %v2987, %v2988
        %v2990 = vrot.slane %v2989, 1
        %v2991 = vadd.f32 %v2989, %v2990
        %2992 = vst [vmem:[%s366] sm:$0x1] %v2991
        %s2993 = sand.u32 %s180, 1
        %s2994 = scalar_lea.sflag [#allocation5], %s2993
        %s2995 = sand.u32 %s180, 1
        %s2996 = smul.addr %s2995, 128
        %s2997 = scalar_lea.vmem [#allocation9], %s2996
        %s2998 = sand.u32 %s208, 1
        %s2999 = scalar_lea.sflag [#allocation11], %s2998
        %s3000 = sand.u32 %s208, 1
        %s3001 = scalar_lea.vmem [#allocation10], %s3000
        // Predicated region
        $region53: #{tpu_custom_call.1} parent=39 // pred_check
          %p3002 = pneg %p190
        $region54: #{tpu_custom_call.1} parent=39 // pred_check_branch
          %3004 = sbr.rel (%p3002) target = $region56
        $region55: #{tpu_custom_call.1} parent=39 // pred_region
          %3006 = vsyncadd %s2994, 0
          %s3007 = smul.addr %s32, 32
          %s3008 = sadd.s32 %s33, %s3007
          %s3009 = smul.addr %s3008, 4
          %s3010 = scalar_lea.hbm %s5, %s3009
          %s3011 = sshll.u32 %s2997, 4
          %s3012 = int_to_ptr.vmem [resolvable:$true] %s3011
          %s3013 = sshll.u32 %s3010, 4
          %s3014 = int_to_ptr.hbm [resolvable:$true] %s3013
          %3019 = dma.vmem_to_hbm [thread:$0]  %s3012, 2048, %s3014, %s2994, 64, 64, 4
        $region56: #{tpu_custom_call.1} parent=39 // pred_fallthru
          _
        // Predicated region
        $region57: #{tpu_custom_call.1} parent=39 // pred_check
          %p3020 = pneg %p218
        $region58: #{tpu_custom_call.1} parent=39 // pred_check_branch
          %3022 = sbr.rel (%p3020) target = $region60
        $region59: #{tpu_custom_call.1} parent=39 // pred_region
          %3024 = vsyncadd %s2999, 0
          %s3025 = sadd.s32 %s33, %s32
          %s3026 = scalar_lea.hbm %s6, %s3025
          %s3028 = sshll.u32 %s3001, 4
          %s3029 = int_to_ptr.vmem [resolvable:$true] %s3028
          %s3030 = sshll.u32 %s3026, 4
          %s3031 = int_to_ptr.hbm [resolvable:$true] %s3030
          %3033 = dma.vmem_to_hbm [thread:$0]  %s3029, 16, %s3031, %s2999
        $region60: #{tpu_custom_call.1} parent=39 // pred_fallthru
          _
      $region40: #{tpu_custom_call.1} parent=5 // pred_fallthru
        _
      %p3034 = scmp.le.s32.totalorder 2, %s23
      // Predicated region
      $region61: #{tpu_custom_call.1} parent=5 // pred_check
        %p3035 = pneg %p3034
      $region62: #{tpu_custom_call.1} parent=5 // pred_check_branch
        %3037 = sbr.rel (%p3035) target = $region64
      $region63: #{tpu_custom_call.1} parent=5 // pred_region
        %s3038 = ssub.s32 %s23, 2
        // Predicated region
        $region65: #{tpu_custom_call.1} parent=63 // pred_check
          %p3039 = pneg %p196
        $region66: #{tpu_custom_call.1} parent=63 // pred_check_branch
          %3041 = sbr.rel (%p3039) target = $region68
        $region67: #{tpu_custom_call.1} parent=63 // pred_region
          %s3042 = sand.u32 %s181, 1
          %s3043 = scalar_lea.sflag [#allocation5], %s3042
          %s3044 = sand.u32 %s181, 1
          %s3045 = smul.addr %s3044, 128
          %s3046 = scalar_lea.vmem [#allocation9], %s3045
          %3048 = dma.done %s3043, 2048
        $region68: #{tpu_custom_call.1} parent=63 // pred_fallthru
          _
        // Predicated region
        $region69: #{tpu_custom_call.1} parent=63 // pred_check
          %p3049 = pneg %p224
        $region70: #{tpu_custom_call.1} parent=63 // pred_check_branch
          %3051 = sbr.rel (%p3049) target = $region72
        $region71: #{tpu_custom_call.1} parent=63 // pred_region
          %s3052 = sand.u32 %s209, 1
          %s3053 = scalar_lea.sflag [#allocation11], %s3052
          %s3054 = sand.u32 %s209, 1
          %s3055 = scalar_lea.vmem [#allocation10], %s3054
          %3057 = dma.done %s3053, 16
        $region72: #{tpu_custom_call.1} parent=63 // pred_fallthru
          _
      $region64: #{tpu_custom_call.1} parent=5 // pred_fallthru
        _
    $region6: #{tpu_custom_call.1} parent=1 // loop_footer
      %s27 = sadd.s32 1, %s23
    $region7: #{tpu_custom_call.1} parent=1 // loop_footer_branch
      %22 = sbr.rel target = $region3
    $region8: #{tpu_custom_call.1} parent=1 // loop_exit
      _
    %3058 = vsyncpa [#allocation4], 1
    %s3059 = scalar_lea.sflag [#allocation4], 1
    %3060 = vsyncpa %s3059, 1
    %3061 = vsyncpa [#allocation7], 1
    %3062 = vsyncpa [#allocation5], 1
    %s3063 = scalar_lea.sflag [#allocation5], 1
    %3064 = vsyncpa %s3063, 1
    %3065 = vsyncpa [#allocation11], 1
    %s3066 = scalar_lea.sflag [#allocation11], 1
    %3067 = vsyncpa %s3066, 1

</llo_original>
